<compile_context>
chip_gen: v6e
topology: v6e:2x2x1
jax: 0.10.0
libtpu: 0.0.40
codegen_flags: <defaults>
</compile_context>

<pallas_src>
import functools

import jax
import jax.numpy as jnp
from jax.experimental import pallas as pl
from jax.experimental.pallas import tpu as pltpu


# ----------------------------------------------------------------------------
# "cfg.coarse_loss" hyper-parameters (GeoTransformer defaults, set in-script)
# ----------------------------------------------------------------------------
POSITIVE_MARGIN = 0.1
NEGATIVE_MARGIN = 1.4
POSITIVE_OPTIMAL = 0.1
NEGATIVE_OPTIMAL = 1.4
LOG_SCALE = 24.0
POSITIVE_OVERLAP = 0.1

_NEG_INIT = -1.0e30      # init value for the running column maxima
_TINY = 1.1754944e-38    # smallest normal f32: floors LSE sums, never dominates


def _round_up(x, m):
    return (x + m - 1) // m * m


def _cdiv(a, b):
    return (a + b - 1) // b


def _softplus(x):
    return jnp.maximum(x, 0.0) + jnp.log1p(jnp.exp(-jnp.abs(x)))


def _vmem_capacity_bytes():
    try:
        return int(pltpu.get_tpu_info().vmem_capacity_bytes)
    except Exception:
        return 64 * 2 ** 20          # conservative (v7x per-TC) fallback


def _coarse_matching_loss_kernel(
        ref_ref, srct_ref, enc_ref, rowok_ref, out_ref,
        cpmax, cpsum, cnmax, cnsum, racc, *, m_valid):
    """One ref-row tile per inner grid step; column-LSE state kept in scratch."""
    i = pl.program_id(1)
    last = pl.num_programs(1) - 1
    tn, m_pad = enc_ref.shape
    pad_cols = m_pad - m_valid                     # static python int

    # ---- init per-split running state ---------------------------------------
    @pl.when(i == 0)
    def _init():
        cpmax[...] = jnp.full_like(cpmax, _NEG_INIT)
        cnmax[...] = jnp.full_like(cnmax, _NEG_INIT)
        cpsum[...] = jnp.zeros_like(cpsum)
        cnsum[...] = jnp.zeros_like(cnsum)
        racc[0] = jnp.float32(0.0)

    # ---- feature distances: bf16 x bf16 -> f32 on the MXU, no transpose ------
    xy = jnp.dot(ref_ref[...], srct_ref[...], preferred_element_type=jnp.float32)
    feat = jnp.sqrt(jnp.maximum(2.0 - 2.0 * xy, 0.0))             # (tn, m_pad)

    # enc: +LOG_SCALE*sqrt(ovl) (pos), -LOG_SCALE (neg), 0 (neither / padding)
    enc = enc_ref[...].astype(jnp.float32)
    pos_w = jnp.maximum(feat - POSITIVE_OPTIMAL, 0.0) * jnp.maximum(enc, 0.0)
    neg_w = jnp.maximum(NEGATIVE_OPTIMAL - feat, 0.0) * jnp.maximum(-enc, 0.0)
    pos_logits = (feat - POSITIVE_MARGIN) * pos_w
    neg_logits = (NEGATIVE_MARGIN - feat) * neg_w

    ones_col = jnp.ones((m_pad, 1), jnp.float32)
    ones_row = jnp.ones((1, tn), jnp.float32)

    def row_col_stats(logits):
        # one exp pass serves BOTH the row LSE and the online column LSE;
        # the sum-reductions run on the idle MXU (perf-review item).
        row_max = jnp.max(logits, axis=1, keepdims=True)          # (tn, 1)
        e = jnp.exp(logits - row_max)                              # (tn, m_pad)
        row_sum = jnp.dot(e, ones_col, preferred_element_type=jnp.float32)
        if pad_cols:
            # padded columns have logit exactly 0 -> remove their exp(0) terms
            row_sum = row_sum - pad_cols * jnp.exp(-row_max)
        row_lse = jnp.log(jnp.maximum(row_sum, _TINY)) + row_max
        tile_max = jnp.max(row_max)                                # scalar
        e2 = e * jnp.exp(row_max - tile_max)                       # shift to tile_max
        col_part = jnp.dot(ones_row, e2, preferred_element_type=jnp.float32)
        return row_lse, tile_max, col_part

    pos_row_lse, pos_tmax, pos_col = row_col_stats(pos_logits)
    neg_row_lse, neg_tmax, neg_col = row_col_stats(neg_logits)

    # ---- per-row loss (rows are complete inside a tile: M is not tiled) ------
    loss_row = _softplus(pos_row_lse + neg_row_lse) * (1.0 / LOG_SCALE)
    racc[0] = racc[0] + jnp.sum(loss_row * rowok_ref[...])

    # ---- online column-LSE accumulation (shared tile-max shift) --------------
    def merge(cmax_ref, csum_ref, tile_max, col_part):
        old = cmax_ref[...]
        new = jnp.maximum(old, tile_max)
        csum_ref[...] = (csum_ref[...] * jnp.exp(old - new)
                         + col_part * jnp.exp(tile_max - new))
        cmax_ref[...] = new

    merge(cpmax, cpsum, pos_tmax, pos_col)
    merge(cnmax, cnsum, neg_tmax, neg_col)

    # ---- write this split's packed partial state on its last tile ------------
    @pl.when(i == last)
    def _finalize():
        lane = jax.lax.broadcasted_iota(jnp.int32, (1, m_pad), 1)
        out_ref[0:1, :] = cpmax[...]
        out_ref[1:2, :] = cpsum[...]
        out_ref[2:3, :] = cnmax[...]
        out_ref[3:4, :] = cnsum[...]
        out_ref[4:5, :] = jnp.where(lane == 0, racc[0], 0.0)
        out_ref[5:8, :] = jnp.zeros((3, m_pad), jnp.float32)


@jax.jit
def coarse_matching_loss(ref_feats, src_feats, gt_node_corr_indices,
                         gt_node_corr_overlaps):
    """JAX wrapper reproducing CoarseMatchingLoss.forward."""
    n, c = ref_feats.shape
    m = src_feats.shape[0]

    # --- glue: sparse K-scatter -> single encoded dense stream + row/col masks --
    gt_ref_idx = gt_node_corr_indices[:, 0]
    gt_src_idx = gt_node_corr_indices[:, 1]
    ovl = gt_node_corr_overlaps.astype(jnp.float32)
    scat_val = jnp.where(ovl > POSITIVE_OVERLAP, LOG_SCALE * jnp.sqrt(ovl),
                         jnp.where(ovl == 0.0, -LOG_SCALE, 0.0))
    enc = jnp.full((n, m), -LOG_SCALE, jnp.bfloat16)
    enc = enc.at[gt_ref_idx, gt_src_idx].set(scat_val.astype(jnp.bfloat16))

    row_ok = jnp.logical_and(jnp.any(enc > 0, axis=1),
                             jnp.any(enc < 0, axis=1)).astype(jnp.float32)  # (n,)
    col_ok = jnp.logical_and(jnp.any(enc > 0, axis=0),
                             jnp.any(enc < 0, axis=0)).astype(jnp.float32)  # (m,)

    # --- padding / tiling (generation-aware VMEM budget) ------------------------
    vmem_cap = _vmem_capacity_bytes()
    m_pad = _round_up(m, 128)                       # lane-dense columns
    tn = 256                                        # 256-row LHS matches v6e/v7x MXU
    # ~10 live f32 (tn, m_pad) temporaries; keep them under ~35% of physical VMEM
    while tn > 32 and 10 * tn * m_pad * 4 > int(0.35 * vmem_cap):
        tn //= 2
    tn = min(tn, _round_up(n, 16))                  # bf16 sublane packing: mult of 16

    tiles_total = _cdiv(n, tn)
    num_splits = 2 if tiles_total >= 2 else 1       # v7x: one split per TensorCore
    tps = _cdiv(tiles_total, num_splits)
    tiles_total = num_splits * tps
    n_pad = tiles_total * tn

    ref_p = jnp.pad(ref_feats.astype(jnp.bfloat16), ((0, n_pad - n), (0, 0)))
    srct = jnp.pad(src_feats.astype(jnp.bfloat16), ((0, m_pad - m), (0, 0))).T
    enc_p = jnp.pad(enc, ((0, n_pad - n), (0, m_pad - m)))
    rowok_p = jnp.pad(row_ok, (0, n_pad - n)).reshape(n_pad, 1)

    # VMEM accounting: double-buffered blocks + live f32 temporaries + col state
    est = (2 * (tn * c * 2 + c * m_pad * 2 + tn * m_pad * 2 + tn * 4 + 8 * m_pad * 4)
           + 10 * tn * m_pad * 4 + 4 * m_pad * 4)
    vmem_limit = int(min(max(int(1.5 * est), 32 * 2 ** 20), int(0.75 * vmem_cap)))

    kernel = functools.partial(_coarse_matching_loss_kernel, m_valid=m)
    cost = pl.CostEstimate(
        flops=int(2 * n_pad * m_pad * (c + 4)),
        transcendentals=int(3 * n_pad * m_pad),
        bytes_accessed=int(ref_p.size * 2 + srct.size * 2 + enc_p.size * 2
                           + rowok_p.size * 4 + num_splits * 8 * m_pad * 4))

    out = pl.pallas_call(
        kernel,
        out_shape=jax.ShapeDtypeStruct((num_splits, 8, m_pad), jnp.float32),
        grid=(num_splits, tps),
        in_specs=[
            pl.BlockSpec((tn, c), lambda s, i: (s * tps + i, 0)),      # ref rows
            pl.BlockSpec((c, m_pad), lambda s, i: (0, 0)),             # src^T resident
            pl.BlockSpec((tn, m_pad), lambda s, i: (s * tps + i, 0)),  # encoded overlaps
            pl.BlockSpec((tn, 1), lambda s, i: (s * tps + i, 0)),      # row validity
        ],
        out_specs=pl.BlockSpec((None, 8, m_pad), lambda s, i: (s, 0, 0)),
        scratch_shapes=[
            pltpu.VMEM((1, m_pad), jnp.float32),   # col pos running max
            pltpu.VMEM((1, m_pad), jnp.float32),   # col pos running sum
            pltpu.VMEM((1, m_pad), jnp.float32),   # col neg running max
            pltpu.VMEM((1, m_pad), jnp.float32),   # col neg running sum
            pltpu.SMEM((1,), jnp.float32),         # row-loss partial sum
        ],
        compiler_params=pltpu.CompilerParams(
            dimension_semantics=("parallel", "arbitrary"),
            vmem_limit_bytes=vmem_limit),
        cost_estimate=cost,
    )(ref_p, srct, enc_p, rowok_p)

    # --- tiny epilogue: merge per-split partial states (plain jnp) --------------
    def merge_splits(max_s, sum_s):
        gmax = jnp.max(max_s, axis=0)
        gsum = jnp.sum(sum_s * jnp.exp(max_s - gmax), axis=0)
        return gmax, gsum

    pmax, psum = merge_splits(out[:, 0, :], out[:, 1, :])
    nmax, nsum = merge_splits(out[:, 2, :], out[:, 3, :])
    pad_rows = float(n_pad - n)
    if pad_rows:
        # padded rows contributed exactly exp(0) to every column LSE: remove it
        psum = psum - pad_rows * jnp.exp(-pmax)
        nsum = nsum - pad_rows * jnp.exp(-nmax)
    col_pos_lse = jnp.log(jnp.maximum(psum, _TINY)) + pmax
    col_neg_lse = jnp.log(jnp.maximum(nsum, _TINY)) + nmax
    loss_col = _softplus(col_pos_lse[:m] + col_neg_lse[:m]) * (1.0 / LOG_SCALE)
    # NOTE: like the PyTorch module, NaN if no row / no column has both a
    # positive and a negative pair — callers must guard.
    col_mean = jnp.sum(loss_col * col_ok) / jnp.sum(col_ok)
    row_mean = jnp.sum(out[:, 4, 0]) / jnp.sum(row_ok)
    return 0.5 * (row_mean + col_mean)


def _reference_loss(ref_feats, src_feats, gt_idx, gt_ovl):
    """Pure-JAX f32 reference mirroring the PyTorch module (sanity check)."""
    ref = ref_feats.astype(jnp.float32)
    src = src_feats.astype(jnp.float32)
    n, m = ref.shape[0], src.shape[0]
    overlaps = jnp.zeros((n, m), jnp.float32).at[gt_idx[:, 0], gt_idx[:, 1]].set(
        gt_ovl.astype(jnp.float32))
    feat_dists = jnp.sqrt(jnp.maximum(2.0 - 2.0 * ref @ src.T, 0.0))
    pos_masks = overlaps > POSITIVE_OVERLAP
    neg_masks = overlaps == 0.0
    pos_scales = jnp.sqrt(overlaps * pos_masks)
    pos_w = jnp.maximum(feat_dists - 1e5 * (~pos_masks) - POSITIVE_OPTIMAL, 0.0) * pos_scales
    neg_w = jnp.maximum(NEGATIVE_OPTIMAL - (feat_dists + 1e5 * (~neg_masks)), 0.0)
    pos_log = LOG_SCALE * (feat_dists - POSITIVE_MARGIN) * pos_w
    neg_log = LOG_SCALE * (NEGATIVE_MARGIN - feat_dists) * neg_w
    lpr = jax.scipy.special.logsumexp(pos_log, axis=1)
    lpc = jax.scipy.special.logsumexp(pos_log, axis=0)
    lnr = jax.scipy.special.logsumexp(neg_log, axis=1)
    lnc = jax.scipy.special.logsumexp(neg_log, axis=0)
    loss_row = jax.nn.softplus(lpr + lnr) / LOG_SCALE
    loss_col = jax.nn.softplus(lpc + lnc) / LOG_SCALE
    rmask = (pos_masks.sum(1) > 0) & (neg_masks.sum(1) > 0)
    cmask = (pos_masks.sum(0) > 0) & (neg_masks.sum(0) > 0)
    rmean = jnp.sum(loss_row * rmask) / jnp.sum(rmask)
    cmean = jnp.sum(loss_col * cmask) / jnp.sum(cmask)
    return 0.5 * (rmean + cmean)


if __name__ == "__main__":
    key = jax.random.PRNGKey(0)
    # small coarse-level problem: ref/src node counts, feature dim, #correspondences
    # (N chosen so the 2-split / padded-row / padded-column paths are exercised)
    N, M, C, K = 384, 200, 64, 192

    k1, k2, k3 = jax.random.split(key, 3)
    ref_feats = jax.random.normal(k1, (N, C), jnp.float32)
    src_feats = jax.random.normal(k2, (M, C), jnp.float32)
    # module assumes normalized features (pairwise_distance(normalized=True))
    ref_feats = ref_feats / jnp.linalg.norm(ref_feats, axis=-1, keepdims=True)
    src_feats = src_feats / jnp.linalg.norm(src_feats, axis=-1, keepdims=True)
    # backbone features arrive in bf16; kernel and reference see the same bf16
    ref_feats = ref_feats.astype(jnp.bfloat16)
    src_feats = src_feats.astype(jnp.bfloat16)

    # deterministic, duplicate-free ground-truth correspondences
    kk = jnp.arange(K, dtype=jnp.int32)
    gt_node_corr_indices = jnp.stack([(kk * 7) % N, (kk * 11) % M], axis=1)
    gt_node_corr_overlaps = jax.random.uniform(k3, (K,), jnp.float32, 0.2, 1.0)

    loss = coarse_matching_loss(ref_feats, src_feats,
                                gt_node_corr_indices, gt_node_corr_overlaps)
    loss = jax.block_until_ready(loss)

    ref_loss = _reference_loss(ref_feats, src_feats,
                               gt_node_corr_indices, gt_node_corr_overlaps)
    assert jnp.isfinite(loss), "loss is not finite"
    # bf16 encoding of LOG_SCALE*sqrt(overlap) bounds the relative error of the
    # positive logits by ~2^-9; everything else matches the f32 reference tightly.
    assert jnp.allclose(loss, ref_loss, rtol=3e-3, atol=3e-3), (loss, ref_loss)

    print("KERNEL_OK")
</pallas_src>

<mosaic_0001>
module attributes {stable_mosaic.version = 11 : i64} {
  func.func @_coarse_matching_loss_kernel(%arg0: i32, %arg1: i32, %arg2: memref<256x64xbf16, #tpu.memory_space<vmem>>, %arg3: memref<64x256xbf16, #tpu.memory_space<vmem>>, %arg4: memref<256x256xbf16, #tpu.memory_space<vmem>>, %arg5: memref<256x1xf32, #tpu.memory_space<vmem>>, %arg6: memref<1x8x256xf32, #tpu.memory_space<vmem>>, %arg7: memref<1x256xf32, #tpu.memory_space<vmem>>, %arg8: memref<1x256xf32, #tpu.memory_space<vmem>>, %arg9: memref<1x256xf32, #tpu.memory_space<vmem>>, %arg10: memref<1x256xf32, #tpu.memory_space<vmem>>, %arg11: memref<1xf32, #tpu.memory_space<smem>>) attributes {dimension_semantics = [#tpu.dimension_semantics<parallel>, #tpu.dimension_semantics<arbitrary>], iteration_bounds = array<i64: 2, 1>, scalar_prefetch = 0 : i64, scratch_operands = 5 : i64, tpu.core_type = #tpu.core_type<tc>, window_params = [{transform_indices = @transform_0, window_bounds = array<i64: 256, 64>}, {pipeline_mode = #tpu.pipeline_mode<synchronous>, transform_indices = @transform_1, window_bounds = array<i64: 64, 256>}, {transform_indices = @transform_2, window_bounds = array<i64: 256, 256>}, {transform_indices = @transform_3, window_bounds = array<i64: 256, 1>}, {transform_indices = @transform_4, window_bounds = array<i64: 1, 8, 256>}]} {
    %c0_i32 = arith.constant 0 : i32
    %0 = arith.cmpi eq, %arg1, %c0_i32 : i32
    %1 = arith.extui %0 : i1 to i32
    %c0_i32_0 = arith.constant 0 : i32
    %2 = arith.cmpi ne, %1, %c0_i32_0 : i32
    scf.if %2 {
      %cst_60 = arith.constant -1.000000e+30 : f32
      %142 = vector.broadcast %cst_60 : f32 to vector<1x256xf32>
      %c0_61 = arith.constant 0 : index
      %c0_62 = arith.constant 0 : index
      %143 = vector.load %arg7[%c0_61, %c0_62] : memref<1x256xf32, #tpu.memory_space<vmem>>, vector<1x256xf32>
      tpu.vector_store %arg7[%c0_61, %c0_62], %142 {strides = array<i32>} : memref<1x256xf32, #tpu.memory_space<vmem>>, vector<1x256xf32>,
      %cst_63 = arith.constant -1.000000e+30 : f32
      %144 = vector.broadcast %cst_63 : f32 to vector<1x256xf32>
      %c0_64 = arith.constant 0 : index
      %c0_65 = arith.constant 0 : index
      %145 = vector.load %arg9[%c0_64, %c0_65] : memref<1x256xf32, #tpu.memory_space<vmem>>, vector<1x256xf32>
      tpu.vector_store %arg9[%c0_64, %c0_65], %144 {strides = array<i32>} : memref<1x256xf32, #tpu.memory_space<vmem>>, vector<1x256xf32>,
      %cst_66 = arith.constant 0.000000e+00 : f32
      %146 = vector.broadcast %cst_66 : f32 to vector<1x256xf32>
      %c0_67 = arith.constant 0 : index
      %c0_68 = arith.constant 0 : index
      %147 = vector.load %arg8[%c0_67, %c0_68] : memref<1x256xf32, #tpu.memory_space<vmem>>, vector<1x256xf32>
      tpu.vector_store %arg8[%c0_67, %c0_68], %146 {strides = array<i32>} : memref<1x256xf32, #tpu.memory_space<vmem>>, vector<1x256xf32>,
      %cst_69 = arith.constant 0.000000e+00 : f32
      %148 = vector.broadcast %cst_69 : f32 to vector<1x256xf32>
      %c0_70 = arith.constant 0 : index
      %c0_71 = arith.constant 0 : index
      %149 = vector.load %arg10[%c0_70, %c0_71] : memref<1x256xf32, #tpu.memory_space<vmem>>, vector<1x256xf32>
      tpu.vector_store %arg10[%c0_70, %c0_71], %148 {strides = array<i32>} : memref<1x256xf32, #tpu.memory_space<vmem>>, vector<1x256xf32>,
      %cst_72 = arith.constant 0.000000e+00 : f32
      %c0_73 = arith.constant 0 : index
      %150 = memref.load %arg11[%c0_73] : memref<1xf32, #tpu.memory_space<smem>>
      memref.store %cst_72, %arg11[%c0_73] : memref<1xf32, #tpu.memory_space<smem>>
    } else {
    }
    %c0 = arith.constant 0 : index
    %c0_1 = arith.constant 0 : index
    %3 = vector.load %arg2[%c0, %c0_1] : memref<256x64xbf16, #tpu.memory_space<vmem>>, vector<256x64xbf16>
    %c0_2 = arith.constant 0 : index
    %c0_3 = arith.constant 0 : index
    %4 = vector.load %arg3[%c0_2, %c0_3] : memref<64x256xbf16, #tpu.memory_space<vmem>>, vector<64x256xbf16>
    %cst = arith.constant dense<0.000000e+00> : vector<256x256xf32>
    %5 = tpu.matmul %3, %4, %cst {dimension_numbers = #tpu.dot_dimension_numbers<[1], [0], [0], [1], [0, 0, 1, 1], [], []>} : vector<256x64xbf16>, vector<64x256xbf16>, vector<256x256xf32> -> vector<256x256xf32>
    %cst_4 = arith.constant 2.000000e+00 : f32
    %6 = vector.broadcast %cst_4 : f32 to vector<256x256xf32>
    %7 = arith.mulf %6, %5 : vector<256x256xf32>
    %cst_5 = arith.constant 2.000000e+00 : f32
    %8 = vector.broadcast %cst_5 : f32 to vector<256x256xf32>
    %9 = arith.subf %8, %7 : vector<256x256xf32>
    %cst_6 = arith.constant 0.000000e+00 : f32
    %10 = vector.broadcast %cst_6 : f32 to vector<256x256xf32>
    %11 = arith.maximumf %9, %10 : vector<256x256xf32>
    %12 = math.sqrt %11 : vector<256x256xf32>
    %c0_7 = arith.constant 0 : index
    %c0_8 = arith.constant 0 : index
    %13 = vector.load %arg4[%c0_7, %c0_8] : memref<256x256xbf16, #tpu.memory_space<vmem>>, vector<256x256xbf16>
    %14 = arith.extf %13 : vector<256x256xbf16> to vector<256x256xf32>
    %cst_9 = arith.constant 1.000000e-01 : f32
    %15 = vector.broadcast %cst_9 : f32 to vector<256x256xf32>
    %16 = arith.subf %12, %15 : vector<256x256xf32>
    %cst_10 = arith.constant 0.000000e+00 : f32
    %17 = vector.broadcast %cst_10 : f32 to vector<256x256xf32>
    %18 = arith.maximumf %16, %17 : vector<256x256xf32>
    %cst_11 = arith.constant 0.000000e+00 : f32
    %19 = vector.broadcast %cst_11 : f32 to vector<256x256xf32>
    %20 = arith.maximumf %14, %19 : vector<256x256xf32>
    %21 = arith.mulf %18, %20 : vector<256x256xf32>
    %cst_12 = arith.constant 1.400000e+00 : f32
    %22 = vector.broadcast %cst_12 : f32 to vector<256x256xf32>
    %23 = arith.subf %22, %12 : vector<256x256xf32>
    %cst_13 = arith.constant 0.000000e+00 : f32
    %24 = vector.broadcast %cst_13 : f32 to vector<256x256xf32>
    %25 = arith.maximumf %23, %24 : vector<256x256xf32>
    %cst_14 = arith.constant 0.000000e+00 : f32
    %26 = vector.broadcast %cst_14 : f32 to vector<256x256xf32>
    %27 = arith.subf %26, %14 : vector<256x256xf32>
    %cst_15 = arith.constant 0.000000e+00 : f32
    %28 = vector.broadcast %cst_15 : f32 to vector<256x256xf32>
    %29 = arith.maximumf %27, %28 : vector<256x256xf32>
    %30 = arith.mulf %25, %29 : vector<256x256xf32>
    %cst_16 = arith.constant 1.000000e-01 : f32
    %31 = vector.broadcast %cst_16 : f32 to vector<256x256xf32>
    %32 = arith.subf %12, %31 : vector<256x256xf32>
    %33 = arith.mulf %32, %21 : vector<256x256xf32>
    %cst_17 = arith.constant 1.400000e+00 : f32
    %34 = vector.broadcast %cst_17 : f32 to vector<256x256xf32>
    %35 = arith.subf %34, %12 : vector<256x256xf32>
    %36 = arith.mulf %35, %30 : vector<256x256xf32>
    %cst_18 = arith.constant 1.000000e+00 : f32
    %37 = vector.broadcast %cst_18 : f32 to vector<256x1xf32>
    %cst_19 = arith.constant 1.000000e+00 : f32
    %38 = vector.broadcast %cst_19 : f32 to vector<1x256xf32>
    %cst_20 = arith.constant dense<0xFF800000> : vector<256xf32>
    %39 = vector.multi_reduction <maximumf>, %33, %cst_20 [1] : vector<256x256xf32> to vector<256xf32>
    %40 = vector.shape_cast %39 : vector<256xf32> to vector<256x1xf32>
    %41 = vector.broadcast %40 : vector<256x1xf32> to vector<256x256xf32>
    %42 = arith.subf %33, %41 : vector<256x256xf32>
    %43 = math.exp %42 : vector<256x256xf32>
    %cst_21 = arith.constant dense<0.000000e+00> : vector<256x1xf32>
    %44 = tpu.matmul %43, %37, %cst_21 {dimension_numbers = #tpu.dot_dimension_numbers<[1], [0], [0], [1], [0, 0, 1, 1], [], []>} : vector<256x256xf32>, vector<256x1xf32>, vector<256x1xf32> -> vector<256x1xf32>
    %cst_22 = arith.constant 0.000000e+00 : f32
    %45 = vector.broadcast %cst_22 : f32 to vector<256x1xf32>
    %46 = arith.subf %45, %40 : vector<256x1xf32>
    %47 = math.exp %46 : vector<256x1xf32>
    %cst_23 = arith.constant 5.600000e+01 : f32
    %48 = vector.broadcast %cst_23 : f32 to vector<256x1xf32>
    %49 = arith.mulf %48, %47 : vector<256x1xf32>
    %50 = arith.subf %44, %49 : vector<256x1xf32>
    %cst_24 = arith.constant 1.17549435E-38 : f32
    %51 = vector.broadcast %cst_24 : f32 to vector<256x1xf32>
    %52 = arith.maximumf %50, %51 : vector<256x1xf32>
    %53 = math.log %52 : vector<256x1xf32>
    %54 = arith.addf %53, %40 : vector<256x1xf32>
    %55 = vector.shape_cast %40 : vector<256x1xf32> to vector<1x256x1xf32>
    %cst_25 = arith.constant dense<0xFF800000> : vector<1xf32>
    %56 = vector.multi_reduction <maximumf>, %55, %cst_25 [1, 2] : vector<1x256x1xf32> to vector<1xf32>
    %57 = vector.shape_cast %56 : vector<1xf32> to vector<1x1x1xf32>
    %58 = vector.extract %57[0, 0, 0] : f32 from vector<1x1x1xf32>
    %59 = vector.broadcast %58 : f32 to vector<256x1xf32>
    %60 = arith.subf %40, %59 : vector<256x1xf32>
    %61 = math.exp %60 : vector<256x1xf32>
    %62 = vector.broadcast %61 : vector<256x1xf32> to vector<256x256xf32>
    %63 = arith.mulf %43, %62 : vector<256x256xf32>
    %cst_26 = arith.constant dense<0.000000e+00> : vector<1x256xf32>
    %64 = tpu.matmul %38, %63, %cst_26 {dimension_numbers = #tpu.dot_dimension_numbers<[1], [0], [0], [1], [0, 0, 1, 1], [], []>} : vector<1x256xf32>, vector<256x256xf32>, vector<1x256xf32> -> vector<1x256xf32>
    %cst_27 = arith.constant dense<0xFF800000> : vector<256xf32>
    %65 = vector.multi_reduction <maximumf>, %36, %cst_27 [1] : vector<256x256xf32> to vector<256xf32>
    %66 = vector.shape_cast %65 : vector<256xf32> to vector<256x1xf32>
    %67 = vector.broadcast %66 : vector<256x1xf32> to vector<256x256xf32>
    %68 = arith.subf %36, %67 : vector<256x256xf32>
    %69 = math.exp %68 : vector<256x256xf32>
    %cst_28 = arith.constant dense<0.000000e+00> : vector<256x1xf32>
    %70 = tpu.matmul %69, %37, %cst_28 {dimension_numbers = #tpu.dot_dimension_numbers<[1], [0], [0], [1], [0, 0, 1, 1], [], []>} : vector<256x256xf32>, vector<256x1xf32>, vector<256x1xf32> -> vector<256x1xf32>
    %cst_29 = arith.constant 0.000000e+00 : f32
    %71 = vector.broadcast %cst_29 : f32 to vector<256x1xf32>
    %72 = arith.subf %71, %66 : vector<256x1xf32>
    %73 = math.exp %72 : vector<256x1xf32>
    %cst_30 = arith.constant 5.600000e+01 : f32
    %74 = vector.broadcast %cst_30 : f32 to vector<256x1xf32>
    %75 = arith.mulf %74, %73 : vector<256x1xf32>
    %76 = arith.subf %70, %75 : vector<256x1xf32>
    %cst_31 = arith.constant 1.17549435E-38 : f32
    %77 = vector.broadcast %cst_31 : f32 to vector<256x1xf32>
    %78 = arith.maximumf %76, %77 : vector<256x1xf32>
    %79 = math.log %78 : vector<256x1xf32>
    %80 = arith.addf %79, %66 : vector<256x1xf32>
    %81 = vector.shape_cast %66 : vector<256x1xf32> to vector<1x256x1xf32>
    %cst_32 = arith.constant dense<0xFF800000> : vector<1xf32>
    %82 = vector.multi_reduction <maximumf>, %81, %cst_32 [1, 2] : vector<1x256x1xf32> to vector<1xf32>
    %83 = vector.shape_cast %82 : vector<1xf32> to vector<1x1x1xf32>
    %84 = vector.extract %83[0, 0, 0] : f32 from vector<1x1x1xf32>
    %85 = vector.broadcast %84 : f32 to vector<256x1xf32>
    %86 = arith.subf %66, %85 : vector<256x1xf32>
    %87 = math.exp %86 : vector<256x1xf32>
    %88 = vector.broadcast %87 : vector<256x1xf32> to vector<256x256xf32>
    %89 = arith.mulf %69, %88 : vector<256x256xf32>
    %cst_33 = arith.constant dense<0.000000e+00> : vector<1x256xf32>
    %90 = tpu.matmul %38, %89, %cst_33 {dimension_numbers = #tpu.dot_dimension_numbers<[1], [0], [0], [1], [0, 0, 1, 1], [], []>} : vector<1x256xf32>, vector<256x256xf32>, vector<1x256xf32> -> vector<1x256xf32>
    %91 = arith.addf %54, %80 : vector<256x1xf32>
    %cst_34 = arith.constant 0.000000e+00 : f32
    %92 = vector.broadcast %cst_34 : f32 to vector<256x1xf32>
    %93 = arith.maximumf %91, %92 : vector<256x1xf32>
    %94 = math.absf %91 : vector<256x1xf32>
    %cst_35 = arith.constant 0.000000e+00 : f32
    %95 = vector.broadcast %cst_35 : f32 to vector<256x1xf32>
    %96 = arith.subf %95, %94 : vector<256x1xf32>
    %97 = math.exp %96 : vector<256x1xf32>
    %98 = math.log1p %97 : vector<256x1xf32>
    %99 = arith.addf %93, %98 : vector<256x1xf32>
    %cst_36 = arith.constant 0.0416666679 : f32
    %100 = vector.broadcast %cst_36 : f32 to vector<256x1xf32>
    %101 = arith.mulf %99, %100 : vector<256x1xf32>
    %c0_37 = arith.constant 0 : index
    %102 = memref.load %arg11[%c0_37] : memref<1xf32, #tpu.memory_space<smem>>
    %c0_38 = arith.constant 0 : index
    %c0_39 = arith.constant 0 : index
    %103 = vector.load %arg5[%c0_38, %c0_39] : memref<256x1xf32, #tpu.memory_space<vmem>>, vector<256x1xf32>
    %104 = arith.mulf %101, %103 : vector<256x1xf32>
    %105 = vector.shape_cast %104 : vector<256x1xf32> to vector<1x256x1xf32>
    %cst_40 = arith.constant dense<0.000000e+00> : vector<1xf32>
    %106 = vector.multi_reduction <add>, %105, %cst_40 [1, 2] : vector<1x256x1xf32> to vector<1xf32>
    %107 = vector.shape_cast %106 : vector<1xf32> to vector<1x1x1xf32>
    %108 = vector.extract %107[0, 0, 0] : f32 from vector<1x1x1xf32>
    %109 = arith.addf %102, %108 : f32
    %c0_41 = arith.constant 0 : index
    %110 = memref.load %arg11[%c0_41] : memref<1xf32, #tpu.memory_space<smem>>
    memref.store %109, %arg11[%c0_41] : memref<1xf32, #tpu.memory_space<smem>>
    %c0_42 = arith.constant 0 : index
    %c0_43 = arith.constant 0 : index
    %111 = vector.load %arg7[%c0_42, %c0_43] : memref<1x256xf32, #tpu.memory_space<vmem>>, vector<1x256xf32>
    %112 = vector.broadcast %58 : f32 to vector<1x256xf32>
    %113 = arith.maximumf %111, %112 : vector<1x256xf32>
    %c0_44 = arith.constant 0 : index
    %c0_45 = arith.constant 0 : index
    %114 = vector.load %arg8[%c0_44, %c0_45] : memref<1x256xf32, #tpu.memory_space<vmem>>, vector<1x256xf32>
    %115 = arith.subf %111, %113 : vector<1x256xf32>
    %116 = math.exp %115 : vector<1x256xf32>
    %117 = arith.mulf %114, %116 : vector<1x256xf32>
    %118 = vector.broadcast %58 : f32 to vector<1x256xf32>
    %119 = arith.subf %118, %113 : vector<1x256xf32>
    %120 = math.exp %119 : vector<1x256xf32>
    %121 = arith.mulf %64, %120 : vector<1x256xf32>
    %122 = arith.addf %117, %121 : vector<1x256xf32>
    %c0_46 = arith.constant 0 : index
    %c0_47 = arith.constant 0 : index
    %123 = vector.load %arg8[%c0_46, %c0_47] : memref<1x256xf32, #tpu.memory_space<vmem>>, vector<1x256xf32>
    tpu.vector_store %arg8[%c0_46, %c0_47], %122 {strides = array<i32>} : memref<1x256xf32, #tpu.memory_space<vmem>>, vector<1x256xf32>,
    %c0_48 = arith.constant 0 : index
    %c0_49 = arith.constant 0 : index
    %124 = vector.load %arg7[%c0_48, %c0_49] : memref<1x256xf32, #tpu.memory_space<vmem>>, vector<1x256xf32>
    tpu.vector_store %arg7[%c0_48, %c0_49], %113 {strides = array<i32>} : memref<1x256xf32, #tpu.memory_space<vmem>>, vector<1x256xf32>,
    %c0_50 = arith.constant 0 : index
    %c0_51 = arith.constant 0 : index
    %125 = vector.load %arg9[%c0_50, %c0_51] : memref<1x256xf32, #tpu.memory_space<vmem>>, vector<1x256xf32>
    %126 = vector.broadcast %84 : f32 to vector<1x256xf32>
    %127 = arith.maximumf %125, %126 : vector<1x256xf32>
    %c0_52 = arith.constant 0 : index
    %c0_53 = arith.constant 0 : index
    %128 = vector.load %arg10[%c0_52, %c0_53] : memref<1x256xf32, #tpu.memory_space<vmem>>, vector<1x256xf32>
    %129 = arith.subf %125, %127 : vector<1x256xf32>
    %130 = math.exp %129 : vector<1x256xf32>
    %131 = arith.mulf %128, %130 : vector<1x256xf32>
    %132 = vector.broadcast %84 : f32 to vector<1x256xf32>
    %133 = arith.subf %132, %127 : vector<1x256xf32>
    %134 = math.exp %133 : vector<1x256xf32>
    %135 = arith.mulf %90, %134 : vector<1x256xf32>
    %136 = arith.addf %131, %135 : vector<1x256xf32>
    %c0_54 = arith.constant 0 : index
    %c0_55 = arith.constant 0 : index
    %137 = vector.load %arg10[%c0_54, %c0_55] : memref<1x256xf32, #tpu.memory_space<vmem>>, vector<1x256xf32>
    tpu.vector_store %arg10[%c0_54, %c0_55], %136 {strides = array<i32>} : memref<1x256xf32, #tpu.memory_space<vmem>>, vector<1x256xf32>,
    %c0_56 = arith.constant 0 : index
    %c0_57 = arith.constant 0 : index
    %138 = vector.load %arg9[%c0_56, %c0_57] : memref<1x256xf32, #tpu.memory_space<vmem>>, vector<1x256xf32>
    tpu.vector_store %arg9[%c0_56, %c0_57], %127 {strides = array<i32>} : memref<1x256xf32, #tpu.memory_space<vmem>>, vector<1x256xf32>,
    %c0_i32_58 = arith.constant 0 : i32
    %139 = arith.cmpi eq, %arg1, %c0_i32_58 : i32
    %140 = arith.extui %139 : i1 to i32
    %c0_i32_59 = arith.constant 0 : i32
    %141 = arith.cmpi ne, %140, %c0_i32_59 : i32
    scf.if %141 {
      %142 = tpu.iota {dimensions = array<i32: 1>} : vector<1x256xi32>
      %c0_60 = arith.constant 0 : index
      %c0_61 = arith.constant 0 : index
      %143 = vector.load %arg7[%c0_60, %c0_61] : memref<1x256xf32, #tpu.memory_space<vmem>>, vector<1x256xf32>
      %c0_62 = arith.constant 0 : index
      %c0_63 = arith.constant 0 : index
      %c0_64 = arith.constant 0 : index
      %144 = vector.load %arg6[%c0_62, %c0_63, %c0_64] : memref<1x8x256xf32, #tpu.memory_space<vmem>>, vector<1x1x256xf32>
      %145 = vector.shape_cast %144 : vector<1x1x256xf32> to vector<1x256xf32>
      %146 = vector.shape_cast %143 : vector<1x256xf32> to vector<1x1x256xf32>
      tpu.vector_store %arg6[%c0_62, %c0_63, %c0_64], %146 {strides = array<i32>} : memref<1x8x256xf32, #tpu.memory_space<vmem>>, vector<1x1x256xf32>,
      %c0_65 = arith.constant 0 : index
      %c0_66 = arith.constant 0 : index
      %147 = vector.load %arg8[%c0_65, %c0_66] : memref<1x256xf32, #tpu.memory_space<vmem>>, vector<1x256xf32>
      %c0_67 = arith.constant 0 : index
      %c1 = arith.constant 1 : index
      %c0_68 = arith.constant 0 : index
      %148 = vector.load %arg6[%c0_67, %c1, %c0_68] : memref<1x8x256xf32, #tpu.memory_space<vmem>>, vector<1x1x256xf32>
      %149 = vector.shape_cast %148 : vector<1x1x256xf32> to vector<1x256xf32>
      %150 = vector.shape_cast %147 : vector<1x256xf32> to vector<1x1x256xf32>
      tpu.vector_store %arg6[%c0_67, %c1, %c0_68], %150 {strides = array<i32>} : memref<1x8x256xf32, #tpu.memory_space<vmem>>, vector<1x1x256xf32>,
      %c0_69 = arith.constant 0 : index
      %c0_70 = arith.constant 0 : index
      %151 = vector.load %arg9[%c0_69, %c0_70] : memref<1x256xf32, #tpu.memory_space<vmem>>, vector<1x256xf32>
      %c0_71 = arith.constant 0 : index
      %c2 = arith.constant 2 : index
      %c0_72 = arith.constant 0 : index
      %152 = vector.load %arg6[%c0_71, %c2, %c0_72] : memref<1x8x256xf32, #tpu.memory_space<vmem>>, vector<1x1x256xf32>
      %153 = vector.shape_cast %152 : vector<1x1x256xf32> to vector<1x256xf32>
      %154 = vector.shape_cast %151 : vector<1x256xf32> to vector<1x1x256xf32>
      tpu.vector_store %arg6[%c0_71, %c2, %c0_72], %154 {strides = array<i32>} : memref<1x8x256xf32, #tpu.memory_space<vmem>>, vector<1x1x256xf32>,
      %c0_73 = arith.constant 0 : index
      %c0_74 = arith.constant 0 : index
      %155 = vector.load %arg10[%c0_73, %c0_74] : memref<1x256xf32, #tpu.memory_space<vmem>>, vector<1x256xf32>
      %c0_75 = arith.constant 0 : index
      %c3 = arith.constant 3 : index
      %c0_76 = arith.constant 0 : index
      %156 = vector.load %arg6[%c0_75, %c3, %c0_76] : memref<1x8x256xf32, #tpu.memory_space<vmem>>, vector<1x1x256xf32>
      %157 = vector.shape_cast %156 : vector<1x1x256xf32> to vector<1x256xf32>
      %158 = vector.shape_cast %155 : vector<1x256xf32> to vector<1x1x256xf32>
      tpu.vector_store %arg6[%c0_75, %c3, %c0_76], %158 {strides = array<i32>} : memref<1x8x256xf32, #tpu.memory_space<vmem>>, vector<1x1x256xf32>,
      %c0_i32_77 = arith.constant 0 : i32
      %159 = vector.broadcast %c0_i32_77 : i32 to vector<1x256xi32>
      %160 = arith.cmpi eq, %142, %159 : vector<1x256xi32>
      %c0_78 = arith.constant 0 : index
      %161 = memref.load %arg11[%c0_78] : memref<1xf32, #tpu.memory_space<smem>>
      %cst_79 = arith.constant 0.000000e+00 : f32
      %162 = vector.broadcast %161 : f32 to vector<1x256xf32>
      %163 = vector.broadcast %cst_79 : f32 to vector<1x256xf32>
      %164 = arith.select %160, %162, %163 : vector<1x256xi1>, vector<1x256xf32>
      %c0_80 = arith.constant 0 : index
      %c4 = arith.constant 4 : index
      %c0_81 = arith.constant 0 : index
      %165 = vector.load %arg6[%c0_80, %c4, %c0_81] : memref<1x8x256xf32, #tpu.memory_space<vmem>>, vector<1x1x256xf32>
      %166 = vector.shape_cast %165 : vector<1x1x256xf32> to vector<1x256xf32>
      %167 = vector.shape_cast %164 : vector<1x256xf32> to vector<1x1x256xf32>
      tpu.vector_store %arg6[%c0_80, %c4, %c0_81], %167 {strides = array<i32>} : memref<1x8x256xf32, #tpu.memory_space<vmem>>, vector<1x1x256xf32>,
      %cst_82 = arith.constant 0.000000e+00 : f32
      %168 = vector.broadcast %cst_82 : f32 to vector<3x256xf32>
      %c0_83 = arith.constant 0 : index
      %c5 = arith.constant 5 : index
      %c0_84 = arith.constant 0 : index
      %169 = vector.load %arg6[%c0_83, %c5, %c0_84] : memref<1x8x256xf32, #tpu.memory_space<vmem>>, vector<1x3x256xf32>
      %170 = vector.shape_cast %169 : vector<1x3x256xf32> to vector<3x256xf32>
      %171 = vector.shape_cast %168 : vector<3x256xf32> to vector<1x3x256xf32>
      tpu.vector_store %arg6[%c0_83, %c5, %c0_84], %171 {strides = array<i32>} : memref<1x8x256xf32, #tpu.memory_space<vmem>>, vector<1x3x256xf32>,
    } else {
    }
    return
  }
  func.func @transform_0(%arg0: i32, %arg1: i32) -> (i32, i32) {
    %c1_i32 = arith.constant 1 : i32
    %0 = arith.muli %arg0, %c1_i32 : i32
    %1 = arith.addi %0, %arg1 : i32
    %c0_i32 = arith.constant 0 : i32
    %c0_i32_0 = arith.constant 0 : i32
    return %1, %c0_i32 : i32, i32
  }
  func.func @transform_1(%arg0: i32, %arg1: i32) -> (i32, i32) {
    %c0_i32 = arith.constant 0 : i32
    %c0_i32_0 = arith.constant 0 : i32
    %c0_i32_1 = arith.constant 0 : i32
    return %c0_i32, %c0_i32_0 : i32, i32
  }
  func.func @transform_2(%arg0: i32, %arg1: i32) -> (i32, i32) {
    %c1_i32 = arith.constant 1 : i32
    %0 = arith.muli %arg0, %c1_i32 : i32
    %1 = arith.addi %0, %arg1 : i32
    %c0_i32 = arith.constant 0 : i32
    %c0_i32_0 = arith.constant 0 : i32
    return %1, %c0_i32 : i32, i32
  }
  func.func @transform_3(%arg0: i32, %arg1: i32) -> (i32, i32) {
    %c1_i32 = arith.constant 1 : i32
    %0 = arith.muli %arg0, %c1_i32 : i32
    %1 = arith.addi %0, %arg1 : i32
    %c0_i32 = arith.constant 0 : i32
    %c0_i32_0 = arith.constant 0 : i32
    return %1, %c0_i32 : i32, i32
  }
  func.func @transform_4(%arg0: i32, %arg1: i32) -> (i32, i32, i32) {
    %c0_i32 = arith.constant 0 : i32
    %c0_i32_0 = arith.constant 0 : i32
    %c0_i32_1 = arith.constant 0 : i32
    return %arg0, %c0_i32, %c0_i32_0 : i32, i32, i32
  }
}

</mosaic_0001>

<llo_original>
// kernel: coarse_matching_loss.1
$region0: #{coarse_matching_loss.1}
  #allocation0 [shape = 'u32[]', space=smem, size = 0x4, offset = 0x4, fixed_abs, tag = 'smem constant byte address 0x4 - core index']
  #allocation1 [shape = 'u32[144,128]{1,0:T(1,128)}', space=vmem, size = 0x12000, scoped, tag = 'internal scratch']
  #allocation2 [shape = 'f32[1,256]{1,0:T(1,128)}', space=vmem, size = 0x400, scoped, tag = 'scratch operand']
  #allocation3 [shape = 'f32[1,256]{1,0:T(1,128)}', space=vmem, size = 0x400, scoped, tag = 'scratch operand']
  #allocation4 [shape = 'f32[1,256]{1,0:T(1,128)}', space=vmem, size = 0x400, scoped, tag = 'scratch operand']
  #allocation5 [shape = 'f32[1,256]{1,0:T(1,128)}', space=vmem, size = 0x400, scoped, tag = 'scratch operand']
  #allocation6 [shape = 'f32[1]{0:T(128)}', space=smem, size = 0x200, scoped, tag = 'scratch operand']
  %s0 = inlined_call_operand.vmem [shape: bf16[512,64], index: 0, kind: input, shape index: {}]
  %s1 = inlined_call_operand.vmem [shape: bf16[64,256], index: 1, kind: input, shape index: {}]
  %s2 = inlined_call_operand.vmem [shape: bf16[512,256], index: 2, kind: input, shape index: {}]
  %s3 = inlined_call_operand.vmem [shape: f32[512,1], index: 3, kind: input, shape index: {}]
  %s4 = inlined_call_operand.vmem [shape: f32[2,8,256], index: 4, kind: output, shape index: {}]
  %s5 = sld [smem:[#allocation0]]
  $region57: #{coarse_matching_loss.1} parent=0
    _
  %s7 = ssub.s32 1, %s5
  %s8 = scalar_select 0, %s7, %s5
  loop: start=0, step=1, limit=4
  $region2: #{coarse_matching_loss.1} parent=0 // loop_pre_header
    _
  $region3: #{coarse_matching_loss.1} parent=0 // loop_header
    %s10 = sphi 0, %s14
    %p11 = scmp.ge.s32.totalorder %s10, 4
    %s17 = sphi 0, %s29
    %s18 = sphi 0, %s25
    %s19 = sphi 0, %s17
    %s20 = sphi 0, %s18
    %s21 = sphi 0, %s19
    %s22 = sphi 0, %s20
    %s34 = sphi 0, %s36
    %s37 = sphi 0, %s34
    %s38 = sphi 0, %s37
    %s54 = sphi 0, %s38
    %s58 = sphi 0, %s58
    %s60 = sphi 0, %s58
    %s61 = sphi 0, %s60
    %s75 = sphi 0, %s61
    %s83 = sphi 0, %s85
    %s86 = sphi 0, %s83
    %s87 = sphi 0, %s86
    %s103 = sphi 0, %s87
    %s111 = sphi 0, %s113
    %s114 = sphi 0, %s111
    %s115 = sphi 0, %s114
    %s131 = sphi 0, %s115
    %s137 = sphi 0, %s139
    %s140 = sphi 0, %s137
    %s141 = sphi 0, %s140
    %s157 = sphi 0, %s141
  $region4: #{coarse_matching_loss.1} parent=0 // loop_header_branch
    %13 = sbr.rel (%p11) target = $region8
  $region5: #{coarse_matching_loss.1} parent=0 // loop_body
    %s15 = ssub.s32 %s10, 1
    %s16 = ssub.s32 %s10, 2
    %s23 = sadd.s32 1, %s18
    %p24 = scmp.ge.s32.totalorder %s23, 1
    %s25 = scalar_select %p24, 0, %s23
    %s26 = sadd.s32 1, %s17
    %s27 = scalar_select %p24, %s26, %s17
    %p28 = scmp.ge.s32.totalorder %s27, 2
    %s29 = scalar_select %p28, 0, %s27
    %s30 = sadd.s32 %s17, %s18
    %s31 = sadd.s32 %s29, %s25
    %s32 = ssub.s32 %s30, %s31
    %p33 = scmp.eq.s32.totalorder %s32, 0
    %s35 = sadd.s32 %s34, 1
    %s36 = scalar_select %p33, %s34, %s35
    %p39 = pneg %p33
    %p40 = scmp.eq.s32.totalorder %s10, 1
    %p41 = por %p39, %p40
    %p42 = scmp.ne.s32.totalorder %s34, %s37
    %p43 = scmp.eq.s32.totalorder %s10, 0
    %p44 = por %p42, %p43
    %p45 = scmp.ne.s32.totalorder %s34, %s37
    %p46 = scmp.eq.s32.totalorder %s15, 1
    %p47 = por %p45, %p46
    %p48 = scmp.ne.s32.totalorder %s37, %s38
    %p49 = scmp.eq.s32.totalorder %s15, 0
    %p50 = por %p48, %p49
    %p51 = scmp.ne.s32.totalorder %s37, %s38
    %p52 = scmp.eq.s32.totalorder %s16, 1
    %p53 = por %p51, %p52
    %p55 = scmp.ne.s32.totalorder %s38, %s54
    %p56 = scmp.eq.s32.totalorder %s16, 0
    %p57 = por %p55, %p56
    %s59 = sadd.s32 %s58, 1
    %p62 = scmp.eq.s32.totalorder %s10, 1
    %p63 = scmp.ne.s32.totalorder %s58, %s60
    %p64 = scmp.eq.s32.totalorder %s10, 0
    %p65 = por %p63, %p64
    %p66 = scmp.ne.s32.totalorder %s58, %s60
    %p67 = scmp.eq.s32.totalorder %s15, 1
    %p68 = por %p66, %p67
    %p69 = scmp.ne.s32.totalorder %s60, %s61
    %p70 = scmp.eq.s32.totalorder %s15, 0
    %p71 = por %p69, %p70
    %p72 = scmp.ne.s32.totalorder %s60, %s61
    %p73 = scmp.eq.s32.totalorder %s16, 1
    %p74 = por %p72, %p73
    %p76 = scmp.ne.s32.totalorder %s61, %s75
    %p77 = scmp.eq.s32.totalorder %s16, 0
    %p78 = por %p76, %p77
    %s79 = sadd.s32 %s17, %s18
    %s80 = sadd.s32 %s29, %s25
    %s81 = ssub.s32 %s79, %s80
    %p82 = scmp.eq.s32.totalorder %s81, 0
    %s84 = sadd.s32 %s83, 1
    %s85 = scalar_select %p82, %s83, %s84
    %p88 = pneg %p82
    %p89 = scmp.eq.s32.totalorder %s10, 1
    %p90 = por %p88, %p89
    %p91 = scmp.ne.s32.totalorder %s83, %s86
    %p92 = scmp.eq.s32.totalorder %s10, 0
    %p93 = por %p91, %p92
    %p94 = scmp.ne.s32.totalorder %s83, %s86
    %p95 = scmp.eq.s32.totalorder %s15, 1
    %p96 = por %p94, %p95
    %p97 = scmp.ne.s32.totalorder %s86, %s87
    %p98 = scmp.eq.s32.totalorder %s15, 0
    %p99 = por %p97, %p98
    %p100 = scmp.ne.s32.totalorder %s86, %s87
    %p101 = scmp.eq.s32.totalorder %s16, 1
    %p102 = por %p100, %p101
    %p104 = scmp.ne.s32.totalorder %s87, %s103
    %p105 = scmp.eq.s32.totalorder %s16, 0
    %p106 = por %p104, %p105
    %s107 = sadd.s32 %s17, %s18
    %s108 = sadd.s32 %s29, %s25
    %s109 = ssub.s32 %s107, %s108
    %p110 = scmp.eq.s32.totalorder %s109, 0
    %s112 = sadd.s32 %s111, 1
    %s113 = scalar_select %p110, %s111, %s112
    %p116 = pneg %p110
    %p117 = scmp.eq.s32.totalorder %s10, 1
    %p118 = por %p116, %p117
    %p119 = scmp.ne.s32.totalorder %s111, %s114
    %p120 = scmp.eq.s32.totalorder %s10, 0
    %p121 = por %p119, %p120
    %p122 = scmp.ne.s32.totalorder %s111, %s114
    %p123 = scmp.eq.s32.totalorder %s15, 1
    %p124 = por %p122, %p123
    %p125 = scmp.ne.s32.totalorder %s114, %s115
    %p126 = scmp.eq.s32.totalorder %s15, 0
    %p127 = por %p125, %p126
    %p128 = scmp.ne.s32.totalorder %s114, %s115
    %p129 = scmp.eq.s32.totalorder %s16, 1
    %p130 = por %p128, %p129
    %p132 = scmp.ne.s32.totalorder %s115, %s131
    %p133 = scmp.eq.s32.totalorder %s16, 0
    %p134 = por %p132, %p133
    %s135 = ssub.s32 %s17, %s29
    %p136 = scmp.eq.s32.totalorder %s135, 0
    %s138 = sadd.s32 %s137, 1
    %s139 = scalar_select %p136, %s137, %s138
    %p142 = pneg %p136
    %p143 = scmp.eq.s32.totalorder %s10, 1
    %p144 = por %p142, %p143
    %p145 = scmp.ne.s32.totalorder %s137, %s140
    %p146 = scmp.eq.s32.totalorder %s10, 0
    %p147 = por %p145, %p146
    %p148 = scmp.ne.s32.totalorder %s137, %s140
    %p149 = scmp.eq.s32.totalorder %s15, 1
    %p150 = por %p148, %p149
    %p151 = scmp.ne.s32.totalorder %s140, %s141
    %p152 = scmp.eq.s32.totalorder %s15, 0
    %p153 = por %p151, %p152
    %p154 = scmp.ne.s32.totalorder %s140, %s141
    %p155 = scmp.eq.s32.totalorder %s16, 1
    %p156 = por %p154, %p155
    %p158 = scmp.ne.s32.totalorder %s141, %s157
    %p159 = scmp.eq.s32.totalorder %s16, 0
    %p160 = por %p158, %p159
    %p161 = scmp.le.s32.totalorder 1, %s10
    %p162 = scmp.lt.s32.totalorder %s10, 3
    %p163 = pnand %p161, %p162
    %p164 = pneg %p163
    // Predicated region
    $region9: #{coarse_matching_loss.1} parent=5 // pred_check
      _
    $region10: #{coarse_matching_loss.1} parent=5 // pred_check_branch
      %166 = sbr.rel (%p163) target = $region12
    $region11: #{coarse_matching_loss.1} parent=5 // pred_region
      %s167 = ssub.s32 %s10, 1
      // Predicated region
      $region13: #{coarse_matching_loss.1} parent=11 // pred_check
        %p168 = pneg %p71
      $region14: #{coarse_matching_loss.1} parent=11 // pred_check_branch
        %170 = sbr.rel (%p168) target = $region16
      $region15: #{coarse_matching_loss.1} parent=11 // pred_region
        _
      $region16: #{coarse_matching_loss.1} parent=11 // pred_fallthru
        _
    $region12: #{coarse_matching_loss.1} parent=5 // pred_fallthru
      _
    %p171 = scmp.lt.s32.totalorder %s10, 2
    // Predicated region
    $region17: #{coarse_matching_loss.1} parent=5 // pred_check
      %p172 = pneg %p171
    $region18: #{coarse_matching_loss.1} parent=5 // pred_check_branch
      %174 = sbr.rel (%p172) target = $region20
    $region19: #{coarse_matching_loss.1} parent=5 // pred_region
      // Predicated region
      $region21: #{coarse_matching_loss.1} parent=19 // pred_check
        %p175 = pneg %p44
      $region22: #{coarse_matching_loss.1} parent=19 // pred_check_branch
        %177 = sbr.rel (%p175) target = $region24
      $region23: #{coarse_matching_loss.1} parent=19 // pred_region
        %s178 = sadd.s32 %s17, %s18
        %s179 = smul.u32 32, %s178
        %p180 = scmp.lt.s32.totalorder %s179, 63
        %s181 = scalar_select %p180, %s179, 63
        %s182 = smul.addr %s181, 4
        %s183 = scalar_lea.vmem %s0, %s182
        %s184 = sadd.s32 %s17, %s18
        %s185 = smul.u32 32, %s184
      $region24: #{coarse_matching_loss.1} parent=19 // pred_fallthru
        _
      // Predicated region
      $region25: #{coarse_matching_loss.1} parent=19 // pred_check
        %p186 = pneg %p93
      $region26: #{coarse_matching_loss.1} parent=19 // pred_check_branch
        %188 = sbr.rel (%p186) target = $region28
      $region27: #{coarse_matching_loss.1} parent=19 // pred_region
        %s189 = sadd.s32 %s17, %s18
        %s190 = smul.u32 32, %s189
        %p191 = scmp.lt.s32.totalorder %s190, 63
        %s192 = scalar_select %p191, %s190, 63
        %s193 = smul.addr %s192, 2
        %s194 = smul.addr %s193, 4
        %s195 = scalar_lea.vmem %s2, %s194
        %s196 = sadd.s32 %s17, %s18
        %s197 = smul.u32 32, %s196
      $region28: #{coarse_matching_loss.1} parent=19 // pred_fallthru
        _
      // Predicated region
      $region29: #{coarse_matching_loss.1} parent=19 // pred_check
        %p198 = pneg %p121
      $region30: #{coarse_matching_loss.1} parent=19 // pred_check_branch
        %200 = sbr.rel (%p198) target = $region32
      $region31: #{coarse_matching_loss.1} parent=19 // pred_region
        %s201 = sadd.s32 %s17, %s18
        %s202 = smul.u32 32, %s201
        %p203 = scmp.lt.s32.totalorder %s202, 63
        %s204 = scalar_select %p203, %s202, 63
        %s205 = smul.addr %s204, 8
        %s206 = scalar_lea.vmem %s3, %s205
        %s207 = sadd.s32 %s17, %s18
        %s208 = smul.u32 32, %s207
      $region32: #{coarse_matching_loss.1} parent=19 // pred_fallthru
        _
    $region20: #{coarse_matching_loss.1} parent=5 // pred_fallthru
      _
    %p209 = scmp.le.s32.totalorder 1, %s10
    %p210 = scmp.lt.s32.totalorder %s10, 3
    %p211 = pnand %p209, %p210
    %p212 = pneg %p211
    // Predicated region
    $region33: #{coarse_matching_loss.1} parent=5 // pred_check
      _
    $region34: #{coarse_matching_loss.1} parent=5 // pred_check_branch
      %214 = sbr.rel (%p211) target = $region36
    $region35: #{coarse_matching_loss.1} parent=5 // pred_region
      %s215 = ssub.s32 %s10, 1
      %s216 = sadd.s32 %s19, %s20
      %s217 = smul.u32 32, %s216
      %p218 = scmp.lt.s32.totalorder %s217, 63
      %s219 = scalar_select %p218, %s217, 63
      %s220 = smul.addr %s219, 4
      %s221 = scalar_lea.vmem %s0, %s220
      %p222 = pneg %p50
      %p223 = pneg %p47
      %p224 = pneg %p71
      %p225 = pneg %p68
      %s226 = sadd.s32 %s19, %s20
      %s227 = smul.u32 32, %s226
      %p228 = scmp.lt.s32.totalorder %s227, 63
      %s229 = scalar_select %p228, %s227, 63
      %s230 = smul.addr %s229, 2
      %s231 = smul.addr %s230, 4
      %s232 = scalar_lea.vmem %s2, %s231
      %p233 = pneg %p99
      %p234 = pneg %p96
      %s235 = sadd.s32 %s19, %s20
      %s236 = smul.u32 32, %s235
      %p237 = scmp.lt.s32.totalorder %s236, 63
      %s238 = scalar_select %p237, %s236, 63
      %s239 = smul.addr %s238, 8
      %s240 = scalar_lea.vmem %s3, %s239
      %p241 = pneg %p127
      %p242 = pneg %p124
      %p243 = pneg %p153
      %p244 = pneg %p150
      %p245 = scmp.lt.s32.totalorder %s19, 1
      %s246 = scalar_select %p245, %s19, 1
      %s247 = smul.addr %s246, 2
      %s248 = smul.addr %s247, 8
      %s249 = scalar_lea.vmem %s4, %s248
      %s250 = sadd.s32 %s19, %s20
      %s251 = smul.u32 32, %s250
      %p252 = scmp.lt.s32.totalorder %s251, 63
      %s253 = scalar_select %p252, %s251, 63
      %s254 = smul.addr %s253, 4
      %s255 = scalar_lea.vmem %s0, %s254
      %s256 = sadd.s32 %s19, %s20
      %s257 = smul.u32 32, %s256
      %s258 = sadd.s32 %s19, %s20
      %s259 = smul.u32 32, %s258
      %p260 = scmp.lt.s32.totalorder %s259, 63
      %s261 = scalar_select %p260, %s259, 63
      %s262 = smul.addr %s261, 2
      %s263 = smul.addr %s262, 4
      %s264 = scalar_lea.vmem %s2, %s263
      %s265 = sadd.s32 %s19, %s20
      %s266 = smul.u32 32, %s265
      %s267 = sadd.s32 %s19, %s20
      %s268 = smul.u32 32, %s267
      %p269 = scmp.lt.s32.totalorder %s268, 63
      %s270 = scalar_select %p269, %s268, 63
      %s271 = smul.addr %s270, 8
      %s272 = scalar_lea.vmem %s3, %s271
      %s273 = sadd.s32 %s19, %s20
      %s274 = smul.u32 32, %s273
      %p275 = scmp.lt.s32.totalorder %s19, 1
      %s276 = scalar_select %p275, %s19, 1
      %s277 = smul.addr %s276, 2
      %s278 = smul.addr %s277, 8
      %s279 = scalar_lea.vmem %s4, %s278
      %p281 = scmp.eq.s32.totalorder %s20, 0
      // Predicated region
      $region37: #{coarse_matching_loss.1} parent=35 // pred_check
        %p282 = pneg %p281
      $region38: #{coarse_matching_loss.1} parent=35 // pred_check_branch
        %284 = sbr.rel (%p282) target = $region40
      $region39: #{coarse_matching_loss.1} parent=35 // pred_region
        %v285 = vlaneseq
        %vm286 = vcmp.ge.s32.totalorder %v285, 0
        %vm287 = vcmp.lt.s32.totalorder %v285, 256
        %vm288 = vmand %vm286, %vm287
        %289 = vst.msk [vmem:[#allocation2] sm:$0x3] %vm288, -1e+30
        %290 = vst.msk [vmem:[#allocation4] sm:$0x3] %vm288, -1e+30
        %291 = vst.msk [vmem:[#allocation3] sm:$0x3] %vm288, 0.0
        %292 = vst.msk [vmem:[#allocation5] sm:$0x3] %vm288, 0.0
        %s293 = scalar_lea.smem [#allocation6], 0
        %294 = sst [smem:[%s293]] 0.0
      $region40: #{coarse_matching_loss.1} parent=35 // pred_fallthru
        _
      %v295 = vld [vmem:[%s255] sm:$0xf]
      %v296 = vld [vmem:[%s255 + $0x4] sm:$0xf]
      %v297 = vld [vmem:[%s255 + $0x8] sm:$0xf]
      %v298 = vld [vmem:[%s255 + $0xc] sm:$0xf]
      %v299 = vld [vmem:[%s255 + $0x10] sm:$0xf]
      %v300 = vld [vmem:[%s255 + $0x14] sm:$0xf]
      %v301 = vld [vmem:[%s255 + $0x18] sm:$0xf]
      %v302 = vld [vmem:[%s255 + $0x1c] sm:$0xf]
      %v303 = vld [vmem:[%s255 + $0x20] sm:$0xf]
      %v304 = vld [vmem:[%s255 + $0x24] sm:$0xf]
      %v305 = vld [vmem:[%s255 + $0x28] sm:$0xf]
      %v306 = vld [vmem:[%s255 + $0x2c] sm:$0xf]
      %v307 = vld [vmem:[%s255 + $0x30] sm:$0xf]
      %v308 = vld [vmem:[%s255 + $0x34] sm:$0xf]
      %v309 = vld [vmem:[%s255 + $0x38] sm:$0xf]
      %v310 = vld [vmem:[%s255 + $0x3c] sm:$0xf]
      %v311 = vld [vmem:[%s255 + $0x40] sm:$0xf]
      %v312 = vld [vmem:[%s255 + $0x44] sm:$0xf]
      %v313 = vld [vmem:[%s255 + $0x48] sm:$0xf]
      %v314 = vld [vmem:[%s255 + $0x4c] sm:$0xf]
      %v315 = vld [vmem:[%s255 + $0x50] sm:$0xf]
      %v316 = vld [vmem:[%s255 + $0x54] sm:$0xf]
      %v317 = vld [vmem:[%s255 + $0x58] sm:$0xf]
      %v318 = vld [vmem:[%s255 + $0x5c] sm:$0xf]
      %v319 = vld [vmem:[%s255 + $0x60] sm:$0xf]
      %v320 = vld [vmem:[%s255 + $0x64] sm:$0xf]
      %v321 = vld [vmem:[%s255 + $0x68] sm:$0xf]
      %v322 = vld [vmem:[%s255 + $0x6c] sm:$0xf]
      %v323 = vld [vmem:[%s255 + $0x70] sm:$0xf]
      %v324 = vld [vmem:[%s255 + $0x74] sm:$0xf]
      %v325 = vld [vmem:[%s255 + $0x78] sm:$0xf]
      %v326 = vld [vmem:[%s255 + $0x7c] sm:$0xf]
      %v327 = vld [vmem:[%s1] sm:$0xff]
      %v328 = vld [vmem:[%s1 + $0x8] sm:$0xff]
      %v329 = vld [vmem:[%s1 + $0x10] sm:$0xff]
      %v330 = vld [vmem:[%s1 + $0x18] sm:$0xff]
      %v331 = vld [vmem:[%s1 + $0x20] sm:$0xff]
      %v332 = vld [vmem:[%s1 + $0x28] sm:$0xff]
      %v333 = vld [vmem:[%s1 + $0x30] sm:$0xff]
      %v334 = vld [vmem:[%s1 + $0x38] sm:$0xff]
      %v367 = vunpack.c.l.b16 %v295
      %v368 = vunpack.c.l.b16 %v296
      %v369 = vunpack.c.l.b16 %v297
      %v370 = vunpack.c.l.b16 %v298
      %v371 = vunpack.c.l.b16 %v299
      %v372 = vunpack.c.l.b16 %v300
      %v373 = vunpack.c.l.b16 %v301
      %v374 = vunpack.c.l.b16 %v302
      %v375 = vunpack.c.l.b16 %v303
      %v376 = vunpack.c.l.b16 %v304
      %v377 = vunpack.c.l.b16 %v305
      %v378 = vunpack.c.l.b16 %v306
      %v379 = vunpack.c.l.b16 %v307
      %v380 = vunpack.c.l.b16 %v308
      %v381 = vunpack.c.l.b16 %v309
      %v382 = vunpack.c.l.b16 %v310
      %v383 = vunpack.c.l.b16 %v311
      %v384 = vunpack.c.l.b16 %v312
      %v385 = vunpack.c.l.b16 %v313
      %v386 = vunpack.c.l.b16 %v314
      %v387 = vunpack.c.l.b16 %v315
      %v388 = vunpack.c.l.b16 %v316
      %v389 = vunpack.c.l.b16 %v317
      %v390 = vunpack.c.l.b16 %v318
      %v391 = vunpack.c.l.b16 %v319
      %v392 = vunpack.c.l.b16 %v320
      %v393 = vunpack.c.l.b16 %v321
      %v394 = vunpack.c.l.b16 %v322
      %v395 = vunpack.c.l.b16 %v323
      %v396 = vunpack.c.l.b16 %v324
      %v397 = vunpack.c.l.b16 %v325
      %v398 = vunpack.c.l.b16 %v326
      %v399 = vpack.c.b16 %v368, %v367
      %v400 = vpack.c.b16 %v370, %v369
      %v401 = vpack.c.b16 %v372, %v371
      %v402 = vpack.c.b16 %v374, %v373
      %v403 = vpack.c.b16 %v376, %v375
      %v404 = vpack.c.b16 %v378, %v377
      %v405 = vpack.c.b16 %v380, %v379
      %v406 = vpack.c.b16 %v382, %v381
      %v407 = vpack.c.b16 %v384, %v383
      %v408 = vpack.c.b16 %v386, %v385
      %v409 = vpack.c.b16 %v388, %v387
      %v410 = vpack.c.b16 %v390, %v389
      %v411 = vpack.c.b16 %v392, %v391
      %v412 = vpack.c.b16 %v394, %v393
      %v413 = vpack.c.b16 %v396, %v395
      %v414 = vpack.c.b16 %v398, %v397
      %v423 = vunpack.c.l.b16 %v327
      %v424 = vunpack.c.h.b16 %v327
      %v425 = vunpack.c.l.b16 %v328
      %v426 = vunpack.c.h.b16 %v328
      %v427 = vunpack.c.l.b16 %v329
      %v428 = vunpack.c.h.b16 %v329
      %v429 = vunpack.c.l.b16 %v330
      %v430 = vunpack.c.h.b16 %v330
      %v431 = vunpack.c.l.b16 %v331
      %v432 = vunpack.c.h.b16 %v331
      %v433 = vunpack.c.l.b16 %v332
      %v434 = vunpack.c.h.b16 %v332
      %v435 = vunpack.c.l.b16 %v333
      %v436 = vunpack.c.h.b16 %v333
      %v437 = vunpack.c.l.b16 %v334
      %v438 = vunpack.c.h.b16 %v334
      %v439 = vpack.c.b16 %v425, %v423
      %v440 = vpack.c.b16 %v426, %v424
      %v441 = vpack.c.b16 %v429, %v427
      %v442 = vpack.c.b16 %v430, %v428
      %v443 = vpack.c.b16 %v433, %v431
      %v444 = vpack.c.b16 %v434, %v432
      %v445 = vpack.c.b16 %v437, %v435
      %v446 = vpack.c.b16 %v438, %v436
      %vm455 = vcmask 523264
      %v457 = vsel %vm455, %v399, 0
      %v460 = vsel %vm455, %v400, 0
      %v463 = vsel %vm455, %v401, 0
      %v466 = vsel %vm455, %v402, 0
      %v469 = vsel %vm455, %v403, 0
      %v472 = vsel %vm455, %v404, 0
      %v475 = vsel %vm455, %v405, 0
      %v478 = vsel %vm455, %v406, 0
      %v481 = vsel %vm455, %v407, 0
      %v484 = vsel %vm455, %v408, 0
      %v487 = vsel %vm455, %v409, 0
      %v490 = vsel %vm455, %v410, 0
      %v493 = vsel %vm455, %v411, 0
      %v496 = vsel %vm455, %v412, 0
      %v499 = vsel %vm455, %v413, 0
      %v502 = vsel %vm455, %v414, 0
      %504 = vmatprep.subr.bf16.mxu0 0
      %505 = vmatpush1.bf16.msra.mxu0 0
      %506 = vmatprep.subr.bf16.mxu0 0
      %507 = vmatpush1.bf16.msra.mxu0 0
      %508 = vmatprep.subr.bf16.mxu0 0
      %509 = vmatpush1.bf16.msra.mxu0 0
      %510 = vmatprep.subr.bf16.mxu0 0
      %511 = vmatpush1.bf16.msra.mxu0 0
      %512 = vmatprep.subr.bf16.mxu0 %v446
      %513 = vmatpush1.bf16.msra.mxu0 %v445
      %514 = vmatprep.subr.bf16.mxu0 %v444
      %515 = vmatpush1.bf16.msra.mxu0 %v443
      %516 = vmatprep.subr.bf16.mxu0 %v442
      %517 = vmatpush1.bf16.msra.mxu0 %v441
      %518 = vmatprep.subr.bf16.mxu0 %v440
      %519 = vmatpush1.bf16.msra.mxu0 %v439
      %520 = vmatprep.subr.bf16.mxu0 0
      %521 = vmatpush2.bf16.msra.mxu0 0
      %522 = vmatprep.subr.bf16.mxu0 0
      %523 = vmatpush2.bf16.msra.mxu0 0
      %524 = vmatprep.subr.bf16.mxu0 0
      %525 = vmatpush2.bf16.msra.mxu0 0
      %526 = vmatprep.subr.bf16.mxu0 0
      %527 = vmatpush2.bf16.msra.mxu0 0
      %528 = vmatprep.subr.bf16.mxu0 0
      %529 = vmatpush2.bf16.msra.mxu0 0
      %530 = vmatprep.subr.bf16.mxu0 0
      %531 = vmatpush2.bf16.msra.mxu0 0
      %532 = vmatprep.subr.bf16.mxu0 0
      %533 = vmatpush2.bf16.msra.mxu0 0
      %534 = vmatprep.subr.bf16.mxu0 0
      %535 = vmatpush2.bf16.msra.mxu0 0
      %536 = vmatprep.mubr.bf16.mxu0 0
      %537 = vmatmul.mubr.bf16.gmra.mxu0 %v457
      %v538 = vpop.f32.mrf.mxu0
      %v539 = vadd.f32 0.0, %v538
      %v540 = vpop.f32.mrf.mxu0
      %v541 = vadd.f32 0.0, %v540
      %v542 = vpop.f32.mrf.mxu0
      %v543 = vadd.f32 0.0, %v542
      %v544 = vpop.f32.mrf.mxu0
      %v545 = vadd.f32 0.0, %v544
      %546 = vmatprep.mubr.bf16.mxu0 0
      %547 = vmatmul.mubr.bf16.gmra.mxu0 %v460
      %v548 = vpop.f32.mrf.mxu0
      %v549 = vadd.f32 0.0, %v548
      %v550 = vpop.f32.mrf.mxu0
      %v551 = vadd.f32 0.0, %v550
      %v552 = vpop.f32.mrf.mxu0
      %v553 = vadd.f32 0.0, %v552
      %v554 = vpop.f32.mrf.mxu0
      %v555 = vadd.f32 0.0, %v554
      %556 = vmatprep.mubr.bf16.mxu0 0
      %557 = vmatmul.mubr.bf16.gmra.mxu0 %v463
      %v558 = vpop.f32.mrf.mxu0
      %v559 = vadd.f32 0.0, %v558
      %v560 = vpop.f32.mrf.mxu0
      %v561 = vadd.f32 0.0, %v560
      %v562 = vpop.f32.mrf.mxu0
      %v563 = vadd.f32 0.0, %v562
      %v564 = vpop.f32.mrf.mxu0
      %v565 = vadd.f32 0.0, %v564
      %566 = vmatprep.mubr.bf16.mxu0 0
      %567 = vmatmul.mubr.bf16.gmra.mxu0 %v466
      %v568 = vpop.f32.mrf.mxu0
      %v569 = vadd.f32 0.0, %v568
      %v570 = vpop.f32.mrf.mxu0
      %v571 = vadd.f32 0.0, %v570
      %v572 = vpop.f32.mrf.mxu0
      %v573 = vadd.f32 0.0, %v572
      %v574 = vpop.f32.mrf.mxu0
      %v575 = vadd.f32 0.0, %v574
      %576 = vmatprep.mubr.bf16.mxu0 0
      %577 = vmatmul.mubr.bf16.gmra.mxu0 %v469
      %v578 = vpop.f32.mrf.mxu0
      %v579 = vadd.f32 0.0, %v578
      %v580 = vpop.f32.mrf.mxu0
      %v581 = vadd.f32 0.0, %v580
      %v582 = vpop.f32.mrf.mxu0
      %v583 = vadd.f32 0.0, %v582
      %v584 = vpop.f32.mrf.mxu0
      %v585 = vadd.f32 0.0, %v584
      %586 = vmatprep.mubr.bf16.mxu0 0
      %587 = vmatmul.mubr.bf16.gmra.mxu0 %v472
      %v588 = vpop.f32.mrf.mxu0
      %v589 = vadd.f32 0.0, %v588
      %v590 = vpop.f32.mrf.mxu0
      %v591 = vadd.f32 0.0, %v590
      %v592 = vpop.f32.mrf.mxu0
      %v593 = vadd.f32 0.0, %v592
      %v594 = vpop.f32.mrf.mxu0
      %v595 = vadd.f32 0.0, %v594
      %596 = vmatprep.mubr.bf16.mxu0 0
      %597 = vmatmul.mubr.bf16.gmra.mxu0 %v475
      %v598 = vpop.f32.mrf.mxu0
      %v599 = vadd.f32 0.0, %v598
      %v600 = vpop.f32.mrf.mxu0
      %v601 = vadd.f32 0.0, %v600
      %v602 = vpop.f32.mrf.mxu0
      %v603 = vadd.f32 0.0, %v602
      %v604 = vpop.f32.mrf.mxu0
      %v605 = vadd.f32 0.0, %v604
      %606 = vmatprep.mubr.bf16.mxu0 0
      %607 = vmatmul.mubr.bf16.gmra.mxu0 %v478
      %v608 = vpop.f32.mrf.mxu0
      %v609 = vadd.f32 0.0, %v608
      %v610 = vpop.f32.mrf.mxu0
      %v611 = vadd.f32 0.0, %v610
      %v612 = vpop.f32.mrf.mxu0
      %v613 = vadd.f32 0.0, %v612
      %v614 = vpop.f32.mrf.mxu0
      %v615 = vadd.f32 0.0, %v614
      %616 = vmatprep.mubr.bf16.mxu0 0
      %617 = vmatmul.mubr.bf16.gmra.mxu0 %v481
      %v618 = vpop.f32.mrf.mxu0
      %v619 = vadd.f32 0.0, %v618
      %v620 = vpop.f32.mrf.mxu0
      %v621 = vadd.f32 0.0, %v620
      %v622 = vpop.f32.mrf.mxu0
      %v623 = vadd.f32 0.0, %v622
      %v624 = vpop.f32.mrf.mxu0
      %v625 = vadd.f32 0.0, %v624
      %626 = vmatprep.mubr.bf16.mxu0 0
      %627 = vmatmul.mubr.bf16.gmra.mxu0 %v484
      %v628 = vpop.f32.mrf.mxu0
      %v629 = vadd.f32 0.0, %v628
      %v630 = vpop.f32.mrf.mxu0
      %v631 = vadd.f32 0.0, %v630
      %v632 = vpop.f32.mrf.mxu0
      %v633 = vadd.f32 0.0, %v632
      %v634 = vpop.f32.mrf.mxu0
      %v635 = vadd.f32 0.0, %v634
      %636 = vmatprep.mubr.bf16.mxu0 0
      %637 = vmatmul.mubr.bf16.gmra.mxu0 %v487
      %v638 = vpop.f32.mrf.mxu0
      %v639 = vadd.f32 0.0, %v638
      %v640 = vpop.f32.mrf.mxu0
      %v641 = vadd.f32 0.0, %v640
      %v642 = vpop.f32.mrf.mxu0
      %v643 = vadd.f32 0.0, %v642
      %v644 = vpop.f32.mrf.mxu0
      %v645 = vadd.f32 0.0, %v644
      %646 = vmatprep.mubr.bf16.mxu0 0
      %647 = vmatmul.mubr.bf16.gmra.mxu0 %v490
      %v648 = vpop.f32.mrf.mxu0
      %v649 = vadd.f32 0.0, %v648
      %v650 = vpop.f32.mrf.mxu0
      %v651 = vadd.f32 0.0, %v650
      %v652 = vpop.f32.mrf.mxu0
      %v653 = vadd.f32 0.0, %v652
      %v654 = vpop.f32.mrf.mxu0
      %v655 = vadd.f32 0.0, %v654
      %656 = vmatprep.mubr.bf16.mxu0 0
      %657 = vmatmul.mubr.bf16.gmra.mxu0 %v493
      %v658 = vpop.f32.mrf.mxu0
      %v659 = vadd.f32 0.0, %v658
      %v660 = vpop.f32.mrf.mxu0
      %v661 = vadd.f32 0.0, %v660
      %v662 = vpop.f32.mrf.mxu0
      %v663 = vadd.f32 0.0, %v662
      %v664 = vpop.f32.mrf.mxu0
      %v665 = vadd.f32 0.0, %v664
      %666 = vmatprep.mubr.bf16.mxu0 0
      %667 = vmatmul.mubr.bf16.gmra.mxu0 %v496
      %v668 = vpop.f32.mrf.mxu0
      %v669 = vadd.f32 0.0, %v668
      %v670 = vpop.f32.mrf.mxu0
      %v671 = vadd.f32 0.0, %v670
      %v672 = vpop.f32.mrf.mxu0
      %v673 = vadd.f32 0.0, %v672
      %v674 = vpop.f32.mrf.mxu0
      %v675 = vadd.f32 0.0, %v674
      %676 = vmatprep.mubr.bf16.mxu0 0
      %677 = vmatmul.mubr.bf16.gmra.mxu0 %v499
      %v678 = vpop.f32.mrf.mxu0
      %v679 = vadd.f32 0.0, %v678
      %v680 = vpop.f32.mrf.mxu0
      %v681 = vadd.f32 0.0, %v680
      %v682 = vpop.f32.mrf.mxu0
      %v683 = vadd.f32 0.0, %v682
      %v684 = vpop.f32.mrf.mxu0
      %v685 = vadd.f32 0.0, %v684
      %686 = vmatprep.mubr.bf16.mxu0 0
      %687 = vmatmul.mubr.bf16.gmra.mxu0 %v502
      %v688 = vpop.f32.mrf.mxu0
      %v689 = vadd.f32 0.0, %v688
      %v690 = vpop.f32.mrf.mxu0
      %v691 = vadd.f32 0.0, %v690
      %v692 = vpop.f32.mrf.mxu0
      %v693 = vadd.f32 0.0, %v692
      %v694 = vpop.f32.mrf.mxu0
      %v695 = vadd.f32 0.0, %v694
      %696 = vdwg.mxu0
      %v697 = vmul.f32 %v539, 2.0
      %v698 = vmul.f32 %v541, 2.0
      %v699 = vmul.f32 %v543, 2.0
      %v700 = vmul.f32 %v545, 2.0
      %v701 = vmul.f32 %v549, 2.0
      %v702 = vmul.f32 %v551, 2.0
      %v703 = vmul.f32 %v553, 2.0
      %v704 = vmul.f32 %v555, 2.0
      %v705 = vmul.f32 %v559, 2.0
      %v706 = vmul.f32 %v561, 2.0
      %v707 = vmul.f32 %v563, 2.0
      %v708 = vmul.f32 %v565, 2.0
      %v709 = vmul.f32 %v569, 2.0
      %v710 = vmul.f32 %v571, 2.0
      %v711 = vmul.f32 %v573, 2.0
      %v712 = vmul.f32 %v575, 2.0
      %v713 = vmul.f32 %v579, 2.0
      %v714 = vmul.f32 %v581, 2.0
      %v715 = vmul.f32 %v583, 2.0
      %v716 = vmul.f32 %v585, 2.0
      %v717 = vmul.f32 %v589, 2.0
      %v718 = vmul.f32 %v591, 2.0
      %v719 = vmul.f32 %v593, 2.0
      %v720 = vmul.f32 %v595, 2.0
      %v721 = vmul.f32 %v599, 2.0
      %v722 = vmul.f32 %v601, 2.0
      %v723 = vmul.f32 %v603, 2.0
      %v724 = vmul.f32 %v605, 2.0
      %v725 = vmul.f32 %v609, 2.0
      %v726 = vmul.f32 %v611, 2.0
      %v727 = vmul.f32 %v613, 2.0
      %v728 = vmul.f32 %v615, 2.0
      %v729 = vmul.f32 %v619, 2.0
      %v730 = vmul.f32 %v621, 2.0
      %v731 = vmul.f32 %v623, 2.0
      %v732 = vmul.f32 %v625, 2.0
      %v733 = vmul.f32 %v629, 2.0
      %v734 = vmul.f32 %v631, 2.0
      %v735 = vmul.f32 %v633, 2.0
      %v736 = vmul.f32 %v635, 2.0
      %v737 = vmul.f32 %v639, 2.0
      %v738 = vmul.f32 %v641, 2.0
      %v739 = vmul.f32 %v643, 2.0
      %v740 = vmul.f32 %v645, 2.0
      %v741 = vmul.f32 %v649, 2.0
      %v742 = vmul.f32 %v651, 2.0
      %v743 = vmul.f32 %v653, 2.0
      %v744 = vmul.f32 %v655, 2.0
      %v745 = vmul.f32 %v659, 2.0
      %v746 = vmul.f32 %v661, 2.0
      %v747 = vmul.f32 %v663, 2.0
      %v748 = vmul.f32 %v665, 2.0
      %v749 = vmul.f32 %v669, 2.0
      %v750 = vmul.f32 %v671, 2.0
      %v751 = vmul.f32 %v673, 2.0
      %v752 = vmul.f32 %v675, 2.0
      %v753 = vmul.f32 %v679, 2.0
      %v754 = vmul.f32 %v681, 2.0
      %v755 = vmul.f32 %v683, 2.0
      %v756 = vmul.f32 %v685, 2.0
      %v757 = vmul.f32 %v689, 2.0
      %v758 = vmul.f32 %v691, 2.0
      %v759 = vmul.f32 %v693, 2.0
      %v760 = vmul.f32 %v695, 2.0
      %v761 = vsub.f32 2.0, %v697
      %v762 = vsub.f32 2.0, %v698
      %v763 = vsub.f32 2.0, %v699
      %v764 = vsub.f32 2.0, %v700
      %v765 = vsub.f32 2.0, %v701
      %v766 = vsub.f32 2.0, %v702
      %v767 = vsub.f32 2.0, %v703
      %v768 = vsub.f32 2.0, %v704
      %v769 = vsub.f32 2.0, %v705
      %v770 = vsub.f32 2.0, %v706
      %v771 = vsub.f32 2.0, %v707
      %v772 = vsub.f32 2.0, %v708
      %v773 = vsub.f32 2.0, %v709
      %v774 = vsub.f32 2.0, %v710
      %v775 = vsub.f32 2.0, %v711
      %v776 = vsub.f32 2.0, %v712
      %v777 = vsub.f32 2.0, %v713
      %v778 = vsub.f32 2.0, %v714
      %v779 = vsub.f32 2.0, %v715
      %v780 = vsub.f32 2.0, %v716
      %v781 = vsub.f32 2.0, %v717
      %v782 = vsub.f32 2.0, %v718
      %v783 = vsub.f32 2.0, %v719
      %v784 = vsub.f32 2.0, %v720
      %v785 = vsub.f32 2.0, %v721
      %v786 = vsub.f32 2.0, %v722
      %v787 = vsub.f32 2.0, %v723
      %v788 = vsub.f32 2.0, %v724
      %v789 = vsub.f32 2.0, %v725
      %v790 = vsub.f32 2.0, %v726
      %v791 = vsub.f32 2.0, %v727
      %v792 = vsub.f32 2.0, %v728
      %v793 = vsub.f32 2.0, %v729
      %v794 = vsub.f32 2.0, %v730
      %v795 = vsub.f32 2.0, %v731
      %v796 = vsub.f32 2.0, %v732
      %v797 = vsub.f32 2.0, %v733
      %v798 = vsub.f32 2.0, %v734
      %v799 = vsub.f32 2.0, %v735
      %v800 = vsub.f32 2.0, %v736
      %v801 = vsub.f32 2.0, %v737
      %v802 = vsub.f32 2.0, %v738
      %v803 = vsub.f32 2.0, %v739
      %v804 = vsub.f32 2.0, %v740
      %v805 = vsub.f32 2.0, %v741
      %v806 = vsub.f32 2.0, %v742
      %v807 = vsub.f32 2.0, %v743
      %v808 = vsub.f32 2.0, %v744
      %v809 = vsub.f32 2.0, %v745
      %v810 = vsub.f32 2.0, %v746
      %v811 = vsub.f32 2.0, %v747
      %v812 = vsub.f32 2.0, %v748
      %v813 = vsub.f32 2.0, %v749
      %v814 = vsub.f32 2.0, %v750
      %v815 = vsub.f32 2.0, %v751
      %v816 = vsub.f32 2.0, %v752
      %v817 = vsub.f32 2.0, %v753
      %v818 = vsub.f32 2.0, %v754
      %v819 = vsub.f32 2.0, %v755
      %v820 = vsub.f32 2.0, %v756
      %v821 = vsub.f32 2.0, %v757
      %v822 = vsub.f32 2.0, %v758
      %v823 = vsub.f32 2.0, %v759
      %v824 = vsub.f32 2.0, %v760
      %v825 = vmax.f32 %v761, 0.0
      %v826 = vmax.f32 %v762, 0.0
      %v827 = vmax.f32 %v763, 0.0
      %v828 = vmax.f32 %v764, 0.0
      %v829 = vmax.f32 %v765, 0.0
      %v830 = vmax.f32 %v766, 0.0
      %v831 = vmax.f32 %v767, 0.0
      %v832 = vmax.f32 %v768, 0.0
      %v833 = vmax.f32 %v769, 0.0
      %v834 = vmax.f32 %v770, 0.0
      %v835 = vmax.f32 %v771, 0.0
      %v836 = vmax.f32 %v772, 0.0
      %v837 = vmax.f32 %v773, 0.0
      %v838 = vmax.f32 %v774, 0.0
      %v839 = vmax.f32 %v775, 0.0
      %v840 = vmax.f32 %v776, 0.0
      %v841 = vmax.f32 %v777, 0.0
      %v842 = vmax.f32 %v778, 0.0
      %v843 = vmax.f32 %v779, 0.0
      %v844 = vmax.f32 %v780, 0.0
      %v845 = vmax.f32 %v781, 0.0
      %v846 = vmax.f32 %v782, 0.0
      %v847 = vmax.f32 %v783, 0.0
      %v848 = vmax.f32 %v784, 0.0
      %v849 = vmax.f32 %v785, 0.0
      %v850 = vmax.f32 %v786, 0.0
      %v851 = vmax.f32 %v787, 0.0
      %v852 = vmax.f32 %v788, 0.0
      %v853 = vmax.f32 %v789, 0.0
      %v854 = vmax.f32 %v790, 0.0
      %v855 = vmax.f32 %v791, 0.0
      %v856 = vmax.f32 %v792, 0.0
      %v857 = vmax.f32 %v793, 0.0
      %v858 = vmax.f32 %v794, 0.0
      %v859 = vmax.f32 %v795, 0.0
      %v860 = vmax.f32 %v796, 0.0
      %v861 = vmax.f32 %v797, 0.0
      %v862 = vmax.f32 %v798, 0.0
      %v863 = vmax.f32 %v799, 0.0
      %v864 = vmax.f32 %v800, 0.0
      %v865 = vmax.f32 %v801, 0.0
      %v866 = vmax.f32 %v802, 0.0
      %v867 = vmax.f32 %v803, 0.0
      %v868 = vmax.f32 %v804, 0.0
      %v869 = vmax.f32 %v805, 0.0
      %v870 = vmax.f32 %v806, 0.0
      %v871 = vmax.f32 %v807, 0.0
      %v872 = vmax.f32 %v808, 0.0
      %v873 = vmax.f32 %v809, 0.0
      %v874 = vmax.f32 %v810, 0.0
      %v875 = vmax.f32 %v811, 0.0
      %v876 = vmax.f32 %v812, 0.0
      %v877 = vmax.f32 %v813, 0.0
      %v878 = vmax.f32 %v814, 0.0
      %v879 = vmax.f32 %v815, 0.0
      %v880 = vmax.f32 %v816, 0.0
      %v881 = vmax.f32 %v817, 0.0
      %v882 = vmax.f32 %v818, 0.0
      %v883 = vmax.f32 %v819, 0.0
      %v884 = vmax.f32 %v820, 0.0
      %v885 = vmax.f32 %v821, 0.0
      %v886 = vmax.f32 %v822, 0.0
      %v887 = vmax.f32 %v823, 0.0
      %v888 = vmax.f32 %v824, 0.0
      %v889 = vrsqrt.pop %v825
      %v890 = vmul.f32 %v825, %v889
      %vm891 = vcmp.eq.f32.partialorder %v825, inf
      %v892 = vsel %vm891, %v825, %v890
      %vm893 = vcmp.eq.f32.partialorder %v825, 0.0
      %v894 = vand.u32 %v825, 2147483648
      %v895 = vsel %vm893, %v894, %v892
      %v896 = vrsqrt.pop %v826
      %v897 = vmul.f32 %v826, %v896
      %vm898 = vcmp.eq.f32.partialorder %v826, inf
      %v899 = vsel %vm898, %v826, %v897
      %vm900 = vcmp.eq.f32.partialorder %v826, 0.0
      %v901 = vand.u32 %v826, 2147483648
      %v902 = vsel %vm900, %v901, %v899
      %v903 = vrsqrt.pop %v827
      %v904 = vmul.f32 %v827, %v903
      %vm905 = vcmp.eq.f32.partialorder %v827, inf
      %v906 = vsel %vm905, %v827, %v904
      %vm907 = vcmp.eq.f32.partialorder %v827, 0.0
      %v908 = vand.u32 %v827, 2147483648
      %v909 = vsel %vm907, %v908, %v906
      %v910 = vrsqrt.pop %v828
      %v911 = vmul.f32 %v828, %v910
      %vm912 = vcmp.eq.f32.partialorder %v828, inf
      %v913 = vsel %vm912, %v828, %v911
      %vm914 = vcmp.eq.f32.partialorder %v828, 0.0
      %v915 = vand.u32 %v828, 2147483648
      %v916 = vsel %vm914, %v915, %v913
      %v917 = vrsqrt.pop %v829
      %v918 = vmul.f32 %v829, %v917
      %vm919 = vcmp.eq.f32.partialorder %v829, inf
      %v920 = vsel %vm919, %v829, %v918
      %vm921 = vcmp.eq.f32.partialorder %v829, 0.0
      %v922 = vand.u32 %v829, 2147483648
      %v923 = vsel %vm921, %v922, %v920
      %v924 = vrsqrt.pop %v830
      %v925 = vmul.f32 %v830, %v924
      %vm926 = vcmp.eq.f32.partialorder %v830, inf
      %v927 = vsel %vm926, %v830, %v925
      %vm928 = vcmp.eq.f32.partialorder %v830, 0.0
      %v929 = vand.u32 %v830, 2147483648
      %v930 = vsel %vm928, %v929, %v927
      %v931 = vrsqrt.pop %v831
      %v932 = vmul.f32 %v831, %v931
      %vm933 = vcmp.eq.f32.partialorder %v831, inf
      %v934 = vsel %vm933, %v831, %v932
      %vm935 = vcmp.eq.f32.partialorder %v831, 0.0
      %v936 = vand.u32 %v831, 2147483648
      %v937 = vsel %vm935, %v936, %v934
      %v938 = vrsqrt.pop %v832
      %v939 = vmul.f32 %v832, %v938
      %vm940 = vcmp.eq.f32.partialorder %v832, inf
      %v941 = vsel %vm940, %v832, %v939
      %vm942 = vcmp.eq.f32.partialorder %v832, 0.0
      %v943 = vand.u32 %v832, 2147483648
      %v944 = vsel %vm942, %v943, %v941
      %v945 = vrsqrt.pop %v833
      %v946 = vmul.f32 %v833, %v945
      %vm947 = vcmp.eq.f32.partialorder %v833, inf
      %v948 = vsel %vm947, %v833, %v946
      %vm949 = vcmp.eq.f32.partialorder %v833, 0.0
      %v950 = vand.u32 %v833, 2147483648
      %v951 = vsel %vm949, %v950, %v948
      %v952 = vrsqrt.pop %v834
      %v953 = vmul.f32 %v834, %v952
      %vm954 = vcmp.eq.f32.partialorder %v834, inf
      %v955 = vsel %vm954, %v834, %v953
      %vm956 = vcmp.eq.f32.partialorder %v834, 0.0
      %v957 = vand.u32 %v834, 2147483648
      %v958 = vsel %vm956, %v957, %v955
      %v959 = vrsqrt.pop %v835
      %v960 = vmul.f32 %v835, %v959
      %vm961 = vcmp.eq.f32.partialorder %v835, inf
      %v962 = vsel %vm961, %v835, %v960
      %vm963 = vcmp.eq.f32.partialorder %v835, 0.0
      %v964 = vand.u32 %v835, 2147483648
      %v965 = vsel %vm963, %v964, %v962
      %v966 = vrsqrt.pop %v836
      %v967 = vmul.f32 %v836, %v966
      %vm968 = vcmp.eq.f32.partialorder %v836, inf
      %v969 = vsel %vm968, %v836, %v967
      %vm970 = vcmp.eq.f32.partialorder %v836, 0.0
      %v971 = vand.u32 %v836, 2147483648
      %v972 = vsel %vm970, %v971, %v969
      %v973 = vrsqrt.pop %v837
      %v974 = vmul.f32 %v837, %v973
      %vm975 = vcmp.eq.f32.partialorder %v837, inf
      %v976 = vsel %vm975, %v837, %v974
      %vm977 = vcmp.eq.f32.partialorder %v837, 0.0
      %v978 = vand.u32 %v837, 2147483648
      %v979 = vsel %vm977, %v978, %v976
      %v980 = vrsqrt.pop %v838
      %v981 = vmul.f32 %v838, %v980
      %vm982 = vcmp.eq.f32.partialorder %v838, inf
      %v983 = vsel %vm982, %v838, %v981
      %vm984 = vcmp.eq.f32.partialorder %v838, 0.0
      %v985 = vand.u32 %v838, 2147483648
      %v986 = vsel %vm984, %v985, %v983
      %v987 = vrsqrt.pop %v839
      %v988 = vmul.f32 %v839, %v987
      %vm989 = vcmp.eq.f32.partialorder %v839, inf
      %v990 = vsel %vm989, %v839, %v988
      %vm991 = vcmp.eq.f32.partialorder %v839, 0.0
      %v992 = vand.u32 %v839, 2147483648
      %v993 = vsel %vm991, %v992, %v990
      %v994 = vrsqrt.pop %v840
      %v995 = vmul.f32 %v840, %v994
      %vm996 = vcmp.eq.f32.partialorder %v840, inf
      %v997 = vsel %vm996, %v840, %v995
      %vm998 = vcmp.eq.f32.partialorder %v840, 0.0
      %v999 = vand.u32 %v840, 2147483648
      %v1000 = vsel %vm998, %v999, %v997
      %v1001 = vrsqrt.pop %v841
      %v1002 = vmul.f32 %v841, %v1001
      %vm1003 = vcmp.eq.f32.partialorder %v841, inf
      %v1004 = vsel %vm1003, %v841, %v1002
      %vm1005 = vcmp.eq.f32.partialorder %v841, 0.0
      %v1006 = vand.u32 %v841, 2147483648
      %v1007 = vsel %vm1005, %v1006, %v1004
      %v1008 = vrsqrt.pop %v842
      %v1009 = vmul.f32 %v842, %v1008
      %vm1010 = vcmp.eq.f32.partialorder %v842, inf
      %v1011 = vsel %vm1010, %v842, %v1009
      %vm1012 = vcmp.eq.f32.partialorder %v842, 0.0
      %v1013 = vand.u32 %v842, 2147483648
      %v1014 = vsel %vm1012, %v1013, %v1011
      %v1015 = vrsqrt.pop %v843
      %v1016 = vmul.f32 %v843, %v1015
      %vm1017 = vcmp.eq.f32.partialorder %v843, inf
      %v1018 = vsel %vm1017, %v843, %v1016
      %vm1019 = vcmp.eq.f32.partialorder %v843, 0.0
      %v1020 = vand.u32 %v843, 2147483648
      %v1021 = vsel %vm1019, %v1020, %v1018
      %v1022 = vrsqrt.pop %v844
      %v1023 = vmul.f32 %v844, %v1022
      %vm1024 = vcmp.eq.f32.partialorder %v844, inf
      %v1025 = vsel %vm1024, %v844, %v1023
      %vm1026 = vcmp.eq.f32.partialorder %v844, 0.0
      %v1027 = vand.u32 %v844, 2147483648
      %v1028 = vsel %vm1026, %v1027, %v1025
      %v1029 = vrsqrt.pop %v845
      %v1030 = vmul.f32 %v845, %v1029
      %vm1031 = vcmp.eq.f32.partialorder %v845, inf
      %v1032 = vsel %vm1031, %v845, %v1030
      %vm1033 = vcmp.eq.f32.partialorder %v845, 0.0
      %v1034 = vand.u32 %v845, 2147483648
      %v1035 = vsel %vm1033, %v1034, %v1032
      %v1036 = vrsqrt.pop %v846
      %v1037 = vmul.f32 %v846, %v1036
      %vm1038 = vcmp.eq.f32.partialorder %v846, inf
      %v1039 = vsel %vm1038, %v846, %v1037
      %vm1040 = vcmp.eq.f32.partialorder %v846, 0.0
      %v1041 = vand.u32 %v846, 2147483648
      %v1042 = vsel %vm1040, %v1041, %v1039
      %v1043 = vrsqrt.pop %v847
      %v1044 = vmul.f32 %v847, %v1043
      %vm1045 = vcmp.eq.f32.partialorder %v847, inf
      %v1046 = vsel %vm1045, %v847, %v1044
      %vm1047 = vcmp.eq.f32.partialorder %v847, 0.0
      %v1048 = vand.u32 %v847, 2147483648
      %v1049 = vsel %vm1047, %v1048, %v1046
      %v1050 = vrsqrt.pop %v848
      %v1051 = vmul.f32 %v848, %v1050
      %vm1052 = vcmp.eq.f32.partialorder %v848, inf
      %v1053 = vsel %vm1052, %v848, %v1051
      %vm1054 = vcmp.eq.f32.partialorder %v848, 0.0
      %v1055 = vand.u32 %v848, 2147483648
      %v1056 = vsel %vm1054, %v1055, %v1053
      %v1057 = vrsqrt.pop %v849
      %v1058 = vmul.f32 %v849, %v1057
      %vm1059 = vcmp.eq.f32.partialorder %v849, inf
      %v1060 = vsel %vm1059, %v849, %v1058
      %vm1061 = vcmp.eq.f32.partialorder %v849, 0.0
      %v1062 = vand.u32 %v849, 2147483648
      %v1063 = vsel %vm1061, %v1062, %v1060
      %v1064 = vrsqrt.pop %v850
      %v1065 = vmul.f32 %v850, %v1064
      %vm1066 = vcmp.eq.f32.partialorder %v850, inf
      %v1067 = vsel %vm1066, %v850, %v1065
      %vm1068 = vcmp.eq.f32.partialorder %v850, 0.0
      %v1069 = vand.u32 %v850, 2147483648
      %v1070 = vsel %vm1068, %v1069, %v1067
      %v1071 = vrsqrt.pop %v851
      %v1072 = vmul.f32 %v851, %v1071
      %vm1073 = vcmp.eq.f32.partialorder %v851, inf
      %v1074 = vsel %vm1073, %v851, %v1072
      %vm1075 = vcmp.eq.f32.partialorder %v851, 0.0
      %v1076 = vand.u32 %v851, 2147483648
      %v1077 = vsel %vm1075, %v1076, %v1074
      %v1078 = vrsqrt.pop %v852
      %v1079 = vmul.f32 %v852, %v1078
      %vm1080 = vcmp.eq.f32.partialorder %v852, inf
      %v1081 = vsel %vm1080, %v852, %v1079
      %vm1082 = vcmp.eq.f32.partialorder %v852, 0.0
      %v1083 = vand.u32 %v852, 2147483648
      %v1084 = vsel %vm1082, %v1083, %v1081
      %v1085 = vrsqrt.pop %v853
      %v1086 = vmul.f32 %v853, %v1085
      %vm1087 = vcmp.eq.f32.partialorder %v853, inf
      %v1088 = vsel %vm1087, %v853, %v1086
      %vm1089 = vcmp.eq.f32.partialorder %v853, 0.0
      %v1090 = vand.u32 %v853, 2147483648
      %v1091 = vsel %vm1089, %v1090, %v1088
      %v1092 = vrsqrt.pop %v854
      %v1093 = vmul.f32 %v854, %v1092
      %vm1094 = vcmp.eq.f32.partialorder %v854, inf
      %v1095 = vsel %vm1094, %v854, %v1093
      %vm1096 = vcmp.eq.f32.partialorder %v854, 0.0
      %v1097 = vand.u32 %v854, 2147483648
      %v1098 = vsel %vm1096, %v1097, %v1095
      %v1099 = vrsqrt.pop %v855
      %v1100 = vmul.f32 %v855, %v1099
      %vm1101 = vcmp.eq.f32.partialorder %v855, inf
      %v1102 = vsel %vm1101, %v855, %v1100
      %vm1103 = vcmp.eq.f32.partialorder %v855, 0.0
      %v1104 = vand.u32 %v855, 2147483648
      %v1105 = vsel %vm1103, %v1104, %v1102
      %v1106 = vrsqrt.pop %v856
      %v1107 = vmul.f32 %v856, %v1106
      %vm1108 = vcmp.eq.f32.partialorder %v856, inf
      %v1109 = vsel %vm1108, %v856, %v1107
      %vm1110 = vcmp.eq.f32.partialorder %v856, 0.0
      %v1111 = vand.u32 %v856, 2147483648
      %v1112 = vsel %vm1110, %v1111, %v1109
      %v1113 = vrsqrt.pop %v857
      %v1114 = vmul.f32 %v857, %v1113
      %vm1115 = vcmp.eq.f32.partialorder %v857, inf
      %v1116 = vsel %vm1115, %v857, %v1114
      %vm1117 = vcmp.eq.f32.partialorder %v857, 0.0
      %v1118 = vand.u32 %v857, 2147483648
      %v1119 = vsel %vm1117, %v1118, %v1116
      %v1120 = vrsqrt.pop %v858
      %v1121 = vmul.f32 %v858, %v1120
      %vm1122 = vcmp.eq.f32.partialorder %v858, inf
      %v1123 = vsel %vm1122, %v858, %v1121
      %vm1124 = vcmp.eq.f32.partialorder %v858, 0.0
      %v1125 = vand.u32 %v858, 2147483648
      %v1126 = vsel %vm1124, %v1125, %v1123
      %v1127 = vrsqrt.pop %v859
      %v1128 = vmul.f32 %v859, %v1127
      %vm1129 = vcmp.eq.f32.partialorder %v859, inf
      %v1130 = vsel %vm1129, %v859, %v1128
      %vm1131 = vcmp.eq.f32.partialorder %v859, 0.0
      %v1132 = vand.u32 %v859, 2147483648
      %v1133 = vsel %vm1131, %v1132, %v1130
      %v1134 = vrsqrt.pop %v860
      %v1135 = vmul.f32 %v860, %v1134
      %vm1136 = vcmp.eq.f32.partialorder %v860, inf
      %v1137 = vsel %vm1136, %v860, %v1135
      %vm1138 = vcmp.eq.f32.partialorder %v860, 0.0
      %v1139 = vand.u32 %v860, 2147483648
      %v1140 = vsel %vm1138, %v1139, %v1137
      %v1141 = vrsqrt.pop %v861
      %v1142 = vmul.f32 %v861, %v1141
      %vm1143 = vcmp.eq.f32.partialorder %v861, inf
      %v1144 = vsel %vm1143, %v861, %v1142
      %vm1145 = vcmp.eq.f32.partialorder %v861, 0.0
      %v1146 = vand.u32 %v861, 2147483648
      %v1147 = vsel %vm1145, %v1146, %v1144
      %v1148 = vrsqrt.pop %v862
      %v1149 = vmul.f32 %v862, %v1148
      %vm1150 = vcmp.eq.f32.partialorder %v862, inf
      %v1151 = vsel %vm1150, %v862, %v1149
      %vm1152 = vcmp.eq.f32.partialorder %v862, 0.0
      %v1153 = vand.u32 %v862, 2147483648
      %v1154 = vsel %vm1152, %v1153, %v1151
      %v1155 = vrsqrt.pop %v863
      %v1156 = vmul.f32 %v863, %v1155
      %vm1157 = vcmp.eq.f32.partialorder %v863, inf
      %v1158 = vsel %vm1157, %v863, %v1156
      %vm1159 = vcmp.eq.f32.partialorder %v863, 0.0
      %v1160 = vand.u32 %v863, 2147483648
      %v1161 = vsel %vm1159, %v1160, %v1158
      %v1162 = vrsqrt.pop %v864
      %v1163 = vmul.f32 %v864, %v1162
      %vm1164 = vcmp.eq.f32.partialorder %v864, inf
      %v1165 = vsel %vm1164, %v864, %v1163
      %vm1166 = vcmp.eq.f32.partialorder %v864, 0.0
      %v1167 = vand.u32 %v864, 2147483648
      %v1168 = vsel %vm1166, %v1167, %v1165
      %v1169 = vrsqrt.pop %v865
      %v1170 = vmul.f32 %v865, %v1169
      %vm1171 = vcmp.eq.f32.partialorder %v865, inf
      %v1172 = vsel %vm1171, %v865, %v1170
      %vm1173 = vcmp.eq.f32.partialorder %v865, 0.0
      %v1174 = vand.u32 %v865, 2147483648
      %v1175 = vsel %vm1173, %v1174, %v1172
      %v1176 = vrsqrt.pop %v866
      %v1177 = vmul.f32 %v866, %v1176
      %vm1178 = vcmp.eq.f32.partialorder %v866, inf
      %v1179 = vsel %vm1178, %v866, %v1177
      %vm1180 = vcmp.eq.f32.partialorder %v866, 0.0
      %v1181 = vand.u32 %v866, 2147483648
      %v1182 = vsel %vm1180, %v1181, %v1179
      %v1183 = vrsqrt.pop %v867
      %v1184 = vmul.f32 %v867, %v1183
      %vm1185 = vcmp.eq.f32.partialorder %v867, inf
      %v1186 = vsel %vm1185, %v867, %v1184
      %vm1187 = vcmp.eq.f32.partialorder %v867, 0.0
      %v1188 = vand.u32 %v867, 2147483648
      %v1189 = vsel %vm1187, %v1188, %v1186
      %v1190 = vrsqrt.pop %v868
      %v1191 = vmul.f32 %v868, %v1190
      %vm1192 = vcmp.eq.f32.partialorder %v868, inf
      %v1193 = vsel %vm1192, %v868, %v1191
      %vm1194 = vcmp.eq.f32.partialorder %v868, 0.0
      %v1195 = vand.u32 %v868, 2147483648
      %v1196 = vsel %vm1194, %v1195, %v1193
      %v1197 = vrsqrt.pop %v869
      %v1198 = vmul.f32 %v869, %v1197
      %vm1199 = vcmp.eq.f32.partialorder %v869, inf
      %v1200 = vsel %vm1199, %v869, %v1198
      %vm1201 = vcmp.eq.f32.partialorder %v869, 0.0
      %v1202 = vand.u32 %v869, 2147483648
      %v1203 = vsel %vm1201, %v1202, %v1200
      %v1204 = vrsqrt.pop %v870
      %v1205 = vmul.f32 %v870, %v1204
      %vm1206 = vcmp.eq.f32.partialorder %v870, inf
      %v1207 = vsel %vm1206, %v870, %v1205
      %vm1208 = vcmp.eq.f32.partialorder %v870, 0.0
      %v1209 = vand.u32 %v870, 2147483648
      %v1210 = vsel %vm1208, %v1209, %v1207
      %v1211 = vrsqrt.pop %v871
      %v1212 = vmul.f32 %v871, %v1211
      %vm1213 = vcmp.eq.f32.partialorder %v871, inf
      %v1214 = vsel %vm1213, %v871, %v1212
      %vm1215 = vcmp.eq.f32.partialorder %v871, 0.0
      %v1216 = vand.u32 %v871, 2147483648
      %v1217 = vsel %vm1215, %v1216, %v1214
      %v1218 = vrsqrt.pop %v872
      %v1219 = vmul.f32 %v872, %v1218
      %vm1220 = vcmp.eq.f32.partialorder %v872, inf
      %v1221 = vsel %vm1220, %v872, %v1219
      %vm1222 = vcmp.eq.f32.partialorder %v872, 0.0
      %v1223 = vand.u32 %v872, 2147483648
      %v1224 = vsel %vm1222, %v1223, %v1221
      %v1225 = vrsqrt.pop %v873
      %v1226 = vmul.f32 %v873, %v1225
      %vm1227 = vcmp.eq.f32.partialorder %v873, inf
      %v1228 = vsel %vm1227, %v873, %v1226
      %vm1229 = vcmp.eq.f32.partialorder %v873, 0.0
      %v1230 = vand.u32 %v873, 2147483648
      %v1231 = vsel %vm1229, %v1230, %v1228
      %v1232 = vrsqrt.pop %v874
      %v1233 = vmul.f32 %v874, %v1232
      %vm1234 = vcmp.eq.f32.partialorder %v874, inf
      %v1235 = vsel %vm1234, %v874, %v1233
      %vm1236 = vcmp.eq.f32.partialorder %v874, 0.0
      %v1237 = vand.u32 %v874, 2147483648
      %v1238 = vsel %vm1236, %v1237, %v1235
      %v1239 = vrsqrt.pop %v875
      %v1240 = vmul.f32 %v875, %v1239
      %vm1241 = vcmp.eq.f32.partialorder %v875, inf
      %v1242 = vsel %vm1241, %v875, %v1240
      %vm1243 = vcmp.eq.f32.partialorder %v875, 0.0
      %v1244 = vand.u32 %v875, 2147483648
      %v1245 = vsel %vm1243, %v1244, %v1242
      %v1246 = vrsqrt.pop %v876
      %v1247 = vmul.f32 %v876, %v1246
      %vm1248 = vcmp.eq.f32.partialorder %v876, inf
      %v1249 = vsel %vm1248, %v876, %v1247
      %vm1250 = vcmp.eq.f32.partialorder %v876, 0.0
      %v1251 = vand.u32 %v876, 2147483648
      %v1252 = vsel %vm1250, %v1251, %v1249
      %v1253 = vrsqrt.pop %v877
      %v1254 = vmul.f32 %v877, %v1253
      %vm1255 = vcmp.eq.f32.partialorder %v877, inf
      %v1256 = vsel %vm1255, %v877, %v1254
      %vm1257 = vcmp.eq.f32.partialorder %v877, 0.0
      %v1258 = vand.u32 %v877, 2147483648
      %v1259 = vsel %vm1257, %v1258, %v1256
      %v1260 = vrsqrt.pop %v878
      %v1261 = vmul.f32 %v878, %v1260
      %vm1262 = vcmp.eq.f32.partialorder %v878, inf
      %v1263 = vsel %vm1262, %v878, %v1261
      %vm1264 = vcmp.eq.f32.partialorder %v878, 0.0
      %v1265 = vand.u32 %v878, 2147483648
      %v1266 = vsel %vm1264, %v1265, %v1263
      %v1267 = vrsqrt.pop %v879
      %v1268 = vmul.f32 %v879, %v1267
      %vm1269 = vcmp.eq.f32.partialorder %v879, inf
      %v1270 = vsel %vm1269, %v879, %v1268
      %vm1271 = vcmp.eq.f32.partialorder %v879, 0.0
      %v1272 = vand.u32 %v879, 2147483648
      %v1273 = vsel %vm1271, %v1272, %v1270
      %v1274 = vrsqrt.pop %v880
      %v1275 = vmul.f32 %v880, %v1274
      %vm1276 = vcmp.eq.f32.partialorder %v880, inf
      %v1277 = vsel %vm1276, %v880, %v1275
      %vm1278 = vcmp.eq.f32.partialorder %v880, 0.0
      %v1279 = vand.u32 %v880, 2147483648
      %v1280 = vsel %vm1278, %v1279, %v1277
      %v1281 = vrsqrt.pop %v881
      %v1282 = vmul.f32 %v881, %v1281
      %vm1283 = vcmp.eq.f32.partialorder %v881, inf
      %v1284 = vsel %vm1283, %v881, %v1282
      %vm1285 = vcmp.eq.f32.partialorder %v881, 0.0
      %v1286 = vand.u32 %v881, 2147483648
      %v1287 = vsel %vm1285, %v1286, %v1284
      %v1288 = vrsqrt.pop %v882
      %v1289 = vmul.f32 %v882, %v1288
      %vm1290 = vcmp.eq.f32.partialorder %v882, inf
      %v1291 = vsel %vm1290, %v882, %v1289
      %vm1292 = vcmp.eq.f32.partialorder %v882, 0.0
      %v1293 = vand.u32 %v882, 2147483648
      %v1294 = vsel %vm1292, %v1293, %v1291
      %v1295 = vrsqrt.pop %v883
      %v1296 = vmul.f32 %v883, %v1295
      %vm1297 = vcmp.eq.f32.partialorder %v883, inf
      %v1298 = vsel %vm1297, %v883, %v1296
      %vm1299 = vcmp.eq.f32.partialorder %v883, 0.0
      %v1300 = vand.u32 %v883, 2147483648
      %v1301 = vsel %vm1299, %v1300, %v1298
      %v1302 = vrsqrt.pop %v884
      %v1303 = vmul.f32 %v884, %v1302
      %vm1304 = vcmp.eq.f32.partialorder %v884, inf
      %v1305 = vsel %vm1304, %v884, %v1303
      %vm1306 = vcmp.eq.f32.partialorder %v884, 0.0
      %v1307 = vand.u32 %v884, 2147483648
      %v1308 = vsel %vm1306, %v1307, %v1305
      %v1309 = vrsqrt.pop %v885
      %v1310 = vmul.f32 %v885, %v1309
      %vm1311 = vcmp.eq.f32.partialorder %v885, inf
      %v1312 = vsel %vm1311, %v885, %v1310
      %vm1313 = vcmp.eq.f32.partialorder %v885, 0.0
      %v1314 = vand.u32 %v885, 2147483648
      %v1315 = vsel %vm1313, %v1314, %v1312
      %v1316 = vrsqrt.pop %v886
      %v1317 = vmul.f32 %v886, %v1316
      %vm1318 = vcmp.eq.f32.partialorder %v886, inf
      %v1319 = vsel %vm1318, %v886, %v1317
      %vm1320 = vcmp.eq.f32.partialorder %v886, 0.0
      %v1321 = vand.u32 %v886, 2147483648
      %v1322 = vsel %vm1320, %v1321, %v1319
      %v1323 = vrsqrt.pop %v887
      %v1324 = vmul.f32 %v887, %v1323
      %vm1325 = vcmp.eq.f32.partialorder %v887, inf
      %v1326 = vsel %vm1325, %v887, %v1324
      %vm1327 = vcmp.eq.f32.partialorder %v887, 0.0
      %v1328 = vand.u32 %v887, 2147483648
      %v1329 = vsel %vm1327, %v1328, %v1326
      %v1330 = vrsqrt.pop %v888
      %v1331 = vmul.f32 %v888, %v1330
      %vm1332 = vcmp.eq.f32.partialorder %v888, inf
      %v1333 = vsel %vm1332, %v888, %v1331
      %vm1334 = vcmp.eq.f32.partialorder %v888, 0.0
      %v1335 = vand.u32 %v888, 2147483648
      %v1336 = vsel %vm1334, %v1335, %v1333
      %v1337 = vld [vmem:[%s264] sm:$0xff]
      %v1338 = vld [vmem:[%s264 + $0x8] sm:$0xff]
      %v1339 = vld [vmem:[%s264 + $0x10] sm:$0xff]
      %v1340 = vld [vmem:[%s264 + $0x18] sm:$0xff]
      %v1341 = vld [vmem:[%s264 + $0x20] sm:$0xff]
      %v1342 = vld [vmem:[%s264 + $0x28] sm:$0xff]
      %v1343 = vld [vmem:[%s264 + $0x30] sm:$0xff]
      %v1344 = vld [vmem:[%s264 + $0x38] sm:$0xff]
      %v1345 = vld [vmem:[%s264 + $0x40] sm:$0xff]
      %v1346 = vld [vmem:[%s264 + $0x48] sm:$0xff]
      %v1347 = vld [vmem:[%s264 + $0x50] sm:$0xff]
      %v1348 = vld [vmem:[%s264 + $0x58] sm:$0xff]
      %v1349 = vld [vmem:[%s264 + $0x60] sm:$0xff]
      %v1350 = vld [vmem:[%s264 + $0x68] sm:$0xff]
      %v1351 = vld [vmem:[%s264 + $0x70] sm:$0xff]
      %v1352 = vld [vmem:[%s264 + $0x78] sm:$0xff]
      %v1353 = vld [vmem:[%s264 + $0x80] sm:$0xff]
      %v1354 = vld [vmem:[%s264 + $0x88] sm:$0xff]
      %v1355 = vld [vmem:[%s264 + $0x90] sm:$0xff]
      %v1356 = vld [vmem:[%s264 + $0x98] sm:$0xff]
      %v1357 = vld [vmem:[%s264 + $0xa0] sm:$0xff]
      %v1358 = vld [vmem:[%s264 + $0xa8] sm:$0xff]
      %v1359 = vld [vmem:[%s264 + $0xb0] sm:$0xff]
      %v1360 = vld [vmem:[%s264 + $0xb8] sm:$0xff]
      %v1361 = vld [vmem:[%s264 + $0xc0] sm:$0xff]
      %v1362 = vld [vmem:[%s264 + $0xc8] sm:$0xff]
      %v1363 = vld [vmem:[%s264 + $0xd0] sm:$0xff]
      %v1364 = vld [vmem:[%s264 + $0xd8] sm:$0xff]
      %v1365 = vld [vmem:[%s264 + $0xe0] sm:$0xff]
      %v1366 = vld [vmem:[%s264 + $0xe8] sm:$0xff]
      %v1367 = vld [vmem:[%s264 + $0xf0] sm:$0xff]
      %v1368 = vld [vmem:[%s264 + $0xf8] sm:$0xff]
      %v1369 = vunpack.c.l.bf16 %v1337
      %v1370 = vunpack.c.h.bf16 %v1337
      %v1371 = vunpack.c.l.bf16 %v1338
      %v1372 = vunpack.c.h.bf16 %v1338
      %v1373 = vunpack.c.l.bf16 %v1339
      %v1374 = vunpack.c.h.bf16 %v1339
      %v1375 = vunpack.c.l.bf16 %v1340
      %v1376 = vunpack.c.h.bf16 %v1340
      %v1377 = vunpack.c.l.bf16 %v1341
      %v1378 = vunpack.c.h.bf16 %v1341
      %v1379 = vunpack.c.l.bf16 %v1342
      %v1380 = vunpack.c.h.bf16 %v1342
      %v1381 = vunpack.c.l.bf16 %v1343
      %v1382 = vunpack.c.h.bf16 %v1343
      %v1383 = vunpack.c.l.bf16 %v1344
      %v1384 = vunpack.c.h.bf16 %v1344
      %v1385 = vunpack.c.l.bf16 %v1345
      %v1386 = vunpack.c.h.bf16 %v1345
      %v1387 = vunpack.c.l.bf16 %v1346
      %v1388 = vunpack.c.h.bf16 %v1346
      %v1389 = vunpack.c.l.bf16 %v1347
      %v1390 = vunpack.c.h.bf16 %v1347
      %v1391 = vunpack.c.l.bf16 %v1348
      %v1392 = vunpack.c.h.bf16 %v1348
      %v1393 = vunpack.c.l.bf16 %v1349
      %v1394 = vunpack.c.h.bf16 %v1349
      %v1395 = vunpack.c.l.bf16 %v1350
      %v1396 = vunpack.c.h.bf16 %v1350
      %v1397 = vunpack.c.l.bf16 %v1351
      %v1398 = vunpack.c.h.bf16 %v1351
      %v1399 = vunpack.c.l.bf16 %v1352
      %v1400 = vunpack.c.h.bf16 %v1352
      %v1401 = vunpack.c.l.bf16 %v1353
      %v1402 = vunpack.c.h.bf16 %v1353
      %v1403 = vunpack.c.l.bf16 %v1354
      %v1404 = vunpack.c.h.bf16 %v1354
      %v1405 = vunpack.c.l.bf16 %v1355
      %v1406 = vunpack.c.h.bf16 %v1355
      %v1407 = vunpack.c.l.bf16 %v1356
      %v1408 = vunpack.c.h.bf16 %v1356
      %v1409 = vunpack.c.l.bf16 %v1357
      %v1410 = vunpack.c.h.bf16 %v1357
      %v1411 = vunpack.c.l.bf16 %v1358
      %v1412 = vunpack.c.h.bf16 %v1358
      %v1413 = vunpack.c.l.bf16 %v1359
      %v1414 = vunpack.c.h.bf16 %v1359
      %v1415 = vunpack.c.l.bf16 %v1360
      %v1416 = vunpack.c.h.bf16 %v1360
      %v1417 = vunpack.c.l.bf16 %v1361
      %v1418 = vunpack.c.h.bf16 %v1361
      %v1419 = vunpack.c.l.bf16 %v1362
      %v1420 = vunpack.c.h.bf16 %v1362
      %v1421 = vunpack.c.l.bf16 %v1363
      %v1422 = vunpack.c.h.bf16 %v1363
      %v1423 = vunpack.c.l.bf16 %v1364
      %v1424 = vunpack.c.h.bf16 %v1364
      %v1425 = vunpack.c.l.bf16 %v1365
      %v1426 = vunpack.c.h.bf16 %v1365
      %v1427 = vunpack.c.l.bf16 %v1366
      %v1428 = vunpack.c.h.bf16 %v1366
      %v1429 = vunpack.c.l.bf16 %v1367
      %v1430 = vunpack.c.h.bf16 %v1367
      %v1431 = vunpack.c.l.bf16 %v1368
      %v1432 = vunpack.c.h.bf16 %v1368
      %v1433 = vsub.f32 %v895, 0.1
      %v1434 = vsub.f32 %v902, 0.1
      %v1435 = vsub.f32 %v909, 0.1
      %v1436 = vsub.f32 %v916, 0.1
      %v1437 = vsub.f32 %v923, 0.1
      %v1438 = vsub.f32 %v930, 0.1
      %v1439 = vsub.f32 %v937, 0.1
      %v1440 = vsub.f32 %v944, 0.1
      %v1441 = vsub.f32 %v951, 0.1
      %v1442 = vsub.f32 %v958, 0.1
      %v1443 = vsub.f32 %v965, 0.1
      %v1444 = vsub.f32 %v972, 0.1
      %v1445 = vsub.f32 %v979, 0.1
      %v1446 = vsub.f32 %v986, 0.1
      %v1447 = vsub.f32 %v993, 0.1
      %v1448 = vsub.f32 %v1000, 0.1
      %v1449 = vsub.f32 %v1007, 0.1
      %v1450 = vsub.f32 %v1014, 0.1
      %v1451 = vsub.f32 %v1021, 0.1
      %v1452 = vsub.f32 %v1028, 0.1
      %v1453 = vsub.f32 %v1035, 0.1
      %v1454 = vsub.f32 %v1042, 0.1
      %v1455 = vsub.f32 %v1049, 0.1
      %v1456 = vsub.f32 %v1056, 0.1
      %v1457 = vsub.f32 %v1063, 0.1
      %v1458 = vsub.f32 %v1070, 0.1
      %v1459 = vsub.f32 %v1077, 0.1
      %v1460 = vsub.f32 %v1084, 0.1
      %v1461 = vsub.f32 %v1091, 0.1
      %v1462 = vsub.f32 %v1098, 0.1
      %v1463 = vsub.f32 %v1105, 0.1
      %v1464 = vsub.f32 %v1112, 0.1
      %v1465 = vsub.f32 %v1119, 0.1
      %v1466 = vsub.f32 %v1126, 0.1
      %v1467 = vsub.f32 %v1133, 0.1
      %v1468 = vsub.f32 %v1140, 0.1
      %v1469 = vsub.f32 %v1147, 0.1
      %v1470 = vsub.f32 %v1154, 0.1
      %v1471 = vsub.f32 %v1161, 0.1
      %v1472 = vsub.f32 %v1168, 0.1
      %v1473 = vsub.f32 %v1175, 0.1
      %v1474 = vsub.f32 %v1182, 0.1
      %v1475 = vsub.f32 %v1189, 0.1
      %v1476 = vsub.f32 %v1196, 0.1
      %v1477 = vsub.f32 %v1203, 0.1
      %v1478 = vsub.f32 %v1210, 0.1
      %v1479 = vsub.f32 %v1217, 0.1
      %v1480 = vsub.f32 %v1224, 0.1
      %v1481 = vsub.f32 %v1231, 0.1
      %v1482 = vsub.f32 %v1238, 0.1
      %v1483 = vsub.f32 %v1245, 0.1
      %v1484 = vsub.f32 %v1252, 0.1
      %v1485 = vsub.f32 %v1259, 0.1
      %v1486 = vsub.f32 %v1266, 0.1
      %v1487 = vsub.f32 %v1273, 0.1
      %v1488 = vsub.f32 %v1280, 0.1
      %v1489 = vsub.f32 %v1287, 0.1
      %v1490 = vsub.f32 %v1294, 0.1
      %v1491 = vsub.f32 %v1301, 0.1
      %v1492 = vsub.f32 %v1308, 0.1
      %v1493 = vsub.f32 %v1315, 0.1
      %v1494 = vsub.f32 %v1322, 0.1
      %v1495 = vsub.f32 %v1329, 0.1
      %v1496 = vsub.f32 %v1336, 0.1
      %v1497 = vmax.f32 %v1433, 0.0
      %v1498 = vmax.f32 %v1434, 0.0
      %v1499 = vmax.f32 %v1435, 0.0
      %v1500 = vmax.f32 %v1436, 0.0
      %v1501 = vmax.f32 %v1437, 0.0
      %v1502 = vmax.f32 %v1438, 0.0
      %v1503 = vmax.f32 %v1439, 0.0
      %v1504 = vmax.f32 %v1440, 0.0
      %v1505 = vmax.f32 %v1441, 0.0
      %v1506 = vmax.f32 %v1442, 0.0
      %v1507 = vmax.f32 %v1443, 0.0
      %v1508 = vmax.f32 %v1444, 0.0
      %v1509 = vmax.f32 %v1445, 0.0
      %v1510 = vmax.f32 %v1446, 0.0
      %v1511 = vmax.f32 %v1447, 0.0
      %v1512 = vmax.f32 %v1448, 0.0
      %v1513 = vmax.f32 %v1449, 0.0
      %v1514 = vmax.f32 %v1450, 0.0
      %v1515 = vmax.f32 %v1451, 0.0
      %v1516 = vmax.f32 %v1452, 0.0
      %v1517 = vmax.f32 %v1453, 0.0
      %v1518 = vmax.f32 %v1454, 0.0
      %v1519 = vmax.f32 %v1455, 0.0
      %v1520 = vmax.f32 %v1456, 0.0
      %v1521 = vmax.f32 %v1457, 0.0
      %v1522 = vmax.f32 %v1458, 0.0
      %v1523 = vmax.f32 %v1459, 0.0
      %v1524 = vmax.f32 %v1460, 0.0
      %v1525 = vmax.f32 %v1461, 0.0
      %v1526 = vmax.f32 %v1462, 0.0
      %v1527 = vmax.f32 %v1463, 0.0
      %v1528 = vmax.f32 %v1464, 0.0
      %v1529 = vmax.f32 %v1465, 0.0
      %v1530 = vmax.f32 %v1466, 0.0
      %v1531 = vmax.f32 %v1467, 0.0
      %v1532 = vmax.f32 %v1468, 0.0
      %v1533 = vmax.f32 %v1469, 0.0
      %v1534 = vmax.f32 %v1470, 0.0
      %v1535 = vmax.f32 %v1471, 0.0
      %v1536 = vmax.f32 %v1472, 0.0
      %v1537 = vmax.f32 %v1473, 0.0
      %v1538 = vmax.f32 %v1474, 0.0
      %v1539 = vmax.f32 %v1475, 0.0
      %v1540 = vmax.f32 %v1476, 0.0
      %v1541 = vmax.f32 %v1477, 0.0
      %v1542 = vmax.f32 %v1478, 0.0
      %v1543 = vmax.f32 %v1479, 0.0
      %v1544 = vmax.f32 %v1480, 0.0
      %v1545 = vmax.f32 %v1481, 0.0
      %v1546 = vmax.f32 %v1482, 0.0
      %v1547 = vmax.f32 %v1483, 0.0
      %v1548 = vmax.f32 %v1484, 0.0
      %v1549 = vmax.f32 %v1485, 0.0
      %v1550 = vmax.f32 %v1486, 0.0
      %v1551 = vmax.f32 %v1487, 0.0
      %v1552 = vmax.f32 %v1488, 0.0
      %v1553 = vmax.f32 %v1489, 0.0
      %v1554 = vmax.f32 %v1490, 0.0
      %v1555 = vmax.f32 %v1491, 0.0
      %v1556 = vmax.f32 %v1492, 0.0
      %v1557 = vmax.f32 %v1493, 0.0
      %v1558 = vmax.f32 %v1494, 0.0
      %v1559 = vmax.f32 %v1495, 0.0
      %v1560 = vmax.f32 %v1496, 0.0
      %v1561 = vmax.f32 %v1369, 0.0
      %v1562 = vmax.f32 %v1370, 0.0
      %v1563 = vmax.f32 %v1371, 0.0
      %v1564 = vmax.f32 %v1372, 0.0
      %v1565 = vmax.f32 %v1373, 0.0
      %v1566 = vmax.f32 %v1374, 0.0
      %v1567 = vmax.f32 %v1375, 0.0
      %v1568 = vmax.f32 %v1376, 0.0
      %v1569 = vmax.f32 %v1377, 0.0
      %v1570 = vmax.f32 %v1378, 0.0
      %v1571 = vmax.f32 %v1379, 0.0
      %v1572 = vmax.f32 %v1380, 0.0
      %v1573 = vmax.f32 %v1381, 0.0
      %v1574 = vmax.f32 %v1382, 0.0
      %v1575 = vmax.f32 %v1383, 0.0
      %v1576 = vmax.f32 %v1384, 0.0
      %v1577 = vmax.f32 %v1385, 0.0
      %v1578 = vmax.f32 %v1386, 0.0
      %v1579 = vmax.f32 %v1387, 0.0
      %v1580 = vmax.f32 %v1388, 0.0
      %v1581 = vmax.f32 %v1389, 0.0
      %v1582 = vmax.f32 %v1390, 0.0
      %v1583 = vmax.f32 %v1391, 0.0
      %v1584 = vmax.f32 %v1392, 0.0
      %v1585 = vmax.f32 %v1393, 0.0
      %v1586 = vmax.f32 %v1394, 0.0
      %v1587 = vmax.f32 %v1395, 0.0
      %v1588 = vmax.f32 %v1396, 0.0
      %v1589 = vmax.f32 %v1397, 0.0
      %v1590 = vmax.f32 %v1398, 0.0
      %v1591 = vmax.f32 %v1399, 0.0
      %v1592 = vmax.f32 %v1400, 0.0
      %v1593 = vmax.f32 %v1401, 0.0
      %v1594 = vmax.f32 %v1402, 0.0
      %v1595 = vmax.f32 %v1403, 0.0
      %v1596 = vmax.f32 %v1404, 0.0
      %v1597 = vmax.f32 %v1405, 0.0
      %v1598 = vmax.f32 %v1406, 0.0
      %v1599 = vmax.f32 %v1407, 0.0
      %v1600 = vmax.f32 %v1408, 0.0
      %v1601 = vmax.f32 %v1409, 0.0
      %v1602 = vmax.f32 %v1410, 0.0
      %v1603 = vmax.f32 %v1411, 0.0
      %v1604 = vmax.f32 %v1412, 0.0
      %v1605 = vmax.f32 %v1413, 0.0
      %v1606 = vmax.f32 %v1414, 0.0
      %v1607 = vmax.f32 %v1415, 0.0
      %v1608 = vmax.f32 %v1416, 0.0
      %v1609 = vmax.f32 %v1417, 0.0
      %v1610 = vmax.f32 %v1418, 0.0
      %v1611 = vmax.f32 %v1419, 0.0
      %v1612 = vmax.f32 %v1420, 0.0
      %v1613 = vmax.f32 %v1421, 0.0
      %v1614 = vmax.f32 %v1422, 0.0
      %v1615 = vmax.f32 %v1423, 0.0
      %v1616 = vmax.f32 %v1424, 0.0
      %v1617 = vmax.f32 %v1425, 0.0
      %v1618 = vmax.f32 %v1426, 0.0
      %v1619 = vmax.f32 %v1427, 0.0
      %v1620 = vmax.f32 %v1428, 0.0
      %v1621 = vmax.f32 %v1429, 0.0
      %v1622 = vmax.f32 %v1430, 0.0
      %v1623 = vmax.f32 %v1431, 0.0
      %v1624 = vmax.f32 %v1432, 0.0
      %v1625 = vmul.f32 %v1497, %v1561
      %v1626 = vmul.f32 %v1498, %v1562
      %v1627 = vmul.f32 %v1499, %v1563
      %v1628 = vmul.f32 %v1500, %v1564
      %v1629 = vmul.f32 %v1501, %v1565
      %v1630 = vmul.f32 %v1502, %v1566
      %v1631 = vmul.f32 %v1503, %v1567
      %v1632 = vmul.f32 %v1504, %v1568
      %v1633 = vmul.f32 %v1505, %v1569
      %v1634 = vmul.f32 %v1506, %v1570
      %v1635 = vmul.f32 %v1507, %v1571
      %v1636 = vmul.f32 %v1508, %v1572
      %v1637 = vmul.f32 %v1509, %v1573
      %v1638 = vmul.f32 %v1510, %v1574
      %v1639 = vmul.f32 %v1511, %v1575
      %v1640 = vmul.f32 %v1512, %v1576
      %v1641 = vmul.f32 %v1513, %v1577
      %v1642 = vmul.f32 %v1514, %v1578
      %v1643 = vmul.f32 %v1515, %v1579
      %v1644 = vmul.f32 %v1516, %v1580
      %v1645 = vmul.f32 %v1517, %v1581
      %v1646 = vmul.f32 %v1518, %v1582
      %v1647 = vmul.f32 %v1519, %v1583
      %v1648 = vmul.f32 %v1520, %v1584
      %v1649 = vmul.f32 %v1521, %v1585
      %v1650 = vmul.f32 %v1522, %v1586
      %v1651 = vmul.f32 %v1523, %v1587
      %v1652 = vmul.f32 %v1524, %v1588
      %v1653 = vmul.f32 %v1525, %v1589
      %v1654 = vmul.f32 %v1526, %v1590
      %v1655 = vmul.f32 %v1527, %v1591
      %v1656 = vmul.f32 %v1528, %v1592
      %v1657 = vmul.f32 %v1529, %v1593
      %v1658 = vmul.f32 %v1530, %v1594
      %v1659 = vmul.f32 %v1531, %v1595
      %v1660 = vmul.f32 %v1532, %v1596
      %v1661 = vmul.f32 %v1533, %v1597
      %v1662 = vmul.f32 %v1534, %v1598
      %v1663 = vmul.f32 %v1535, %v1599
      %v1664 = vmul.f32 %v1536, %v1600
      %v1665 = vmul.f32 %v1537, %v1601
      %v1666 = vmul.f32 %v1538, %v1602
      %v1667 = vmul.f32 %v1539, %v1603
      %v1668 = vmul.f32 %v1540, %v1604
      %v1669 = vmul.f32 %v1541, %v1605
      %v1670 = vmul.f32 %v1542, %v1606
      %v1671 = vmul.f32 %v1543, %v1607
      %v1672 = vmul.f32 %v1544, %v1608
      %v1673 = vmul.f32 %v1545, %v1609
      %v1674 = vmul.f32 %v1546, %v1610
      %v1675 = vmul.f32 %v1547, %v1611
      %v1676 = vmul.f32 %v1548, %v1612
      %v1677 = vmul.f32 %v1549, %v1613
      %v1678 = vmul.f32 %v1550, %v1614
      %v1679 = vmul.f32 %v1551, %v1615
      %v1680 = vmul.f32 %v1552, %v1616
      %v1681 = vmul.f32 %v1553, %v1617
      %v1682 = vmul.f32 %v1554, %v1618
      %v1683 = vmul.f32 %v1555, %v1619
      %v1684 = vmul.f32 %v1556, %v1620
      %v1685 = vmul.f32 %v1557, %v1621
      %v1686 = vmul.f32 %v1558, %v1622
      %v1687 = vmul.f32 %v1559, %v1623
      %v1688 = vmul.f32 %v1560, %v1624
      %v1689 = vsub.f32 1.4, %v895
      %v1690 = vsub.f32 1.4, %v902
      %v1691 = vsub.f32 1.4, %v909
      %v1692 = vsub.f32 1.4, %v916
      %v1693 = vsub.f32 1.4, %v923
      %v1694 = vsub.f32 1.4, %v930
      %v1695 = vsub.f32 1.4, %v937
      %v1696 = vsub.f32 1.4, %v944
      %v1697 = vsub.f32 1.4, %v951
      %v1698 = vsub.f32 1.4, %v958
      %v1699 = vsub.f32 1.4, %v965
      %v1700 = vsub.f32 1.4, %v972
      %v1701 = vsub.f32 1.4, %v979
      %v1702 = vsub.f32 1.4, %v986
      %v1703 = vsub.f32 1.4, %v993
      %v1704 = vsub.f32 1.4, %v1000
      %v1705 = vsub.f32 1.4, %v1007
      %v1706 = vsub.f32 1.4, %v1014
      %v1707 = vsub.f32 1.4, %v1021
      %v1708 = vsub.f32 1.4, %v1028
      %v1709 = vsub.f32 1.4, %v1035
      %v1710 = vsub.f32 1.4, %v1042
      %v1711 = vsub.f32 1.4, %v1049
      %v1712 = vsub.f32 1.4, %v1056
      %v1713 = vsub.f32 1.4, %v1063
      %v1714 = vsub.f32 1.4, %v1070
      %v1715 = vsub.f32 1.4, %v1077
      %v1716 = vsub.f32 1.4, %v1084
      %v1717 = vsub.f32 1.4, %v1091
      %v1718 = vsub.f32 1.4, %v1098
      %v1719 = vsub.f32 1.4, %v1105
      %v1720 = vsub.f32 1.4, %v1112
      %v1721 = vsub.f32 1.4, %v1119
      %v1722 = vsub.f32 1.4, %v1126
      %v1723 = vsub.f32 1.4, %v1133
      %v1724 = vsub.f32 1.4, %v1140
      %v1725 = vsub.f32 1.4, %v1147
      %v1726 = vsub.f32 1.4, %v1154
      %v1727 = vsub.f32 1.4, %v1161
      %v1728 = vsub.f32 1.4, %v1168
      %v1729 = vsub.f32 1.4, %v1175
      %v1730 = vsub.f32 1.4, %v1182
      %v1731 = vsub.f32 1.4, %v1189
      %v1732 = vsub.f32 1.4, %v1196
      %v1733 = vsub.f32 1.4, %v1203
      %v1734 = vsub.f32 1.4, %v1210
      %v1735 = vsub.f32 1.4, %v1217
      %v1736 = vsub.f32 1.4, %v1224
      %v1737 = vsub.f32 1.4, %v1231
      %v1738 = vsub.f32 1.4, %v1238
      %v1739 = vsub.f32 1.4, %v1245
      %v1740 = vsub.f32 1.4, %v1252
      %v1741 = vsub.f32 1.4, %v1259
      %v1742 = vsub.f32 1.4, %v1266
      %v1743 = vsub.f32 1.4, %v1273
      %v1744 = vsub.f32 1.4, %v1280
      %v1745 = vsub.f32 1.4, %v1287
      %v1746 = vsub.f32 1.4, %v1294
      %v1747 = vsub.f32 1.4, %v1301
      %v1748 = vsub.f32 1.4, %v1308
      %v1749 = vsub.f32 1.4, %v1315
      %v1750 = vsub.f32 1.4, %v1322
      %v1751 = vsub.f32 1.4, %v1329
      %v1752 = vsub.f32 1.4, %v1336
      %v1753 = vmax.f32 %v1689, 0.0
      %v1754 = vmax.f32 %v1690, 0.0
      %v1755 = vmax.f32 %v1691, 0.0
      %v1756 = vmax.f32 %v1692, 0.0
      %v1757 = vmax.f32 %v1693, 0.0
      %v1758 = vmax.f32 %v1694, 0.0
      %v1759 = vmax.f32 %v1695, 0.0
      %v1760 = vmax.f32 %v1696, 0.0
      %v1761 = vmax.f32 %v1697, 0.0
      %v1762 = vmax.f32 %v1698, 0.0
      %v1763 = vmax.f32 %v1699, 0.0
      %v1764 = vmax.f32 %v1700, 0.0
      %v1765 = vmax.f32 %v1701, 0.0
      %v1766 = vmax.f32 %v1702, 0.0
      %v1767 = vmax.f32 %v1703, 0.0
      %v1768 = vmax.f32 %v1704, 0.0
      %v1769 = vmax.f32 %v1705, 0.0
      %v1770 = vmax.f32 %v1706, 0.0
      %v1771 = vmax.f32 %v1707, 0.0
      %v1772 = vmax.f32 %v1708, 0.0
      %v1773 = vmax.f32 %v1709, 0.0
      %v1774 = vmax.f32 %v1710, 0.0
      %v1775 = vmax.f32 %v1711, 0.0
      %v1776 = vmax.f32 %v1712, 0.0
      %v1777 = vmax.f32 %v1713, 0.0
      %v1778 = vmax.f32 %v1714, 0.0
      %v1779 = vmax.f32 %v1715, 0.0
      %v1780 = vmax.f32 %v1716, 0.0
      %v1781 = vmax.f32 %v1717, 0.0
      %v1782 = vmax.f32 %v1718, 0.0
      %v1783 = vmax.f32 %v1719, 0.0
      %v1784 = vmax.f32 %v1720, 0.0
      %v1785 = vmax.f32 %v1721, 0.0
      %v1786 = vmax.f32 %v1722, 0.0
      %v1787 = vmax.f32 %v1723, 0.0
      %v1788 = vmax.f32 %v1724, 0.0
      %v1789 = vmax.f32 %v1725, 0.0
      %v1790 = vmax.f32 %v1726, 0.0
      %v1791 = vmax.f32 %v1727, 0.0
      %v1792 = vmax.f32 %v1728, 0.0
      %v1793 = vmax.f32 %v1729, 0.0
      %v1794 = vmax.f32 %v1730, 0.0
      %v1795 = vmax.f32 %v1731, 0.0
      %v1796 = vmax.f32 %v1732, 0.0
      %v1797 = vmax.f32 %v1733, 0.0
      %v1798 = vmax.f32 %v1734, 0.0
      %v1799 = vmax.f32 %v1735, 0.0
      %v1800 = vmax.f32 %v1736, 0.0
      %v1801 = vmax.f32 %v1737, 0.0
      %v1802 = vmax.f32 %v1738, 0.0
      %v1803 = vmax.f32 %v1739, 0.0
      %v1804 = vmax.f32 %v1740, 0.0
      %v1805 = vmax.f32 %v1741, 0.0
      %v1806 = vmax.f32 %v1742, 0.0
      %v1807 = vmax.f32 %v1743, 0.0
      %v1808 = vmax.f32 %v1744, 0.0
      %v1809 = vmax.f32 %v1745, 0.0
      %v1810 = vmax.f32 %v1746, 0.0
      %v1811 = vmax.f32 %v1747, 0.0
      %v1812 = vmax.f32 %v1748, 0.0
      %v1813 = vmax.f32 %v1749, 0.0
      %v1814 = vmax.f32 %v1750, 0.0
      %v1815 = vmax.f32 %v1751, 0.0
      %v1816 = vmax.f32 %v1752, 0.0
      %v1817 = vsub.f32 0.0, %v1369
      %v1818 = vsub.f32 0.0, %v1370
      %v1819 = vsub.f32 0.0, %v1371
      %v1820 = vsub.f32 0.0, %v1372
      %v1821 = vsub.f32 0.0, %v1373
      %v1822 = vsub.f32 0.0, %v1374
      %v1823 = vsub.f32 0.0, %v1375
      %v1824 = vsub.f32 0.0, %v1376
      %v1825 = vsub.f32 0.0, %v1377
      %v1826 = vsub.f32 0.0, %v1378
      %v1827 = vsub.f32 0.0, %v1379
      %v1828 = vsub.f32 0.0, %v1380
      %v1829 = vsub.f32 0.0, %v1381
      %v1830 = vsub.f32 0.0, %v1382
      %v1831 = vsub.f32 0.0, %v1383
      %v1832 = vsub.f32 0.0, %v1384
      %v1833 = vsub.f32 0.0, %v1385
      %v1834 = vsub.f32 0.0, %v1386
      %v1835 = vsub.f32 0.0, %v1387
      %v1836 = vsub.f32 0.0, %v1388
      %v1837 = vsub.f32 0.0, %v1389
      %v1838 = vsub.f32 0.0, %v1390
      %v1839 = vsub.f32 0.0, %v1391
      %v1840 = vsub.f32 0.0, %v1392
      %v1841 = vsub.f32 0.0, %v1393
      %v1842 = vsub.f32 0.0, %v1394
      %v1843 = vsub.f32 0.0, %v1395
      %v1844 = vsub.f32 0.0, %v1396
      %v1845 = vsub.f32 0.0, %v1397
      %v1846 = vsub.f32 0.0, %v1398
      %v1847 = vsub.f32 0.0, %v1399
      %v1848 = vsub.f32 0.0, %v1400
      %v1849 = vsub.f32 0.0, %v1401
      %v1850 = vsub.f32 0.0, %v1402
      %v1851 = vsub.f32 0.0, %v1403
      %v1852 = vsub.f32 0.0, %v1404
      %v1853 = vsub.f32 0.0, %v1405
      %v1854 = vsub.f32 0.0, %v1406
      %v1855 = vsub.f32 0.0, %v1407
      %v1856 = vsub.f32 0.0, %v1408
      %v1857 = vsub.f32 0.0, %v1409
      %v1858 = vsub.f32 0.0, %v1410
      %v1859 = vsub.f32 0.0, %v1411
      %v1860 = vsub.f32 0.0, %v1412
      %v1861 = vsub.f32 0.0, %v1413
      %v1862 = vsub.f32 0.0, %v1414
      %v1863 = vsub.f32 0.0, %v1415
      %v1864 = vsub.f32 0.0, %v1416
      %v1865 = vsub.f32 0.0, %v1417
      %v1866 = vsub.f32 0.0, %v1418
      %v1867 = vsub.f32 0.0, %v1419
      %v1868 = vsub.f32 0.0, %v1420
      %v1869 = vsub.f32 0.0, %v1421
      %v1870 = vsub.f32 0.0, %v1422
      %v1871 = vsub.f32 0.0, %v1423
      %v1872 = vsub.f32 0.0, %v1424
      %v1873 = vsub.f32 0.0, %v1425
      %v1874 = vsub.f32 0.0, %v1426
      %v1875 = vsub.f32 0.0, %v1427
      %v1876 = vsub.f32 0.0, %v1428
      %v1877 = vsub.f32 0.0, %v1429
      %v1878 = vsub.f32 0.0, %v1430
      %v1879 = vsub.f32 0.0, %v1431
      %v1880 = vsub.f32 0.0, %v1432
      %v1881 = vmax.f32 %v1817, 0.0
      %v1882 = vmax.f32 %v1818, 0.0
      %v1883 = vmax.f32 %v1819, 0.0
      %v1884 = vmax.f32 %v1820, 0.0
      %v1885 = vmax.f32 %v1821, 0.0
      %v1886 = vmax.f32 %v1822, 0.0
      %v1887 = vmax.f32 %v1823, 0.0
      %v1888 = vmax.f32 %v1824, 0.0
      %v1889 = vmax.f32 %v1825, 0.0
      %v1890 = vmax.f32 %v1826, 0.0
      %v1891 = vmax.f32 %v1827, 0.0
      %v1892 = vmax.f32 %v1828, 0.0
      %v1893 = vmax.f32 %v1829, 0.0
      %v1894 = vmax.f32 %v1830, 0.0
      %v1895 = vmax.f32 %v1831, 0.0
      %v1896 = vmax.f32 %v1832, 0.0
      %v1897 = vmax.f32 %v1833, 0.0
      %v1898 = vmax.f32 %v1834, 0.0
      %v1899 = vmax.f32 %v1835, 0.0
      %v1900 = vmax.f32 %v1836, 0.0
      %v1901 = vmax.f32 %v1837, 0.0
      %v1902 = vmax.f32 %v1838, 0.0
      %v1903 = vmax.f32 %v1839, 0.0
      %v1904 = vmax.f32 %v1840, 0.0
      %v1905 = vmax.f32 %v1841, 0.0
      %v1906 = vmax.f32 %v1842, 0.0
      %v1907 = vmax.f32 %v1843, 0.0
      %v1908 = vmax.f32 %v1844, 0.0
      %v1909 = vmax.f32 %v1845, 0.0
      %v1910 = vmax.f32 %v1846, 0.0
      %v1911 = vmax.f32 %v1847, 0.0
      %v1912 = vmax.f32 %v1848, 0.0
      %v1913 = vmax.f32 %v1849, 0.0
      %v1914 = vmax.f32 %v1850, 0.0
      %v1915 = vmax.f32 %v1851, 0.0
      %v1916 = vmax.f32 %v1852, 0.0
      %v1917 = vmax.f32 %v1853, 0.0
      %v1918 = vmax.f32 %v1854, 0.0
      %v1919 = vmax.f32 %v1855, 0.0
      %v1920 = vmax.f32 %v1856, 0.0
      %v1921 = vmax.f32 %v1857, 0.0
      %v1922 = vmax.f32 %v1858, 0.0
      %v1923 = vmax.f32 %v1859, 0.0
      %v1924 = vmax.f32 %v1860, 0.0
      %v1925 = vmax.f32 %v1861, 0.0
      %v1926 = vmax.f32 %v1862, 0.0
      %v1927 = vmax.f32 %v1863, 0.0
      %v1928 = vmax.f32 %v1864, 0.0
      %v1929 = vmax.f32 %v1865, 0.0
      %v1930 = vmax.f32 %v1866, 0.0
      %v1931 = vmax.f32 %v1867, 0.0
      %v1932 = vmax.f32 %v1868, 0.0
      %v1933 = vmax.f32 %v1869, 0.0
      %v1934 = vmax.f32 %v1870, 0.0
      %v1935 = vmax.f32 %v1871, 0.0
      %v1936 = vmax.f32 %v1872, 0.0
      %v1937 = vmax.f32 %v1873, 0.0
      %v1938 = vmax.f32 %v1874, 0.0
      %v1939 = vmax.f32 %v1875, 0.0
      %v1940 = vmax.f32 %v1876, 0.0
      %v1941 = vmax.f32 %v1877, 0.0
      %v1942 = vmax.f32 %v1878, 0.0
      %v1943 = vmax.f32 %v1879, 0.0
      %v1944 = vmax.f32 %v1880, 0.0
      %v1945 = vmul.f32 %v1753, %v1881
      %v1946 = vmul.f32 %v1754, %v1882
      %v1947 = vmul.f32 %v1755, %v1883
      %v1948 = vmul.f32 %v1756, %v1884
      %v1949 = vmul.f32 %v1757, %v1885
      %v1950 = vmul.f32 %v1758, %v1886
      %v1951 = vmul.f32 %v1759, %v1887
      %v1952 = vmul.f32 %v1760, %v1888
      %v1953 = vmul.f32 %v1761, %v1889
      %v1954 = vmul.f32 %v1762, %v1890
      %v1955 = vmul.f32 %v1763, %v1891
      %v1956 = vmul.f32 %v1764, %v1892
      %v1957 = vmul.f32 %v1765, %v1893
      %v1958 = vmul.f32 %v1766, %v1894
      %v1959 = vmul.f32 %v1767, %v1895
      %v1960 = vmul.f32 %v1768, %v1896
      %v1961 = vmul.f32 %v1769, %v1897
      %v1962 = vmul.f32 %v1770, %v1898
      %v1963 = vmul.f32 %v1771, %v1899
      %v1964 = vmul.f32 %v1772, %v1900
      %v1965 = vmul.f32 %v1773, %v1901
      %v1966 = vmul.f32 %v1774, %v1902
      %v1967 = vmul.f32 %v1775, %v1903
      %v1968 = vmul.f32 %v1776, %v1904
      %v1969 = vmul.f32 %v1777, %v1905
      %v1970 = vmul.f32 %v1778, %v1906
      %v1971 = vmul.f32 %v1779, %v1907
      %v1972 = vmul.f32 %v1780, %v1908
      %v1973 = vmul.f32 %v1781, %v1909
      %v1974 = vmul.f32 %v1782, %v1910
      %v1975 = vmul.f32 %v1783, %v1911
      %v1976 = vmul.f32 %v1784, %v1912
      %v1977 = vmul.f32 %v1785, %v1913
      %v1978 = vmul.f32 %v1786, %v1914
      %v1979 = vmul.f32 %v1787, %v1915
      %v1980 = vmul.f32 %v1788, %v1916
      %v1981 = vmul.f32 %v1789, %v1917
      %v1982 = vmul.f32 %v1790, %v1918
      %v1983 = vmul.f32 %v1791, %v1919
      %v1984 = vmul.f32 %v1792, %v1920
      %v1985 = vmul.f32 %v1793, %v1921
      %v1986 = vmul.f32 %v1794, %v1922
      %v1987 = vmul.f32 %v1795, %v1923
      %v1988 = vmul.f32 %v1796, %v1924
      %v1989 = vmul.f32 %v1797, %v1925
      %v1990 = vmul.f32 %v1798, %v1926
      %v1991 = vmul.f32 %v1799, %v1927
      %v1992 = vmul.f32 %v1800, %v1928
      %v1993 = vmul.f32 %v1801, %v1929
      %v1994 = vmul.f32 %v1802, %v1930
      %v1995 = vmul.f32 %v1803, %v1931
      %v1996 = vmul.f32 %v1804, %v1932
      %v1997 = vmul.f32 %v1805, %v1933
      %v1998 = vmul.f32 %v1806, %v1934
      %v1999 = vmul.f32 %v1807, %v1935
      %v2000 = vmul.f32 %v1808, %v1936
      %v2001 = vmul.f32 %v1809, %v1937
      %v2002 = vmul.f32 %v1810, %v1938
      %v2003 = vmul.f32 %v1811, %v1939
      %v2004 = vmul.f32 %v1812, %v1940
      %v2005 = vmul.f32 %v1813, %v1941
      %v2006 = vmul.f32 %v1814, %v1942
      %v2007 = vmul.f32 %v1815, %v1943
      %v2008 = vmul.f32 %v1816, %v1944
      %v2009 = vmul.f32 %v1433, %v1625
      %v2010 = vmul.f32 %v1434, %v1626
      %v2011 = vmul.f32 %v1435, %v1627
      %v2012 = vmul.f32 %v1436, %v1628
      %v2013 = vmul.f32 %v1437, %v1629
      %v2014 = vmul.f32 %v1438, %v1630
      %v2015 = vmul.f32 %v1439, %v1631
      %v2016 = vmul.f32 %v1440, %v1632
      %v2017 = vmul.f32 %v1441, %v1633
      %v2018 = vmul.f32 %v1442, %v1634
      %v2019 = vmul.f32 %v1443, %v1635
      %v2020 = vmul.f32 %v1444, %v1636
      %v2021 = vmul.f32 %v1445, %v1637
      %v2022 = vmul.f32 %v1446, %v1638
      %v2023 = vmul.f32 %v1447, %v1639
      %v2024 = vmul.f32 %v1448, %v1640
      %v2025 = vmul.f32 %v1449, %v1641
      %v2026 = vmul.f32 %v1450, %v1642
      %v2027 = vmul.f32 %v1451, %v1643
      %v2028 = vmul.f32 %v1452, %v1644
      %v2029 = vmul.f32 %v1453, %v1645
      %v2030 = vmul.f32 %v1454, %v1646
      %v2031 = vmul.f32 %v1455, %v1647
      %v2032 = vmul.f32 %v1456, %v1648
      %v2033 = vmul.f32 %v1457, %v1649
      %v2034 = vmul.f32 %v1458, %v1650
      %v2035 = vmul.f32 %v1459, %v1651
      %v2036 = vmul.f32 %v1460, %v1652
      %v2037 = vmul.f32 %v1461, %v1653
      %v2038 = vmul.f32 %v1462, %v1654
      %v2039 = vmul.f32 %v1463, %v1655
      %v2040 = vmul.f32 %v1464, %v1656
      %v2041 = vmul.f32 %v1465, %v1657
      %v2042 = vmul.f32 %v1466, %v1658
      %v2043 = vmul.f32 %v1467, %v1659
      %v2044 = vmul.f32 %v1468, %v1660
      %v2045 = vmul.f32 %v1469, %v1661
      %v2046 = vmul.f32 %v1470, %v1662
      %v2047 = vmul.f32 %v1471, %v1663
      %v2048 = vmul.f32 %v1472, %v1664
      %v2049 = vmul.f32 %v1473, %v1665
      %v2050 = vmul.f32 %v1474, %v1666
      %v2051 = vmul.f32 %v1475, %v1667
      %v2052 = vmul.f32 %v1476, %v1668
      %v2053 = vmul.f32 %v1477, %v1669
      %v2054 = vmul.f32 %v1478, %v1670
      %v2055 = vmul.f32 %v1479, %v1671
      %v2056 = vmul.f32 %v1480, %v1672
      %v2057 = vmul.f32 %v1481, %v1673
      %v2058 = vmul.f32 %v1482, %v1674
      %v2059 = vmul.f32 %v1483, %v1675
      %v2060 = vmul.f32 %v1484, %v1676
      %v2061 = vmul.f32 %v1485, %v1677
      %v2062 = vmul.f32 %v1486, %v1678
      %v2063 = vmul.f32 %v1487, %v1679
      %v2064 = vmul.f32 %v1488, %v1680
      %v2065 = vmul.f32 %v1489, %v1681
      %v2066 = vmul.f32 %v1490, %v1682
      %v2067 = vmul.f32 %v1491, %v1683
      %v2068 = vmul.f32 %v1492, %v1684
      %v2069 = vmul.f32 %v1493, %v1685
      %v2070 = vmul.f32 %v1494, %v1686
      %v2071 = vmul.f32 %v1495, %v1687
      %v2072 = vmul.f32 %v1496, %v1688
      %v2073 = vmul.f32 %v1689, %v1945
      %v2074 = vmul.f32 %v1690, %v1946
      %v2075 = vmul.f32 %v1691, %v1947
      %v2076 = vmul.f32 %v1692, %v1948
      %v2077 = vmul.f32 %v1693, %v1949
      %v2078 = vmul.f32 %v1694, %v1950
      %v2079 = vmul.f32 %v1695, %v1951
      %v2080 = vmul.f32 %v1696, %v1952
      %v2081 = vmul.f32 %v1697, %v1953
      %v2082 = vmul.f32 %v1698, %v1954
      %v2083 = vmul.f32 %v1699, %v1955
      %v2084 = vmul.f32 %v1700, %v1956
      %v2085 = vmul.f32 %v1701, %v1957
      %v2086 = vmul.f32 %v1702, %v1958
      %v2087 = vmul.f32 %v1703, %v1959
      %v2088 = vmul.f32 %v1704, %v1960
      %v2089 = vmul.f32 %v1705, %v1961
      %v2090 = vmul.f32 %v1706, %v1962
      %v2091 = vmul.f32 %v1707, %v1963
      %v2092 = vmul.f32 %v1708, %v1964
      %v2093 = vmul.f32 %v1709, %v1965
      %v2094 = vmul.f32 %v1710, %v1966
      %v2095 = vmul.f32 %v1711, %v1967
      %v2096 = vmul.f32 %v1712, %v1968
      %v2097 = vmul.f32 %v1713, %v1969
      %v2098 = vmul.f32 %v1714, %v1970
      %v2099 = vmul.f32 %v1715, %v1971
      %v2100 = vmul.f32 %v1716, %v1972
      %v2101 = vmul.f32 %v1717, %v1973
      %v2102 = vmul.f32 %v1718, %v1974
      %v2103 = vmul.f32 %v1719, %v1975
      %v2104 = vmul.f32 %v1720, %v1976
      %v2105 = vmul.f32 %v1721, %v1977
      %v2106 = vmul.f32 %v1722, %v1978
      %v2107 = vmul.f32 %v1723, %v1979
      %v2108 = vmul.f32 %v1724, %v1980
      %v2109 = vmul.f32 %v1725, %v1981
      %v2110 = vmul.f32 %v1726, %v1982
      %v2111 = vmul.f32 %v1727, %v1983
      %v2112 = vmul.f32 %v1728, %v1984
      %v2113 = vmul.f32 %v1729, %v1985
      %v2114 = vmul.f32 %v1730, %v1986
      %v2115 = vmul.f32 %v1731, %v1987
      %v2116 = vmul.f32 %v1732, %v1988
      %v2117 = vmul.f32 %v1733, %v1989
      %v2118 = vmul.f32 %v1734, %v1990
      %v2119 = vmul.f32 %v1735, %v1991
      %v2120 = vmul.f32 %v1736, %v1992
      %v2121 = vmul.f32 %v1737, %v1993
      %v2122 = vmul.f32 %v1738, %v1994
      %v2123 = vmul.f32 %v1739, %v1995
      %v2124 = vmul.f32 %v1740, %v1996
      %v2125 = vmul.f32 %v1741, %v1997
      %v2126 = vmul.f32 %v1742, %v1998
      %v2127 = vmul.f32 %v1743, %v1999
      %v2128 = vmul.f32 %v1744, %v2000
      %v2129 = vmul.f32 %v1745, %v2001
      %v2130 = vmul.f32 %v1746, %v2002
      %v2131 = vmul.f32 %v1747, %v2003
      %v2132 = vmul.f32 %v1748, %v2004
      %v2133 = vmul.f32 %v1749, %v2005
      %v2134 = vmul.f32 %v1750, %v2006
      %v2135 = vmul.f32 %v1751, %v2007
      %v2136 = vmul.f32 %v1752, %v2008
      %v2137 = vmax.f32 %v2009, %v2010
      %2138 = vmax.xlane.f32.xlu0 %v2137
      %v2139 = vpop.xlane.xlu0 %2138
      %v2140 = vmax.f32 %v2011, %v2012
      %2141 = vmax.xlane.f32.xlu0 %v2140
      %v2142 = vpop.xlane.xlu0 %2141
      %v2143 = vmax.f32 %v2013, %v2014
      %2144 = vmax.xlane.f32.xlu0 %v2143
      %v2145 = vpop.xlane.xlu0 %2144
      %v2146 = vmax.f32 %v2015, %v2016
      %2147 = vmax.xlane.f32.xlu0 %v2146
      %v2148 = vpop.xlane.xlu0 %2147
      %v2149 = vmax.f32 %v2017, %v2018
      %2150 = vmax.xlane.f32.xlu0 %v2149
      %v2151 = vpop.xlane.xlu0 %2150
      %v2152 = vmax.f32 %v2019, %v2020
      %2153 = vmax.xlane.f32.xlu0 %v2152
      %v2154 = vpop.xlane.xlu0 %2153
      %v2155 = vmax.f32 %v2021, %v2022
      %2156 = vmax.xlane.f32.xlu0 %v2155
      %v2157 = vpop.xlane.xlu0 %2156
      %v2158 = vmax.f32 %v2023, %v2024
      %2159 = vmax.xlane.f32.xlu0 %v2158
      %v2160 = vpop.xlane.xlu0 %2159
      %v2161 = vmax.f32 %v2025, %v2026
      %2162 = vmax.xlane.f32.xlu0 %v2161
      %v2163 = vpop.xlane.xlu0 %2162
      %v2164 = vmax.f32 %v2027, %v2028
      %2165 = vmax.xlane.f32.xlu0 %v2164
      %v2166 = vpop.xlane.xlu0 %2165
      %v2167 = vmax.f32 %v2029, %v2030
      %2168 = vmax.xlane.f32.xlu0 %v2167
      %v2169 = vpop.xlane.xlu0 %2168
      %v2170 = vmax.f32 %v2031, %v2032
      %2171 = vmax.xlane.f32.xlu0 %v2170
      %v2172 = vpop.xlane.xlu0 %2171
      %v2173 = vmax.f32 %v2033, %v2034
      %2174 = vmax.xlane.f32.xlu0 %v2173
      %v2175 = vpop.xlane.xlu0 %2174
      %v2176 = vmax.f32 %v2035, %v2036
      %2177 = vmax.xlane.f32.xlu0 %v2176
      %v2178 = vpop.xlane.xlu0 %2177
      %v2179 = vmax.f32 %v2037, %v2038
      %2180 = vmax.xlane.f32.xlu0 %v2179
      %v2181 = vpop.xlane.xlu0 %2180
      %v2182 = vmax.f32 %v2039, %v2040
      %2183 = vmax.xlane.f32.xlu0 %v2182
      %v2184 = vpop.xlane.xlu0 %2183
      %v2185 = vmax.f32 %v2041, %v2042
      %2186 = vmax.xlane.f32.xlu0 %v2185
      %v2187 = vpop.xlane.xlu0 %2186
      %v2188 = vmax.f32 %v2043, %v2044
      %2189 = vmax.xlane.f32.xlu0 %v2188
      %v2190 = vpop.xlane.xlu0 %2189
      %v2191 = vmax.f32 %v2045, %v2046
      %2192 = vmax.xlane.f32.xlu0 %v2191
      %v2193 = vpop.xlane.xlu0 %2192
      %v2194 = vmax.f32 %v2047, %v2048
      %2195 = vmax.xlane.f32.xlu0 %v2194
      %v2196 = vpop.xlane.xlu0 %2195
      %v2197 = vmax.f32 %v2049, %v2050
      %2198 = vmax.xlane.f32.xlu0 %v2197
      %v2199 = vpop.xlane.xlu0 %2198
      %v2200 = vmax.f32 %v2051, %v2052
      %2201 = vmax.xlane.f32.xlu0 %v2200
      %v2202 = vpop.xlane.xlu0 %2201
      %v2203 = vmax.f32 %v2053, %v2054
      %2204 = vmax.xlane.f32.xlu0 %v2203
      %v2205 = vpop.xlane.xlu0 %2204
      %v2206 = vmax.f32 %v2055, %v2056
      %2207 = vmax.xlane.f32.xlu0 %v2206
      %v2208 = vpop.xlane.xlu0 %2207
      %v2209 = vmax.f32 %v2057, %v2058
      %2210 = vmax.xlane.f32.xlu0 %v2209
      %v2211 = vpop.xlane.xlu0 %2210
      %v2212 = vmax.f32 %v2059, %v2060
      %2213 = vmax.xlane.f32.xlu0 %v2212
      %v2214 = vpop.xlane.xlu0 %2213
      %v2215 = vmax.f32 %v2061, %v2062
      %2216 = vmax.xlane.f32.xlu0 %v2215
      %v2217 = vpop.xlane.xlu0 %2216
      %v2218 = vmax.f32 %v2063, %v2064
      %2219 = vmax.xlane.f32.xlu0 %v2218
      %v2220 = vpop.xlane.xlu0 %2219
      %v2221 = vmax.f32 %v2065, %v2066
      %2222 = vmax.xlane.f32.xlu0 %v2221
      %v2223 = vpop.xlane.xlu0 %2222
      %v2224 = vmax.f32 %v2067, %v2068
      %2225 = vmax.xlane.f32.xlu0 %v2224
      %v2226 = vpop.xlane.xlu0 %2225
      %v2227 = vmax.f32 %v2069, %v2070
      %2228 = vmax.xlane.f32.xlu0 %v2227
      %v2229 = vpop.xlane.xlu0 %2228
      %v2230 = vmax.f32 %v2071, %v2072
      %2231 = vmax.xlane.f32.xlu0 %v2230
      %v2232 = vpop.xlane.xlu0 %2231
      %v2233 = vsub.f32 %v2009, %v2139
      %v2234 = vsub.f32 %v2010, %v2139
      %v2235 = vsub.f32 %v2011, %v2142
      %v2236 = vsub.f32 %v2012, %v2142
      %v2237 = vsub.f32 %v2013, %v2145
      %v2238 = vsub.f32 %v2014, %v2145
      %v2239 = vsub.f32 %v2015, %v2148
      %v2240 = vsub.f32 %v2016, %v2148
      %v2241 = vsub.f32 %v2017, %v2151
      %v2242 = vsub.f32 %v2018, %v2151
      %v2243 = vsub.f32 %v2019, %v2154
      %v2244 = vsub.f32 %v2020, %v2154
      %v2245 = vsub.f32 %v2021, %v2157
      %v2246 = vsub.f32 %v2022, %v2157
      %v2247 = vsub.f32 %v2023, %v2160
      %v2248 = vsub.f32 %v2024, %v2160
      %v2249 = vsub.f32 %v2025, %v2163
      %v2250 = vsub.f32 %v2026, %v2163
      %v2251 = vsub.f32 %v2027, %v2166
      %v2252 = vsub.f32 %v2028, %v2166
      %v2253 = vsub.f32 %v2029, %v2169
      %v2254 = vsub.f32 %v2030, %v2169
      %v2255 = vsub.f32 %v2031, %v2172
      %v2256 = vsub.f32 %v2032, %v2172
      %v2257 = vsub.f32 %v2033, %v2175
      %v2258 = vsub.f32 %v2034, %v2175
      %v2259 = vsub.f32 %v2035, %v2178
      %v2260 = vsub.f32 %v2036, %v2178
      %v2261 = vsub.f32 %v2037, %v2181
      %v2262 = vsub.f32 %v2038, %v2181
      %v2263 = vsub.f32 %v2039, %v2184
      %v2264 = vsub.f32 %v2040, %v2184
      %v2265 = vsub.f32 %v2041, %v2187
      %v2266 = vsub.f32 %v2042, %v2187
      %v2267 = vsub.f32 %v2043, %v2190
      %v2268 = vsub.f32 %v2044, %v2190
      %v2269 = vsub.f32 %v2045, %v2193
      %v2270 = vsub.f32 %v2046, %v2193
      %v2271 = vsub.f32 %v2047, %v2196
      %v2272 = vsub.f32 %v2048, %v2196
      %v2273 = vsub.f32 %v2049, %v2199
      %v2274 = vsub.f32 %v2050, %v2199
      %v2275 = vsub.f32 %v2051, %v2202
      %v2276 = vsub.f32 %v2052, %v2202
      %v2277 = vsub.f32 %v2053, %v2205
      %v2278 = vsub.f32 %v2054, %v2205
      %v2279 = vsub.f32 %v2055, %v2208
      %v2280 = vsub.f32 %v2056, %v2208
      %v2281 = vsub.f32 %v2057, %v2211
      %v2282 = vsub.f32 %v2058, %v2211
      %v2283 = vsub.f32 %v2059, %v2214
      %v2284 = vsub.f32 %v2060, %v2214
      %v2285 = vsub.f32 %v2061, %v2217
      %v2286 = vsub.f32 %v2062, %v2217
      %v2287 = vsub.f32 %v2063, %v2220
      %v2288 = vsub.f32 %v2064, %v2220
      %v2289 = vsub.f32 %v2065, %v2223
      %v2290 = vsub.f32 %v2066, %v2223
      %v2291 = vsub.f32 %v2067, %v2226
      %v2292 = vsub.f32 %v2068, %v2226
      %v2293 = vsub.f32 %v2069, %v2229
      %v2294 = vsub.f32 %v2070, %v2229
      %v2295 = vsub.f32 %v2071, %v2232
      %v2296 = vsub.f32 %v2072, %v2232
      %v2297 = vmul.f32 %v2233, 1.442695
      %v2298 = vpow.pop %v2297
      %v2299 = vmul.f32 %v2234, 1.442695
      %v2300 = vpow.pop %v2299
      %v2301 = vmul.f32 %v2235, 1.442695
      %v2302 = vpow.pop %v2301
      %v2303 = vmul.f32 %v2236, 1.442695
      %v2304 = vpow.pop %v2303
      %v2305 = vmul.f32 %v2237, 1.442695
      %v2306 = vpow.pop %v2305
      %v2307 = vmul.f32 %v2238, 1.442695
      %v2308 = vpow.pop %v2307
      %v2309 = vmul.f32 %v2239, 1.442695
      %v2310 = vpow.pop %v2309
      %v2311 = vmul.f32 %v2240, 1.442695
      %v2312 = vpow.pop %v2311
      %v2313 = vmul.f32 %v2241, 1.442695
      %v2314 = vpow.pop %v2313
      %v2315 = vmul.f32 %v2242, 1.442695
      %v2316 = vpow.pop %v2315
      %v2317 = vmul.f32 %v2243, 1.442695
      %v2318 = vpow.pop %v2317
      %v2319 = vmul.f32 %v2244, 1.442695
      %v2320 = vpow.pop %v2319
      %v2321 = vmul.f32 %v2245, 1.442695
      %v2322 = vpow.pop %v2321
      %v2323 = vmul.f32 %v2246, 1.442695
      %v2324 = vpow.pop %v2323
      %v2325 = vmul.f32 %v2247, 1.442695
      %v2326 = vpow.pop %v2325
      %v2327 = vmul.f32 %v2248, 1.442695
      %v2328 = vpow.pop %v2327
      %v2329 = vmul.f32 %v2249, 1.442695
      %v2330 = vpow.pop %v2329
      %v2331 = vmul.f32 %v2250, 1.442695
      %v2332 = vpow.pop %v2331
      %v2333 = vmul.f32 %v2251, 1.442695
      %v2334 = vpow.pop %v2333
      %v2335 = vmul.f32 %v2252, 1.442695
      %v2336 = vpow.pop %v2335
      %v2337 = vmul.f32 %v2253, 1.442695
      %v2338 = vpow.pop %v2337
      %v2339 = vmul.f32 %v2254, 1.442695
      %v2340 = vpow.pop %v2339
      %v2341 = vmul.f32 %v2255, 1.442695
      %v2342 = vpow.pop %v2341
      %v2343 = vmul.f32 %v2256, 1.442695
      %v2344 = vpow.pop %v2343
      %v2345 = vmul.f32 %v2257, 1.442695
      %v2346 = vpow.pop %v2345
      %v2347 = vmul.f32 %v2258, 1.442695
      %v2348 = vpow.pop %v2347
      %v2349 = vmul.f32 %v2259, 1.442695
      %v2350 = vpow.pop %v2349
      %v2351 = vmul.f32 %v2260, 1.442695
      %v2352 = vpow.pop %v2351
      %v2353 = vmul.f32 %v2261, 1.442695
      %v2354 = vpow.pop %v2353
      %v2355 = vmul.f32 %v2262, 1.442695
      %v2356 = vpow.pop %v2355
      %v2357 = vmul.f32 %v2263, 1.442695
      %v2358 = vpow.pop %v2357
      %v2359 = vmul.f32 %v2264, 1.442695
      %v2360 = vpow.pop %v2359
      %v2361 = vmul.f32 %v2265, 1.442695
      %v2362 = vpow.pop %v2361
      %v2363 = vmul.f32 %v2266, 1.442695
      %v2364 = vpow.pop %v2363
      %v2365 = vmul.f32 %v2267, 1.442695
      %v2366 = vpow.pop %v2365
      %v2367 = vmul.f32 %v2268, 1.442695
      %v2368 = vpow.pop %v2367
      %v2369 = vmul.f32 %v2269, 1.442695
      %v2370 = vpow.pop %v2369
      %v2371 = vmul.f32 %v2270, 1.442695
      %v2372 = vpow.pop %v2371
      %v2373 = vmul.f32 %v2271, 1.442695
      %v2374 = vpow.pop %v2373
      %v2375 = vmul.f32 %v2272, 1.442695
      %v2376 = vpow.pop %v2375
      %v2377 = vmul.f32 %v2273, 1.442695
      %v2378 = vpow.pop %v2377
      %v2379 = vmul.f32 %v2274, 1.442695
      %v2380 = vpow.pop %v2379
      %v2381 = vmul.f32 %v2275, 1.442695
      %v2382 = vpow.pop %v2381
      %v2383 = vmul.f32 %v2276, 1.442695
      %v2384 = vpow.pop %v2383
      %v2385 = vmul.f32 %v2277, 1.442695
      %v2386 = vpow.pop %v2385
      %v2387 = vmul.f32 %v2278, 1.442695
      %v2388 = vpow.pop %v2387
      %v2389 = vmul.f32 %v2279, 1.442695
      %v2390 = vpow.pop %v2389
      %v2391 = vmul.f32 %v2280, 1.442695
      %v2392 = vpow.pop %v2391
      %v2393 = vmul.f32 %v2281, 1.442695
      %v2394 = vpow.pop %v2393
      %v2395 = vmul.f32 %v2282, 1.442695
      %v2396 = vpow.pop %v2395
      %v2397 = vmul.f32 %v2283, 1.442695
      %v2398 = vpow.pop %v2397
      %v2399 = vmul.f32 %v2284, 1.442695
      %v2400 = vpow.pop %v2399
      %v2401 = vmul.f32 %v2285, 1.442695
      %v2402 = vpow.pop %v2401
      %v2403 = vmul.f32 %v2286, 1.442695
      %v2404 = vpow.pop %v2403
      %v2405 = vmul.f32 %v2287, 1.442695
      %v2406 = vpow.pop %v2405
      %v2407 = vmul.f32 %v2288, 1.442695
      %v2408 = vpow.pop %v2407
      %v2409 = vmul.f32 %v2289, 1.442695
      %v2410 = vpow.pop %v2409
      %v2411 = vmul.f32 %v2290, 1.442695
      %v2412 = vpow.pop %v2411
      %v2413 = vmul.f32 %v2291, 1.442695
      %v2414 = vpow.pop %v2413
      %v2415 = vmul.f32 %v2292, 1.442695
      %v2416 = vpow.pop %v2415
      %v2417 = vmul.f32 %v2293, 1.442695
      %v2418 = vpow.pop %v2417
      %v2419 = vmul.f32 %v2294, 1.442695
      %v2420 = vpow.pop %v2419
      %v2421 = vmul.f32 %v2295, 1.442695
      %v2422 = vpow.pop %v2421
      %v2423 = vmul.f32 %v2296, 1.442695
      %v2424 = vpow.pop %v2423
      %2425 = vmatprep.subr.mxu0 0.0
      %2426 = vmatpush1.msra.mxu0 1.0
      %2427 = vmatprep.subr.mxu0 0.0
      %2428 = vmatpush1.msra.mxu0 1.0
      %2429 = vmatprep.subr.mxu0 0.0
      %2430 = vmatpush1.msra.mxu0 1.0
      %2431 = vmatprep.subr.mxu0 0.0
      %2432 = vmatpush1.msra.mxu0 1.0
      %2433 = vmatprep.subr.mxu0 0.0
      %2434 = vmatpush1.msra.mxu0 1.0
      %2435 = vmatprep.subr.mxu0 0.0
      %2436 = vmatpush1.msra.mxu0 1.0
      %2437 = vmatprep.subr.mxu0 0.0
      %2438 = vmatpush1.msra.mxu0 1.0
      %2439 = vmatprep.subr.mxu0 0.0
      %2440 = vmatpush1.msra.mxu0 1.0
      %2441 = vmatprep.subr.mxu0 0.0
      %2442 = vmatpush1.msra.mxu0 1.0
      %2443 = vmatprep.subr.mxu0 0.0
      %2444 = vmatpush1.msra.mxu0 1.0
      %2445 = vmatprep.subr.mxu0 0.0
      %2446 = vmatpush1.msra.mxu0 1.0
      %2447 = vmatprep.subr.mxu0 0.0
      %2448 = vmatpush1.msra.mxu0 1.0
      %2449 = vmatprep.subr.mxu0 0.0
      %2450 = vmatpush1.msra.mxu0 1.0
      %2451 = vmatprep.subr.mxu0 0.0
      %2452 = vmatpush1.msra.mxu0 1.0
      %2453 = vmatprep.subr.mxu0 0.0
      %2454 = vmatpush1.msra.mxu0 1.0
      %2455 = vmatprep.subr.mxu0 0.0
      %2456 = vmatpush1.msra.mxu0 1.0
      %2457 = vmatprep.subr.mxu0 0.0
      %2458 = vmatpush2.msra.mxu0 1.0
      %2459 = vmatprep.subr.mxu0 0.0
      %2460 = vmatpush2.msra.mxu0 1.0
      %2461 = vmatprep.subr.mxu0 0.0
      %2462 = vmatpush2.msra.mxu0 1.0
      %2463 = vmatprep.subr.mxu0 0.0
      %2464 = vmatpush2.msra.mxu0 1.0
      %2465 = vmatprep.subr.mxu0 0.0
      %2466 = vmatpush2.msra.mxu0 1.0
      %2467 = vmatprep.subr.mxu0 0.0
      %2468 = vmatpush2.msra.mxu0 1.0
      %2469 = vmatprep.subr.mxu0 0.0
      %2470 = vmatpush2.msra.mxu0 1.0
      %2471 = vmatprep.subr.mxu0 0.0
      %2472 = vmatpush2.msra.mxu0 1.0
      %2473 = vmatprep.subr.mxu0 0.0
      %2474 = vmatpush2.msra.mxu0 1.0
      %2475 = vmatprep.subr.mxu0 0.0
      %2476 = vmatpush2.msra.mxu0 1.0
      %2477 = vmatprep.subr.mxu0 0.0
      %2478 = vmatpush2.msra.mxu0 1.0
      %2479 = vmatprep.subr.mxu0 0.0
      %2480 = vmatpush2.msra.mxu0 1.0
      %2481 = vmatprep.subr.mxu0 0.0
      %2482 = vmatpush2.msra.mxu0 1.0
      %2483 = vmatprep.subr.mxu0 0.0
      %2484 = vmatpush2.msra.mxu0 1.0
      %2485 = vmatprep.subr.mxu0 0.0
      %2486 = vmatpush2.msra.mxu0 1.0
      %2487 = vmatprep.subr.mxu0 0.0
      %2488 = vmatpush2.msra.mxu0 1.0
      %2489 = vmatprep.mubr.f32.mxu0 %v2300
      %2490 = vmatmul.mubr.f32.gmra.mxu0 %v2298
      %v2491 = vpop.f32.mrf.mxu0
      %v2492 = vadd.f32 0.0, %v2491
      %v2493 = vpop.f32.mrf.mxu0
      %2494 = vmatprep.mubr.f32.mxu0 %v2304
      %2495 = vmatmul.mubr.f32.gmra.mxu0 %v2302
      %v2496 = vpop.f32.mrf.mxu0
      %v2497 = vadd.f32 0.0, %v2496
      %v2498 = vpop.f32.mrf.mxu0
      %2499 = vmatprep.mubr.f32.mxu0 %v2308
      %2500 = vmatmul.mubr.f32.gmra.mxu0 %v2306
      %v2501 = vpop.f32.mrf.mxu0
      %v2502 = vadd.f32 0.0, %v2501
      %v2503 = vpop.f32.mrf.mxu0
      %2504 = vmatprep.mubr.f32.mxu0 %v2312
      %2505 = vmatmul.mubr.f32.gmra.mxu0 %v2310
      %v2506 = vpop.f32.mrf.mxu0
      %v2507 = vadd.f32 0.0, %v2506
      %v2508 = vpop.f32.mrf.mxu0
      %2509 = vmatprep.mubr.f32.mxu0 %v2316
      %2510 = vmatmul.mubr.f32.gmra.mxu0 %v2314
      %v2511 = vpop.f32.mrf.mxu0
      %v2512 = vadd.f32 0.0, %v2511
      %v2513 = vpop.f32.mrf.mxu0
      %2514 = vmatprep.mubr.f32.mxu0 %v2320
      %2515 = vmatmul.mubr.f32.gmra.mxu0 %v2318
      %v2516 = vpop.f32.mrf.mxu0
      %v2517 = vadd.f32 0.0, %v2516
      %v2518 = vpop.f32.mrf.mxu0
      %2519 = vmatprep.mubr.f32.mxu0 %v2324
      %2520 = vmatmul.mubr.f32.gmra.mxu0 %v2322
      %v2521 = vpop.f32.mrf.mxu0
      %v2522 = vadd.f32 0.0, %v2521
      %v2523 = vpop.f32.mrf.mxu0
      %2524 = vmatprep.mubr.f32.mxu0 %v2328
      %2525 = vmatmul.mubr.f32.gmra.mxu0 %v2326
      %v2526 = vpop.f32.mrf.mxu0
      %v2527 = vadd.f32 0.0, %v2526
      %v2528 = vpop.f32.mrf.mxu0
      %2529 = vmatprep.mubr.f32.mxu0 %v2332
      %2530 = vmatmul.mubr.f32.gmra.mxu0 %v2330
      %v2531 = vpop.f32.mrf.mxu0
      %v2532 = vadd.f32 0.0, %v2531
      %v2533 = vpop.f32.mrf.mxu0
      %2534 = vmatprep.mubr.f32.mxu0 %v2336
      %2535 = vmatmul.mubr.f32.gmra.mxu0 %v2334
      %v2536 = vpop.f32.mrf.mxu0
      %v2537 = vadd.f32 0.0, %v2536
      %v2538 = vpop.f32.mrf.mxu0
      %2539 = vmatprep.mubr.f32.mxu0 %v2340
      %2540 = vmatmul.mubr.f32.gmra.mxu0 %v2338
      %v2541 = vpop.f32.mrf.mxu0
      %v2542 = vadd.f32 0.0, %v2541
      %v2543 = vpop.f32.mrf.mxu0
      %2544 = vmatprep.mubr.f32.mxu0 %v2344
      %2545 = vmatmul.mubr.f32.gmra.mxu0 %v2342
      %v2546 = vpop.f32.mrf.mxu0
      %v2547 = vadd.f32 0.0, %v2546
      %v2548 = vpop.f32.mrf.mxu0
      %2549 = vmatprep.mubr.f32.mxu0 %v2348
      %2550 = vmatmul.mubr.f32.gmra.mxu0 %v2346
      %v2551 = vpop.f32.mrf.mxu0
      %v2552 = vadd.f32 0.0, %v2551
      %v2553 = vpop.f32.mrf.mxu0
      %2554 = vmatprep.mubr.f32.mxu0 %v2352
      %2555 = vmatmul.mubr.f32.gmra.mxu0 %v2350
      %v2556 = vpop.f32.mrf.mxu0
      %v2557 = vadd.f32 0.0, %v2556
      %v2558 = vpop.f32.mrf.mxu0
      %2559 = vmatprep.mubr.f32.mxu0 %v2356
      %2560 = vmatmul.mubr.f32.gmra.mxu0 %v2354
      %v2561 = vpop.f32.mrf.mxu0
      %v2562 = vadd.f32 0.0, %v2561
      %v2563 = vpop.f32.mrf.mxu0
      %2564 = vmatprep.mubr.f32.mxu0 %v2360
      %2565 = vmatmul.mubr.f32.gmra.mxu0 %v2358
      %v2566 = vpop.f32.mrf.mxu0
      %v2567 = vadd.f32 0.0, %v2566
      %v2568 = vpop.f32.mrf.mxu0
      %2569 = vmatprep.mubr.f32.mxu0 %v2364
      %2570 = vmatmul.mubr.f32.gmra.mxu0 %v2362
      %v2571 = vpop.f32.mrf.mxu0
      %v2572 = vadd.f32 0.0, %v2571
      %v2573 = vpop.f32.mrf.mxu0
      %2574 = vmatprep.mubr.f32.mxu0 %v2368
      %2575 = vmatmul.mubr.f32.gmra.mxu0 %v2366
      %v2576 = vpop.f32.mrf.mxu0
      %v2577 = vadd.f32 0.0, %v2576
      %v2578 = vpop.f32.mrf.mxu0
      %2579 = vmatprep.mubr.f32.mxu0 %v2372
      %2580 = vmatmul.mubr.f32.gmra.mxu0 %v2370
      %v2581 = vpop.f32.mrf.mxu0
      %v2582 = vadd.f32 0.0, %v2581
      %v2583 = vpop.f32.mrf.mxu0
      %2584 = vmatprep.mubr.f32.mxu0 %v2376
      %2585 = vmatmul.mubr.f32.gmra.mxu0 %v2374
      %v2586 = vpop.f32.mrf.mxu0
      %v2587 = vadd.f32 0.0, %v2586
      %v2588 = vpop.f32.mrf.mxu0
      %2589 = vmatprep.mubr.f32.mxu0 %v2380
      %2590 = vmatmul.mubr.f32.gmra.mxu0 %v2378
      %v2591 = vpop.f32.mrf.mxu0
      %v2592 = vadd.f32 0.0, %v2591
      %v2593 = vpop.f32.mrf.mxu0
      %2594 = vmatprep.mubr.f32.mxu0 %v2384
      %2595 = vmatmul.mubr.f32.gmra.mxu0 %v2382
      %v2596 = vpop.f32.mrf.mxu0
      %v2597 = vadd.f32 0.0, %v2596
      %v2598 = vpop.f32.mrf.mxu0
      %2599 = vmatprep.mubr.f32.mxu0 %v2388
      %2600 = vmatmul.mubr.f32.gmra.mxu0 %v2386
      %v2601 = vpop.f32.mrf.mxu0
      %v2602 = vadd.f32 0.0, %v2601
      %v2603 = vpop.f32.mrf.mxu0
      %2604 = vmatprep.mubr.f32.mxu0 %v2392
      %2605 = vmatmul.mubr.f32.gmra.mxu0 %v2390
      %v2606 = vpop.f32.mrf.mxu0
      %v2607 = vadd.f32 0.0, %v2606
      %v2608 = vpop.f32.mrf.mxu0
      %2609 = vmatprep.mubr.f32.mxu0 %v2396
      %2610 = vmatmul.mubr.f32.gmra.mxu0 %v2394
      %v2611 = vpop.f32.mrf.mxu0
      %v2612 = vadd.f32 0.0, %v2611
      %v2613 = vpop.f32.mrf.mxu0
      %2614 = vmatprep.mubr.f32.mxu0 %v2400
      %2615 = vmatmul.mubr.f32.gmra.mxu0 %v2398
      %v2616 = vpop.f32.mrf.mxu0
      %v2617 = vadd.f32 0.0, %v2616
      %v2618 = vpop.f32.mrf.mxu0
      %2619 = vmatprep.mubr.f32.mxu0 %v2404
      %2620 = vmatmul.mubr.f32.gmra.mxu0 %v2402
      %v2621 = vpop.f32.mrf.mxu0
      %v2622 = vadd.f32 0.0, %v2621
      %v2623 = vpop.f32.mrf.mxu0
      %2624 = vmatprep.mubr.f32.mxu0 %v2408
      %2625 = vmatmul.mubr.f32.gmra.mxu0 %v2406
      %v2626 = vpop.f32.mrf.mxu0
      %v2627 = vadd.f32 0.0, %v2626
      %v2628 = vpop.f32.mrf.mxu0
      %2629 = vmatprep.mubr.f32.mxu0 %v2412
      %2630 = vmatmul.mubr.f32.gmra.mxu0 %v2410
      %v2631 = vpop.f32.mrf.mxu0
      %v2632 = vadd.f32 0.0, %v2631
      %v2633 = vpop.f32.mrf.mxu0
      %2634 = vmatprep.mubr.f32.mxu0 %v2416
      %2635 = vmatmul.mubr.f32.gmra.mxu0 %v2414
      %v2636 = vpop.f32.mrf.mxu0
      %v2637 = vadd.f32 0.0, %v2636
      %v2638 = vpop.f32.mrf.mxu0
      %2639 = vmatprep.mubr.f32.mxu0 %v2420
      %2640 = vmatmul.mubr.f32.gmra.mxu0 %v2418
      %v2641 = vpop.f32.mrf.mxu0
      %v2642 = vadd.f32 0.0, %v2641
      %v2643 = vpop.f32.mrf.mxu0
      %2644 = vmatprep.mubr.f32.mxu0 %v2424
      %2645 = vmatmul.mubr.f32.gmra.mxu0 %v2422
      %v2646 = vpop.f32.mrf.mxu0
      %v2647 = vadd.f32 0.0, %v2646
      %v2648 = vpop.f32.mrf.mxu0
      %2649 = vdwg.mxu0
      %v2650 = vsub.f32 0.0, %v2139
      %v2651 = vsub.f32 0.0, %v2142
      %v2652 = vsub.f32 0.0, %v2145
      %v2653 = vsub.f32 0.0, %v2148
      %v2654 = vsub.f32 0.0, %v2151
      %v2655 = vsub.f32 0.0, %v2154
      %v2656 = vsub.f32 0.0, %v2157
      %v2657 = vsub.f32 0.0, %v2160
      %v2658 = vsub.f32 0.0, %v2163
      %v2659 = vsub.f32 0.0, %v2166
      %v2660 = vsub.f32 0.0, %v2169
      %v2661 = vsub.f32 0.0, %v2172
      %v2662 = vsub.f32 0.0, %v2175
      %v2663 = vsub.f32 0.0, %v2178
      %v2664 = vsub.f32 0.0, %v2181
      %v2665 = vsub.f32 0.0, %v2184
      %v2666 = vsub.f32 0.0, %v2187
      %v2667 = vsub.f32 0.0, %v2190
      %v2668 = vsub.f32 0.0, %v2193
      %v2669 = vsub.f32 0.0, %v2196
      %v2670 = vsub.f32 0.0, %v2199
      %v2671 = vsub.f32 0.0, %v2202
      %v2672 = vsub.f32 0.0, %v2205
      %v2673 = vsub.f32 0.0, %v2208
      %v2674 = vsub.f32 0.0, %v2211
      %v2675 = vsub.f32 0.0, %v2214
      %v2676 = vsub.f32 0.0, %v2217
      %v2677 = vsub.f32 0.0, %v2220
      %v2678 = vsub.f32 0.0, %v2223
      %v2679 = vsub.f32 0.0, %v2226
      %v2680 = vsub.f32 0.0, %v2229
      %v2681 = vsub.f32 0.0, %v2232
      %v2682 = vmul.f32 %v2650, 1.442695
      %v2683 = vpow.pop %v2682
      %v2684 = vmul.f32 %v2651, 1.442695
      %v2685 = vpow.pop %v2684
      %v2686 = vmul.f32 %v2652, 1.442695
      %v2687 = vpow.pop %v2686
      %v2688 = vmul.f32 %v2653, 1.442695
      %v2689 = vpow.pop %v2688
      %v2690 = vmul.f32 %v2654, 1.442695
      %v2691 = vpow.pop %v2690
      %v2692 = vmul.f32 %v2655, 1.442695
      %v2693 = vpow.pop %v2692
      %v2694 = vmul.f32 %v2656, 1.442695
      %v2695 = vpow.pop %v2694
      %v2696 = vmul.f32 %v2657, 1.442695
      %v2697 = vpow.pop %v2696
      %v2698 = vmul.f32 %v2658, 1.442695
      %v2699 = vpow.pop %v2698
      %v2700 = vmul.f32 %v2659, 1.442695
      %v2701 = vpow.pop %v2700
      %v2702 = vmul.f32 %v2660, 1.442695
      %v2703 = vpow.pop %v2702
      %v2704 = vmul.f32 %v2661, 1.442695
      %v2705 = vpow.pop %v2704
      %v2706 = vmul.f32 %v2662, 1.442695
      %v2707 = vpow.pop %v2706
      %v2708 = vmul.f32 %v2663, 1.442695
      %v2709 = vpow.pop %v2708
      %v2710 = vmul.f32 %v2664, 1.442695
      %v2711 = vpow.pop %v2710
      %v2712 = vmul.f32 %v2665, 1.442695
      %v2713 = vpow.pop %v2712
      %v2714 = vmul.f32 %v2666, 1.442695
      %v2715 = vpow.pop %v2714
      %v2716 = vmul.f32 %v2667, 1.442695
      %v2717 = vpow.pop %v2716
      %v2718 = vmul.f32 %v2668, 1.442695
      %v2719 = vpow.pop %v2718
      %v2720 = vmul.f32 %v2669, 1.442695
      %v2721 = vpow.pop %v2720
      %v2722 = vmul.f32 %v2670, 1.442695
      %v2723 = vpow.pop %v2722
      %v2724 = vmul.f32 %v2671, 1.442695
      %v2725 = vpow.pop %v2724
      %v2726 = vmul.f32 %v2672, 1.442695
      %v2727 = vpow.pop %v2726
      %v2728 = vmul.f32 %v2673, 1.442695
      %v2729 = vpow.pop %v2728
      %v2730 = vmul.f32 %v2674, 1.442695
      %v2731 = vpow.pop %v2730
      %v2732 = vmul.f32 %v2675, 1.442695
      %v2733 = vpow.pop %v2732
      %v2734 = vmul.f32 %v2676, 1.442695
      %v2735 = vpow.pop %v2734
      %v2736 = vmul.f32 %v2677, 1.442695
      %v2737 = vpow.pop %v2736
      %v2738 = vmul.f32 %v2678, 1.442695
      %v2739 = vpow.pop %v2738
      %v2740 = vmul.f32 %v2679, 1.442695
      %v2741 = vpow.pop %v2740
      %v2742 = vmul.f32 %v2680, 1.442695
      %v2743 = vpow.pop %v2742
      %v2744 = vmul.f32 %v2681, 1.442695
      %v2745 = vpow.pop %v2744
      %v2746 = vmul.f32 %v2683, 56.0
      %v2747 = vmul.f32 %v2685, 56.0
      %v2748 = vmul.f32 %v2687, 56.0
      %v2749 = vmul.f32 %v2689, 56.0
      %v2750 = vmul.f32 %v2691, 56.0
      %v2751 = vmul.f32 %v2693, 56.0
      %v2752 = vmul.f32 %v2695, 56.0
      %v2753 = vmul.f32 %v2697, 56.0
      %v2754 = vmul.f32 %v2699, 56.0
      %v2755 = vmul.f32 %v2701, 56.0
      %v2756 = vmul.f32 %v2703, 56.0
      %v2757 = vmul.f32 %v2705, 56.0
      %v2758 = vmul.f32 %v2707, 56.0
      %v2759 = vmul.f32 %v2709, 56.0
      %v2760 = vmul.f32 %v2711, 56.0
      %v2761 = vmul.f32 %v2713, 56.0
      %v2762 = vmul.f32 %v2715, 56.0
      %v2763 = vmul.f32 %v2717, 56.0
      %v2764 = vmul.f32 %v2719, 56.0
      %v2765 = vmul.f32 %v2721, 56.0
      %v2766 = vmul.f32 %v2723, 56.0
      %v2767 = vmul.f32 %v2725, 56.0
      %v2768 = vmul.f32 %v2727, 56.0
      %v2769 = vmul.f32 %v2729, 56.0
      %v2770 = vmul.f32 %v2731, 56.0
      %v2771 = vmul.f32 %v2733, 56.0
      %v2772 = vmul.f32 %v2735, 56.0
      %v2773 = vmul.f32 %v2737, 56.0
      %v2774 = vmul.f32 %v2739, 56.0
      %v2775 = vmul.f32 %v2741, 56.0
      %v2776 = vmul.f32 %v2743, 56.0
      %v2777 = vmul.f32 %v2745, 56.0
      %v2778 = vsub.f32 %v2492, %v2746
      %v2779 = vsub.f32 %v2497, %v2747
      %v2780 = vsub.f32 %v2502, %v2748
      %v2781 = vsub.f32 %v2507, %v2749
      %v2782 = vsub.f32 %v2512, %v2750
      %v2783 = vsub.f32 %v2517, %v2751
      %v2784 = vsub.f32 %v2522, %v2752
      %v2785 = vsub.f32 %v2527, %v2753
      %v2786 = vsub.f32 %v2532, %v2754
      %v2787 = vsub.f32 %v2537, %v2755
      %v2788 = vsub.f32 %v2542, %v2756
      %v2789 = vsub.f32 %v2547, %v2757
      %v2790 = vsub.f32 %v2552, %v2758
      %v2791 = vsub.f32 %v2557, %v2759
      %v2792 = vsub.f32 %v2562, %v2760
      %v2793 = vsub.f32 %v2567, %v2761
      %v2794 = vsub.f32 %v2572, %v2762
      %v2795 = vsub.f32 %v2577, %v2763
      %v2796 = vsub.f32 %v2582, %v2764
      %v2797 = vsub.f32 %v2587, %v2765
      %v2798 = vsub.f32 %v2592, %v2766
      %v2799 = vsub.f32 %v2597, %v2767
      %v2800 = vsub.f32 %v2602, %v2768
      %v2801 = vsub.f32 %v2607, %v2769
      %v2802 = vsub.f32 %v2612, %v2770
      %v2803 = vsub.f32 %v2617, %v2771
      %v2804 = vsub.f32 %v2622, %v2772
      %v2805 = vsub.f32 %v2627, %v2773
      %v2806 = vsub.f32 %v2632, %v2774
      %v2807 = vsub.f32 %v2637, %v2775
      %v2808 = vsub.f32 %v2642, %v2776
      %v2809 = vsub.f32 %v2647, %v2777
      %v2810 = vmax.f32 %v2778, 1.1754944e-38
      %v2811 = vmax.f32 %v2779, 1.1754944e-38
      %v2812 = vmax.f32 %v2780, 1.1754944e-38
      %v2813 = vmax.f32 %v2781, 1.1754944e-38
      %v2814 = vmax.f32 %v2782, 1.1754944e-38
      %v2815 = vmax.f32 %v2783, 1.1754944e-38
      %v2816 = vmax.f32 %v2784, 1.1754944e-38
      %v2817 = vmax.f32 %v2785, 1.1754944e-38
      %v2818 = vmax.f32 %v2786, 1.1754944e-38
      %v2819 = vmax.f32 %v2787, 1.1754944e-38
      %v2820 = vmax.f32 %v2788, 1.1754944e-38
      %v2821 = vmax.f32 %v2789, 1.1754944e-38
      %v2822 = vmax.f32 %v2790, 1.1754944e-38
      %v2823 = vmax.f32 %v2791, 1.1754944e-38
      %v2824 = vmax.f32 %v2792, 1.1754944e-38
      %v2825 = vmax.f32 %v2793, 1.1754944e-38
      %v2826 = vmax.f32 %v2794, 1.1754944e-38
      %v2827 = vmax.f32 %v2795, 1.1754944e-38
      %v2828 = vmax.f32 %v2796, 1.1754944e-38
      %v2829 = vmax.f32 %v2797, 1.1754944e-38
      %v2830 = vmax.f32 %v2798, 1.1754944e-38
      %v2831 = vmax.f32 %v2799, 1.1754944e-38
      %v2832 = vmax.f32 %v2800, 1.1754944e-38
      %v2833 = vmax.f32 %v2801, 1.1754944e-38
      %v2834 = vmax.f32 %v2802, 1.1754944e-38
      %v2835 = vmax.f32 %v2803, 1.1754944e-38
      %v2836 = vmax.f32 %v2804, 1.1754944e-38
      %v2837 = vmax.f32 %v2805, 1.1754944e-38
      %v2838 = vmax.f32 %v2806, 1.1754944e-38
      %v2839 = vmax.f32 %v2807, 1.1754944e-38
      %v2840 = vmax.f32 %v2808, 1.1754944e-38
      %v2841 = vmax.f32 %v2809, 1.1754944e-38
      %v2842 = vlog2.pop %v2810
      %v2843 = vmul.f32 %v2842, 0.6931472
      %v2844 = vlog2.pop %v2811
      %v2845 = vmul.f32 %v2844, 0.6931472
      %v2846 = vlog2.pop %v2812
      %v2847 = vmul.f32 %v2846, 0.6931472
      %v2848 = vlog2.pop %v2813
      %v2849 = vmul.f32 %v2848, 0.6931472
      %v2850 = vlog2.pop %v2814
      %v2851 = vmul.f32 %v2850, 0.6931472
      %v2852 = vlog2.pop %v2815
      %v2853 = vmul.f32 %v2852, 0.6931472
      %v2854 = vlog2.pop %v2816
      %v2855 = vmul.f32 %v2854, 0.6931472
      %v2856 = vlog2.pop %v2817
      %v2857 = vmul.f32 %v2856, 0.6931472
      %v2858 = vlog2.pop %v2818
      %v2859 = vmul.f32 %v2858, 0.6931472
      %v2860 = vlog2.pop %v2819
      %v2861 = vmul.f32 %v2860, 0.6931472
      %v2862 = vlog2.pop %v2820
      %v2863 = vmul.f32 %v2862, 0.6931472
      %v2864 = vlog2.pop %v2821
      %v2865 = vmul.f32 %v2864, 0.6931472
      %v2866 = vlog2.pop %v2822
      %v2867 = vmul.f32 %v2866, 0.6931472
      %v2868 = vlog2.pop %v2823
      %v2869 = vmul.f32 %v2868, 0.6931472
      %v2870 = vlog2.pop %v2824
      %v2871 = vmul.f32 %v2870, 0.6931472
      %v2872 = vlog2.pop %v2825
      %v2873 = vmul.f32 %v2872, 0.6931472
      %v2874 = vlog2.pop %v2826
      %v2875 = vmul.f32 %v2874, 0.6931472
      %v2876 = vlog2.pop %v2827
      %v2877 = vmul.f32 %v2876, 0.6931472
      %v2878 = vlog2.pop %v2828
      %v2879 = vmul.f32 %v2878, 0.6931472
      %v2880 = vlog2.pop %v2829
      %v2881 = vmul.f32 %v2880, 0.6931472
      %v2882 = vlog2.pop %v2830
      %v2883 = vmul.f32 %v2882, 0.6931472
      %v2884 = vlog2.pop %v2831
      %v2885 = vmul.f32 %v2884, 0.6931472
      %v2886 = vlog2.pop %v2832
      %v2887 = vmul.f32 %v2886, 0.6931472
      %v2888 = vlog2.pop %v2833
      %v2889 = vmul.f32 %v2888, 0.6931472
      %v2890 = vlog2.pop %v2834
      %v2891 = vmul.f32 %v2890, 0.6931472
      %v2892 = vlog2.pop %v2835
      %v2893 = vmul.f32 %v2892, 0.6931472
      %v2894 = vlog2.pop %v2836
      %v2895 = vmul.f32 %v2894, 0.6931472
      %v2896 = vlog2.pop %v2837
      %v2897 = vmul.f32 %v2896, 0.6931472
      %v2898 = vlog2.pop %v2838
      %v2899 = vmul.f32 %v2898, 0.6931472
      %v2900 = vlog2.pop %v2839
      %v2901 = vmul.f32 %v2900, 0.6931472
      %v2902 = vlog2.pop %v2840
      %v2903 = vmul.f32 %v2902, 0.6931472
      %v2904 = vlog2.pop %v2841
      %v2905 = vmul.f32 %v2904, 0.6931472
      %v2906 = vadd.f32 %v2843, %v2139
      %v2907 = vadd.f32 %v2845, %v2142
      %v2908 = vadd.f32 %v2847, %v2145
      %v2909 = vadd.f32 %v2849, %v2148
      %v2910 = vadd.f32 %v2851, %v2151
      %v2911 = vadd.f32 %v2853, %v2154
      %v2912 = vadd.f32 %v2855, %v2157
      %v2913 = vadd.f32 %v2857, %v2160
      %v2914 = vadd.f32 %v2859, %v2163
      %v2915 = vadd.f32 %v2861, %v2166
      %v2916 = vadd.f32 %v2863, %v2169
      %v2917 = vadd.f32 %v2865, %v2172
      %v2918 = vadd.f32 %v2867, %v2175
      %v2919 = vadd.f32 %v2869, %v2178
      %v2920 = vadd.f32 %v2871, %v2181
      %v2921 = vadd.f32 %v2873, %v2184
      %v2922 = vadd.f32 %v2875, %v2187
      %v2923 = vadd.f32 %v2877, %v2190
      %v2924 = vadd.f32 %v2879, %v2193
      %v2925 = vadd.f32 %v2881, %v2196
      %v2926 = vadd.f32 %v2883, %v2199
      %v2927 = vadd.f32 %v2885, %v2202
      %v2928 = vadd.f32 %v2887, %v2205
      %v2929 = vadd.f32 %v2889, %v2208
      %v2930 = vadd.f32 %v2891, %v2211
      %v2931 = vadd.f32 %v2893, %v2214
      %v2932 = vadd.f32 %v2895, %v2217
      %v2933 = vadd.f32 %v2897, %v2220
      %v2934 = vadd.f32 %v2899, %v2223
      %v2935 = vadd.f32 %v2901, %v2226
      %v2936 = vadd.f32 %v2903, %v2229
      %v2937 = vadd.f32 %v2905, %v2232
      %v2938 = vmax.f32 %v2139, %v2151
      %v2939 = vmax.f32 %v2142, %v2154
      %v2940 = vmax.f32 %v2145, %v2157
      %v2941 = vmax.f32 %v2148, %v2160
      %v2942 = vmax.f32 %v2938, %v2163
      %v2943 = vmax.f32 %v2939, %v2166
      %v2944 = vmax.f32 %v2940, %v2169
      %v2945 = vmax.f32 %v2941, %v2172
      %v2946 = vmax.f32 %v2942, %v2175
      %v2947 = vmax.f32 %v2943, %v2178
      %v2948 = vmax.f32 %v2944, %v2181
      %v2949 = vmax.f32 %v2945, %v2184
      %v2950 = vmax.f32 %v2946, %v2187
      %v2951 = vmax.f32 %v2947, %v2190
      %v2952 = vmax.f32 %v2948, %v2193
      %v2953 = vmax.f32 %v2949, %v2196
      %v2954 = vmax.f32 %v2950, %v2199
      %v2955 = vmax.f32 %v2951, %v2202
      %v2956 = vmax.f32 %v2952, %v2205
      %v2957 = vmax.f32 %v2953, %v2208
      %v2958 = vmax.f32 %v2954, %v2211
      %v2959 = vmax.f32 %v2955, %v2214
      %v2960 = vmax.f32 %v2956, %v2217
      %v2961 = vmax.f32 %v2957, %v2220
      %v2962 = vmax.f32 %v2958, %v2223
      %v2963 = vmax.f32 %v2959, %v2226
      %v2964 = vmax.f32 %v2960, %v2229
      %v2965 = vmax.f32 %v2961, %v2232
      %v2966 = vmax.f32 %v2962, %v2963
      %v2967 = vmax.f32 %v2964, %v2965
      %v2968 = vmax.f32 %v2966, %v2967
      %v2969 = vrot.slane %v2968, 4
      %v2970 = vmax.f32 %v2968, %v2969
      %v2971 = vrot.slane %v2970, 2
      %v2972 = vmax.f32 %v2970, %v2971
      %v2973 = vrot.slane %v2972, 1
      %v2974 = vmax.f32 %v2972, %v2973
      %s2975 = vtos %v2974
      %v2976 = vstv %s2975
      %v2977 = vsub.f32 %v2139, %v2976
      %v2978 = vsub.f32 %v2142, %v2976
      %v2979 = vsub.f32 %v2145, %v2976
      %v2980 = vsub.f32 %v2148, %v2976
      %v2981 = vsub.f32 %v2151, %v2976
      %v2982 = vsub.f32 %v2154, %v2976
      %v2983 = vsub.f32 %v2157, %v2976
      %v2984 = vsub.f32 %v2160, %v2976
      %v2985 = vsub.f32 %v2163, %v2976
      %v2986 = vsub.f32 %v2166, %v2976
      %v2987 = vsub.f32 %v2169, %v2976
      %v2988 = vsub.f32 %v2172, %v2976
      %v2989 = vsub.f32 %v2175, %v2976
      %v2990 = vsub.f32 %v2178, %v2976
      %v2991 = vsub.f32 %v2181, %v2976
      %v2992 = vsub.f32 %v2184, %v2976
      %v2993 = vsub.f32 %v2187, %v2976
      %v2994 = vsub.f32 %v2190, %v2976
      %v2995 = vsub.f32 %v2193, %v2976
      %v2996 = vsub.f32 %v2196, %v2976
      %v2997 = vsub.f32 %v2199, %v2976
      %v2998 = vsub.f32 %v2202, %v2976
      %v2999 = vsub.f32 %v2205, %v2976
      %v3000 = vsub.f32 %v2208, %v2976
      %v3001 = vsub.f32 %v2211, %v2976
      %v3002 = vsub.f32 %v2214, %v2976
      %v3003 = vsub.f32 %v2217, %v2976
      %v3004 = vsub.f32 %v2220, %v2976
      %v3005 = vsub.f32 %v2223, %v2976
      %v3006 = vsub.f32 %v2226, %v2976
      %v3007 = vsub.f32 %v2229, %v2976
      %v3008 = vsub.f32 %v2232, %v2976
      %v3009 = vmul.f32 %v2977, 1.442695
      %v3010 = vpow.pop %v3009
      %v3011 = vmul.f32 %v2978, 1.442695
      %v3012 = vpow.pop %v3011
      %v3013 = vmul.f32 %v2979, 1.442695
      %v3014 = vpow.pop %v3013
      %v3015 = vmul.f32 %v2980, 1.442695
      %v3016 = vpow.pop %v3015
      %v3017 = vmul.f32 %v2981, 1.442695
      %v3018 = vpow.pop %v3017
      %v3019 = vmul.f32 %v2982, 1.442695
      %v3020 = vpow.pop %v3019
      %v3021 = vmul.f32 %v2983, 1.442695
      %v3022 = vpow.pop %v3021
      %v3023 = vmul.f32 %v2984, 1.442695
      %v3024 = vpow.pop %v3023
      %v3025 = vmul.f32 %v2985, 1.442695
      %v3026 = vpow.pop %v3025
      %v3027 = vmul.f32 %v2986, 1.442695
      %v3028 = vpow.pop %v3027
      %v3029 = vmul.f32 %v2987, 1.442695
      %v3030 = vpow.pop %v3029
      %v3031 = vmul.f32 %v2988, 1.442695
      %v3032 = vpow.pop %v3031
      %v3033 = vmul.f32 %v2989, 1.442695
      %v3034 = vpow.pop %v3033
      %v3035 = vmul.f32 %v2990, 1.442695
      %v3036 = vpow.pop %v3035
      %v3037 = vmul.f32 %v2991, 1.442695
      %v3038 = vpow.pop %v3037
      %v3039 = vmul.f32 %v2992, 1.442695
      %v3040 = vpow.pop %v3039
      %v3041 = vmul.f32 %v2993, 1.442695
      %v3042 = vpow.pop %v3041
      %v3043 = vmul.f32 %v2994, 1.442695
      %v3044 = vpow.pop %v3043
      %v3045 = vmul.f32 %v2995, 1.442695
      %v3046 = vpow.pop %v3045
      %v3047 = vmul.f32 %v2996, 1.442695
      %v3048 = vpow.pop %v3047
      %v3049 = vmul.f32 %v2997, 1.442695
      %v3050 = vpow.pop %v3049
      %v3051 = vmul.f32 %v2998, 1.442695
      %v3052 = vpow.pop %v3051
      %v3053 = vmul.f32 %v2999, 1.442695
      %v3054 = vpow.pop %v3053
      %v3055 = vmul.f32 %v3000, 1.442695
      %v3056 = vpow.pop %v3055
      %v3057 = vmul.f32 %v3001, 1.442695
      %v3058 = vpow.pop %v3057
      %v3059 = vmul.f32 %v3002, 1.442695
      %v3060 = vpow.pop %v3059
      %v3061 = vmul.f32 %v3003, 1.442695
      %v3062 = vpow.pop %v3061
      %v3063 = vmul.f32 %v3004, 1.442695
      %v3064 = vpow.pop %v3063
      %v3065 = vmul.f32 %v3005, 1.442695
      %v3066 = vpow.pop %v3065
      %v3067 = vmul.f32 %v3006, 1.442695
      %v3068 = vpow.pop %v3067
      %v3069 = vmul.f32 %v3007, 1.442695
      %v3070 = vpow.pop %v3069
      %v3071 = vmul.f32 %v3008, 1.442695
      %v3072 = vpow.pop %v3071
      %v3073 = vmul.f32 %v2298, %v3010
      %v3074 = vmul.f32 %v2300, %v3010
      %v3075 = vmul.f32 %v2302, %v3012
      %v3076 = vmul.f32 %v2304, %v3012
      %v3077 = vmul.f32 %v2306, %v3014
      %v3078 = vmul.f32 %v2308, %v3014
      %v3079 = vmul.f32 %v2310, %v3016
      %v3080 = vmul.f32 %v2312, %v3016
      %v3081 = vmul.f32 %v2314, %v3018
      %v3082 = vmul.f32 %v2316, %v3018
      %v3083 = vmul.f32 %v2318, %v3020
      %v3084 = vmul.f32 %v2320, %v3020
      %v3085 = vmul.f32 %v2322, %v3022
      %v3086 = vmul.f32 %v2324, %v3022
      %v3087 = vmul.f32 %v2326, %v3024
      %v3088 = vmul.f32 %v2328, %v3024
      %v3089 = vmul.f32 %v2330, %v3026
      %v3090 = vmul.f32 %v2332, %v3026
      %v3091 = vmul.f32 %v2334, %v3028
      %v3092 = vmul.f32 %v2336, %v3028
      %v3093 = vmul.f32 %v2338, %v3030
      %v3094 = vmul.f32 %v2340, %v3030
      %v3095 = vmul.f32 %v2342, %v3032
      %v3096 = vmul.f32 %v2344, %v3032
      %v3097 = vmul.f32 %v2346, %v3034
      %v3098 = vmul.f32 %v2348, %v3034
      %v3099 = vmul.f32 %v2350, %v3036
      %v3100 = vmul.f32 %v2352, %v3036
      %v3101 = vmul.f32 %v2354, %v3038
      %v3102 = vmul.f32 %v2356, %v3038
      %v3103 = vmul.f32 %v2358, %v3040
      %v3104 = vmul.f32 %v2360, %v3040
      %v3105 = vmul.f32 %v2362, %v3042
      %v3106 = vmul.f32 %v2364, %v3042
      %v3107 = vmul.f32 %v2366, %v3044
      %v3108 = vmul.f32 %v2368, %v3044
      %v3109 = vmul.f32 %v2370, %v3046
      %v3110 = vmul.f32 %v2372, %v3046
      %v3111 = vmul.f32 %v2374, %v3048
      %v3112 = vmul.f32 %v2376, %v3048
      %v3113 = vmul.f32 %v2378, %v3050
      %v3114 = vmul.f32 %v2380, %v3050
      %v3115 = vmul.f32 %v2382, %v3052
      %v3116 = vmul.f32 %v2384, %v3052
      %v3117 = vmul.f32 %v2386, %v3054
      %v3118 = vmul.f32 %v2388, %v3054
      %v3119 = vmul.f32 %v2390, %v3056
      %v3120 = vmul.f32 %v2392, %v3056
      %v3121 = vmul.f32 %v2394, %v3058
      %v3122 = vmul.f32 %v2396, %v3058
      %v3123 = vmul.f32 %v2398, %v3060
      %v3124 = vmul.f32 %v2400, %v3060
      %v3125 = vmul.f32 %v2402, %v3062
      %v3126 = vmul.f32 %v2404, %v3062
      %v3127 = vmul.f32 %v2406, %v3064
      %v3128 = vmul.f32 %v2408, %v3064
      %v3129 = vmul.f32 %v2410, %v3066
      %v3130 = vmul.f32 %v2412, %v3066
      %v3131 = vmul.f32 %v2414, %v3068
      %v3132 = vmul.f32 %v2416, %v3068
      %v3133 = vmul.f32 %v2418, %v3070
      %v3134 = vmul.f32 %v2420, %v3070
      %v3135 = vmul.f32 %v2422, %v3072
      %v3136 = vmul.f32 %v2424, %v3072
      %3137 = vmatprep.subr.mxu0 %v3104
      %3138 = vmatpush1.msra.mxu0 %v3103
      %3139 = vmatprep.subr.mxu0 %v3102
      %3140 = vmatpush1.msra.mxu0 %v3101
      %3141 = vmatprep.subr.mxu0 %v3100
      %3142 = vmatpush1.msra.mxu0 %v3099
      %3143 = vmatprep.subr.mxu0 %v3098
      %3144 = vmatpush1.msra.mxu0 %v3097
      %3145 = vmatprep.subr.mxu0 %v3096
      %3146 = vmatpush1.msra.mxu0 %v3095
      %3147 = vmatprep.subr.mxu0 %v3094
      %3148 = vmatpush1.msra.mxu0 %v3093
      %3149 = vmatprep.subr.mxu0 %v3092
      %3150 = vmatpush1.msra.mxu0 %v3091
      %3151 = vmatprep.subr.mxu0 %v3090
      %3152 = vmatpush1.msra.mxu0 %v3089
      %3153 = vmatprep.subr.mxu0 %v3088
      %3154 = vmatpush1.msra.mxu0 %v3087
      %3155 = vmatprep.subr.mxu0 %v3086
      %3156 = vmatpush1.msra.mxu0 %v3085
      %3157 = vmatprep.subr.mxu0 %v3084
      %3158 = vmatpush1.msra.mxu0 %v3083
      %3159 = vmatprep.subr.mxu0 %v3082
      %3160 = vmatpush1.msra.mxu0 %v3081
      %3161 = vmatprep.subr.mxu0 %v3080
      %3162 = vmatpush1.msra.mxu0 %v3079
      %3163 = vmatprep.subr.mxu0 %v3078
      %3164 = vmatpush1.msra.mxu0 %v3077
      %3165 = vmatprep.subr.mxu0 %v3076
      %3166 = vmatpush1.msra.mxu0 %v3075
      %3167 = vmatprep.subr.mxu0 %v3074
      %3168 = vmatpush1.msra.mxu0 %v3073
      %3169 = vmatprep.subr.mxu0 %v3136
      %3170 = vmatpush2.msra.mxu0 %v3135
      %3171 = vmatprep.subr.mxu0 %v3134
      %3172 = vmatpush2.msra.mxu0 %v3133
      %3173 = vmatprep.subr.mxu0 %v3132
      %3174 = vmatpush2.msra.mxu0 %v3131
      %3175 = vmatprep.subr.mxu0 %v3130
      %3176 = vmatpush2.msra.mxu0 %v3129
      %3177 = vmatprep.subr.mxu0 %v3128
      %3178 = vmatpush2.msra.mxu0 %v3127
      %3179 = vmatprep.subr.mxu0 %v3126
      %3180 = vmatpush2.msra.mxu0 %v3125
      %3181 = vmatprep.subr.mxu0 %v3124
      %3182 = vmatpush2.msra.mxu0 %v3123
      %3183 = vmatprep.subr.mxu0 %v3122
      %3184 = vmatpush2.msra.mxu0 %v3121
      %3185 = vmatprep.subr.mxu0 %v3120
      %3186 = vmatpush2.msra.mxu0 %v3119
      %3187 = vmatprep.subr.mxu0 %v3118
      %3188 = vmatpush2.msra.mxu0 %v3117
      %3189 = vmatprep.subr.mxu0 %v3116
      %3190 = vmatpush2.msra.mxu0 %v3115
      %3191 = vmatprep.subr.mxu0 %v3114
      %3192 = vmatpush2.msra.mxu0 %v3113
      %3193 = vmatprep.subr.mxu0 %v3112
      %3194 = vmatpush2.msra.mxu0 %v3111
      %3195 = vmatprep.subr.mxu0 %v3110
      %3196 = vmatpush2.msra.mxu0 %v3109
      %3197 = vmatprep.subr.mxu0 %v3108
      %3198 = vmatpush2.msra.mxu0 %v3107
      %3199 = vmatprep.subr.mxu0 %v3106
      %3200 = vmatpush2.msra.mxu0 %v3105
      %3201 = vmatprep.mubr.f32.mxu0 1.0
      %3202 = vmatmul.mubr.f32.gmra.mxu0 1.0
      %v3203 = vpop.f32.mrf.mxu0
      %v3204 = vadd.f32 0.0, %v3203
      %v3205 = vpop.f32.mrf.mxu0
      %v3206 = vadd.f32 0.0, %v3205
      %3207 = vdwg.mxu0
      %v3208 = vmax.f32 %v2073, %v2074
      %3209 = vmax.xlane.f32.xlu0 %v3208
      %v3210 = vpop.xlane.xlu0 %3209
      %v3211 = vmax.f32 %v2075, %v2076
      %3212 = vmax.xlane.f32.xlu0 %v3211
      %v3213 = vpop.xlane.xlu0 %3212
      %v3214 = vmax.f32 %v2077, %v2078
      %3215 = vmax.xlane.f32.xlu0 %v3214
      %v3216 = vpop.xlane.xlu0 %3215
      %v3217 = vmax.f32 %v2079, %v2080
      %3218 = vmax.xlane.f32.xlu0 %v3217
      %v3219 = vpop.xlane.xlu0 %3218
      %v3220 = vmax.f32 %v2081, %v2082
      %3221 = vmax.xlane.f32.xlu0 %v3220
      %v3222 = vpop.xlane.xlu0 %3221
      %v3223 = vmax.f32 %v2083, %v2084
      %3224 = vmax.xlane.f32.xlu0 %v3223
      %v3225 = vpop.xlane.xlu0 %3224
      %v3226 = vmax.f32 %v2085, %v2086
      %3227 = vmax.xlane.f32.xlu0 %v3226
      %v3228 = vpop.xlane.xlu0 %3227
      %v3229 = vmax.f32 %v2087, %v2088
      %3230 = vmax.xlane.f32.xlu0 %v3229
      %v3231 = vpop.xlane.xlu0 %3230
      %v3232 = vmax.f32 %v2089, %v2090
      %3233 = vmax.xlane.f32.xlu0 %v3232
      %v3234 = vpop.xlane.xlu0 %3233
      %v3235 = vmax.f32 %v2091, %v2092
      %3236 = vmax.xlane.f32.xlu0 %v3235
      %v3237 = vpop.xlane.xlu0 %3236
      %v3238 = vmax.f32 %v2093, %v2094
      %3239 = vmax.xlane.f32.xlu0 %v3238
      %v3240 = vpop.xlane.xlu0 %3239
      %v3241 = vmax.f32 %v2095, %v2096
      %3242 = vmax.xlane.f32.xlu0 %v3241
      %v3243 = vpop.xlane.xlu0 %3242
      %v3244 = vmax.f32 %v2097, %v2098
      %3245 = vmax.xlane.f32.xlu0 %v3244
      %v3246 = vpop.xlane.xlu0 %3245
      %v3247 = vmax.f32 %v2099, %v2100
      %3248 = vmax.xlane.f32.xlu0 %v3247
      %v3249 = vpop.xlane.xlu0 %3248
      %v3250 = vmax.f32 %v2101, %v2102
      %3251 = vmax.xlane.f32.xlu0 %v3250
      %v3252 = vpop.xlane.xlu0 %3251
      %v3253 = vmax.f32 %v2103, %v2104
      %3254 = vmax.xlane.f32.xlu0 %v3253
      %v3255 = vpop.xlane.xlu0 %3254
      %v3256 = vmax.f32 %v2105, %v2106
      %3257 = vmax.xlane.f32.xlu0 %v3256
      %v3258 = vpop.xlane.xlu0 %3257
      %v3259 = vmax.f32 %v2107, %v2108
      %3260 = vmax.xlane.f32.xlu0 %v3259
      %v3261 = vpop.xlane.xlu0 %3260
      %v3262 = vmax.f32 %v2109, %v2110
      %3263 = vmax.xlane.f32.xlu0 %v3262
      %v3264 = vpop.xlane.xlu0 %3263
      %v3265 = vmax.f32 %v2111, %v2112
      %3266 = vmax.xlane.f32.xlu0 %v3265
      %v3267 = vpop.xlane.xlu0 %3266
      %v3268 = vmax.f32 %v2113, %v2114
      %3269 = vmax.xlane.f32.xlu0 %v3268
      %v3270 = vpop.xlane.xlu0 %3269
      %v3271 = vmax.f32 %v2115, %v2116
      %3272 = vmax.xlane.f32.xlu0 %v3271
      %v3273 = vpop.xlane.xlu0 %3272
      %v3274 = vmax.f32 %v2117, %v2118
      %3275 = vmax.xlane.f32.xlu0 %v3274
      %v3276 = vpop.xlane.xlu0 %3275
      %v3277 = vmax.f32 %v2119, %v2120
      %3278 = vmax.xlane.f32.xlu0 %v3277
      %v3279 = vpop.xlane.xlu0 %3278
      %v3280 = vmax.f32 %v2121, %v2122
      %3281 = vmax.xlane.f32.xlu0 %v3280
      %v3282 = vpop.xlane.xlu0 %3281
      %v3283 = vmax.f32 %v2123, %v2124
      %3284 = vmax.xlane.f32.xlu0 %v3283
      %v3285 = vpop.xlane.xlu0 %3284
      %v3286 = vmax.f32 %v2125, %v2126
      %3287 = vmax.xlane.f32.xlu0 %v3286
      %v3288 = vpop.xlane.xlu0 %3287
      %v3289 = vmax.f32 %v2127, %v2128
      %3290 = vmax.xlane.f32.xlu0 %v3289
      %v3291 = vpop.xlane.xlu0 %3290
      %v3292 = vmax.f32 %v2129, %v2130
      %3293 = vmax.xlane.f32.xlu0 %v3292
      %v3294 = vpop.xlane.xlu0 %3293
      %v3295 = vmax.f32 %v2131, %v2132
      %3296 = vmax.xlane.f32.xlu0 %v3295
      %v3297 = vpop.xlane.xlu0 %3296
      %v3298 = vmax.f32 %v2133, %v2134
      %3299 = vmax.xlane.f32.xlu0 %v3298
      %v3300 = vpop.xlane.xlu0 %3299
      %v3301 = vmax.f32 %v2135, %v2136
      %3302 = vmax.xlane.f32.xlu0 %v3301
      %v3303 = vpop.xlane.xlu0 %3302
      %v3304 = vsub.f32 %v2073, %v3210
      %v3305 = vsub.f32 %v2074, %v3210
      %v3306 = vsub.f32 %v2075, %v3213
      %v3307 = vsub.f32 %v2076, %v3213
      %v3308 = vsub.f32 %v2077, %v3216
      %v3309 = vsub.f32 %v2078, %v3216
      %v3310 = vsub.f32 %v2079, %v3219
      %v3311 = vsub.f32 %v2080, %v3219
      %v3312 = vsub.f32 %v2081, %v3222
      %v3313 = vsub.f32 %v2082, %v3222
      %v3314 = vsub.f32 %v2083, %v3225
      %v3315 = vsub.f32 %v2084, %v3225
      %v3316 = vsub.f32 %v2085, %v3228
      %v3317 = vsub.f32 %v2086, %v3228
      %v3318 = vsub.f32 %v2087, %v3231
      %v3319 = vsub.f32 %v2088, %v3231
      %v3320 = vsub.f32 %v2089, %v3234
      %v3321 = vsub.f32 %v2090, %v3234
      %v3322 = vsub.f32 %v2091, %v3237
      %v3323 = vsub.f32 %v2092, %v3237
      %v3324 = vsub.f32 %v2093, %v3240
      %v3325 = vsub.f32 %v2094, %v3240
      %v3326 = vsub.f32 %v2095, %v3243
      %v3327 = vsub.f32 %v2096, %v3243
      %v3328 = vsub.f32 %v2097, %v3246
      %v3329 = vsub.f32 %v2098, %v3246
      %v3330 = vsub.f32 %v2099, %v3249
      %v3331 = vsub.f32 %v2100, %v3249
      %v3332 = vsub.f32 %v2101, %v3252
      %v3333 = vsub.f32 %v2102, %v3252
      %v3334 = vsub.f32 %v2103, %v3255
      %v3335 = vsub.f32 %v2104, %v3255
      %v3336 = vsub.f32 %v2105, %v3258
      %v3337 = vsub.f32 %v2106, %v3258
      %v3338 = vsub.f32 %v2107, %v3261
      %v3339 = vsub.f32 %v2108, %v3261
      %v3340 = vsub.f32 %v2109, %v3264
      %v3341 = vsub.f32 %v2110, %v3264
      %v3342 = vsub.f32 %v2111, %v3267
      %v3343 = vsub.f32 %v2112, %v3267
      %v3344 = vsub.f32 %v2113, %v3270
      %v3345 = vsub.f32 %v2114, %v3270
      %v3346 = vsub.f32 %v2115, %v3273
      %v3347 = vsub.f32 %v2116, %v3273
      %v3348 = vsub.f32 %v2117, %v3276
      %v3349 = vsub.f32 %v2118, %v3276
      %v3350 = vsub.f32 %v2119, %v3279
      %v3351 = vsub.f32 %v2120, %v3279
      %v3352 = vsub.f32 %v2121, %v3282
      %v3353 = vsub.f32 %v2122, %v3282
      %v3354 = vsub.f32 %v2123, %v3285
      %v3355 = vsub.f32 %v2124, %v3285
      %v3356 = vsub.f32 %v2125, %v3288
      %v3357 = vsub.f32 %v2126, %v3288
      %v3358 = vsub.f32 %v2127, %v3291
      %v3359 = vsub.f32 %v2128, %v3291
      %v3360 = vsub.f32 %v2129, %v3294
      %v3361 = vsub.f32 %v2130, %v3294
      %v3362 = vsub.f32 %v2131, %v3297
      %v3363 = vsub.f32 %v2132, %v3297
      %v3364 = vsub.f32 %v2133, %v3300
      %v3365 = vsub.f32 %v2134, %v3300
      %v3366 = vsub.f32 %v2135, %v3303
      %v3367 = vsub.f32 %v2136, %v3303
      %v3368 = vmul.f32 %v3304, 1.442695
      %v3369 = vpow.pop %v3368
      %v3370 = vmul.f32 %v3305, 1.442695
      %v3371 = vpow.pop %v3370
      %v3372 = vmul.f32 %v3306, 1.442695
      %v3373 = vpow.pop %v3372
      %v3374 = vmul.f32 %v3307, 1.442695
      %v3375 = vpow.pop %v3374
      %v3376 = vmul.f32 %v3308, 1.442695
      %v3377 = vpow.pop %v3376
      %v3378 = vmul.f32 %v3309, 1.442695
      %v3379 = vpow.pop %v3378
      %v3380 = vmul.f32 %v3310, 1.442695
      %v3381 = vpow.pop %v3380
      %v3382 = vmul.f32 %v3311, 1.442695
      %v3383 = vpow.pop %v3382
      %v3384 = vmul.f32 %v3312, 1.442695
      %v3385 = vpow.pop %v3384
      %v3386 = vmul.f32 %v3313, 1.442695
      %v3387 = vpow.pop %v3386
      %v3388 = vmul.f32 %v3314, 1.442695
      %v3389 = vpow.pop %v3388
      %v3390 = vmul.f32 %v3315, 1.442695
      %v3391 = vpow.pop %v3390
      %v3392 = vmul.f32 %v3316, 1.442695
      %v3393 = vpow.pop %v3392
      %v3394 = vmul.f32 %v3317, 1.442695
      %v3395 = vpow.pop %v3394
      %v3396 = vmul.f32 %v3318, 1.442695
      %v3397 = vpow.pop %v3396
      %v3398 = vmul.f32 %v3319, 1.442695
      %v3399 = vpow.pop %v3398
      %v3400 = vmul.f32 %v3320, 1.442695
      %v3401 = vpow.pop %v3400
      %v3402 = vmul.f32 %v3321, 1.442695
      %v3403 = vpow.pop %v3402
      %v3404 = vmul.f32 %v3322, 1.442695
      %v3405 = vpow.pop %v3404
      %v3406 = vmul.f32 %v3323, 1.442695
      %v3407 = vpow.pop %v3406
      %v3408 = vmul.f32 %v3324, 1.442695
      %v3409 = vpow.pop %v3408
      %v3410 = vmul.f32 %v3325, 1.442695
      %v3411 = vpow.pop %v3410
      %v3412 = vmul.f32 %v3326, 1.442695
      %v3413 = vpow.pop %v3412
      %v3414 = vmul.f32 %v3327, 1.442695
      %v3415 = vpow.pop %v3414
      %v3416 = vmul.f32 %v3328, 1.442695
      %v3417 = vpow.pop %v3416
      %v3418 = vmul.f32 %v3329, 1.442695
      %v3419 = vpow.pop %v3418
      %v3420 = vmul.f32 %v3330, 1.442695
      %v3421 = vpow.pop %v3420
      %v3422 = vmul.f32 %v3331, 1.442695
      %v3423 = vpow.pop %v3422
      %v3424 = vmul.f32 %v3332, 1.442695
      %v3425 = vpow.pop %v3424
      %v3426 = vmul.f32 %v3333, 1.442695
      %v3427 = vpow.pop %v3426
      %v3428 = vmul.f32 %v3334, 1.442695
      %v3429 = vpow.pop %v3428
      %v3430 = vmul.f32 %v3335, 1.442695
      %v3431 = vpow.pop %v3430
      %v3432 = vmul.f32 %v3336, 1.442695
      %v3433 = vpow.pop %v3432
      %v3434 = vmul.f32 %v3337, 1.442695
      %v3435 = vpow.pop %v3434
      %v3436 = vmul.f32 %v3338, 1.442695
      %v3437 = vpow.pop %v3436
      %v3438 = vmul.f32 %v3339, 1.442695
      %v3439 = vpow.pop %v3438
      %v3440 = vmul.f32 %v3340, 1.442695
      %v3441 = vpow.pop %v3440
      %v3442 = vmul.f32 %v3341, 1.442695
      %v3443 = vpow.pop %v3442
      %v3444 = vmul.f32 %v3342, 1.442695
      %v3445 = vpow.pop %v3444
      %v3446 = vmul.f32 %v3343, 1.442695
      %v3447 = vpow.pop %v3446
      %v3448 = vmul.f32 %v3344, 1.442695
      %v3449 = vpow.pop %v3448
      %v3450 = vmul.f32 %v3345, 1.442695
      %v3451 = vpow.pop %v3450
      %v3452 = vmul.f32 %v3346, 1.442695
      %v3453 = vpow.pop %v3452
      %v3454 = vmul.f32 %v3347, 1.442695
      %v3455 = vpow.pop %v3454
      %v3456 = vmul.f32 %v3348, 1.442695
      %v3457 = vpow.pop %v3456
      %v3458 = vmul.f32 %v3349, 1.442695
      %v3459 = vpow.pop %v3458
      %v3460 = vmul.f32 %v3350, 1.442695
      %v3461 = vpow.pop %v3460
      %v3462 = vmul.f32 %v3351, 1.442695
      %v3463 = vpow.pop %v3462
      %v3464 = vmul.f32 %v3352, 1.442695
      %v3465 = vpow.pop %v3464
      %v3466 = vmul.f32 %v3353, 1.442695
      %v3467 = vpow.pop %v3466
      %v3468 = vmul.f32 %v3354, 1.442695
      %v3469 = vpow.pop %v3468
      %v3470 = vmul.f32 %v3355, 1.442695
      %v3471 = vpow.pop %v3470
      %v3472 = vmul.f32 %v3356, 1.442695
      %v3473 = vpow.pop %v3472
      %v3474 = vmul.f32 %v3357, 1.442695
      %v3475 = vpow.pop %v3474
      %v3476 = vmul.f32 %v3358, 1.442695
      %v3477 = vpow.pop %v3476
      %v3478 = vmul.f32 %v3359, 1.442695
      %v3479 = vpow.pop %v3478
      %v3480 = vmul.f32 %v3360, 1.442695
      %v3481 = vpow.pop %v3480
      %v3482 = vmul.f32 %v3361, 1.442695
      %v3483 = vpow.pop %v3482
      %v3484 = vmul.f32 %v3362, 1.442695
      %v3485 = vpow.pop %v3484
      %v3486 = vmul.f32 %v3363, 1.442695
      %v3487 = vpow.pop %v3486
      %v3488 = vmul.f32 %v3364, 1.442695
      %v3489 = vpow.pop %v3488
      %v3490 = vmul.f32 %v3365, 1.442695
      %v3491 = vpow.pop %v3490
      %v3492 = vmul.f32 %v3366, 1.442695
      %v3493 = vpow.pop %v3492
      %v3494 = vmul.f32 %v3367, 1.442695
      %v3495 = vpow.pop %v3494
      %3496 = vmatprep.subr.mxu0 0.0
      %3497 = vmatpush1.msra.mxu0 1.0
      %3498 = vmatprep.subr.mxu0 0.0
      %3499 = vmatpush1.msra.mxu0 1.0
      %3500 = vmatprep.subr.mxu0 0.0
      %3501 = vmatpush1.msra.mxu0 1.0
      %3502 = vmatprep.subr.mxu0 0.0
      %3503 = vmatpush1.msra.mxu0 1.0
      %3504 = vmatprep.subr.mxu0 0.0
      %3505 = vmatpush1.msra.mxu0 1.0
      %3506 = vmatprep.subr.mxu0 0.0
      %3507 = vmatpush1.msra.mxu0 1.0
      %3508 = vmatprep.subr.mxu0 0.0
      %3509 = vmatpush1.msra.mxu0 1.0
      %3510 = vmatprep.subr.mxu0 0.0
      %3511 = vmatpush1.msra.mxu0 1.0
      %3512 = vmatprep.subr.mxu0 0.0
      %3513 = vmatpush1.msra.mxu0 1.0
      %3514 = vmatprep.subr.mxu0 0.0
      %3515 = vmatpush1.msra.mxu0 1.0
      %3516 = vmatprep.subr.mxu0 0.0
      %3517 = vmatpush1.msra.mxu0 1.0
      %3518 = vmatprep.subr.mxu0 0.0
      %3519 = vmatpush1.msra.mxu0 1.0
      %3520 = vmatprep.subr.mxu0 0.0
      %3521 = vmatpush1.msra.mxu0 1.0
      %3522 = vmatprep.subr.mxu0 0.0
      %3523 = vmatpush1.msra.mxu0 1.0
      %3524 = vmatprep.subr.mxu0 0.0
      %3525 = vmatpush1.msra.mxu0 1.0
      %3526 = vmatprep.subr.mxu0 0.0
      %3527 = vmatpush1.msra.mxu0 1.0
      %3528 = vmatprep.subr.mxu0 0.0
      %3529 = vmatpush2.msra.mxu0 1.0
      %3530 = vmatprep.subr.mxu0 0.0
      %3531 = vmatpush2.msra.mxu0 1.0
      %3532 = vmatprep.subr.mxu0 0.0
      %3533 = vmatpush2.msra.mxu0 1.0
      %3534 = vmatprep.subr.mxu0 0.0
      %3535 = vmatpush2.msra.mxu0 1.0
      %3536 = vmatprep.subr.mxu0 0.0
      %3537 = vmatpush2.msra.mxu0 1.0
      %3538 = vmatprep.subr.mxu0 0.0
      %3539 = vmatpush2.msra.mxu0 1.0
      %3540 = vmatprep.subr.mxu0 0.0
      %3541 = vmatpush2.msra.mxu0 1.0
      %3542 = vmatprep.subr.mxu0 0.0
      %3543 = vmatpush2.msra.mxu0 1.0
      %3544 = vmatprep.subr.mxu0 0.0
      %3545 = vmatpush2.msra.mxu0 1.0
      %3546 = vmatprep.subr.mxu0 0.0
      %3547 = vmatpush2.msra.mxu0 1.0
      %3548 = vmatprep.subr.mxu0 0.0
      %3549 = vmatpush2.msra.mxu0 1.0
      %3550 = vmatprep.subr.mxu0 0.0
      %3551 = vmatpush2.msra.mxu0 1.0
      %3552 = vmatprep.subr.mxu0 0.0
      %3553 = vmatpush2.msra.mxu0 1.0
      %3554 = vmatprep.subr.mxu0 0.0
      %3555 = vmatpush2.msra.mxu0 1.0
      %3556 = vmatprep.subr.mxu0 0.0
      %3557 = vmatpush2.msra.mxu0 1.0
      %3558 = vmatprep.subr.mxu0 0.0
      %3559 = vmatpush2.msra.mxu0 1.0
      %3560 = vmatprep.mubr.f32.mxu0 %v3371
      %3561 = vmatmul.mubr.f32.gmra.mxu0 %v3369
      %v3562 = vpop.f32.mrf.mxu0
      %v3563 = vadd.f32 0.0, %v3562
      %v3564 = vpop.f32.mrf.mxu0
      %3565 = vmatprep.mubr.f32.mxu0 %v3375
      %3566 = vmatmul.mubr.f32.gmra.mxu0 %v3373
      %v3567 = vpop.f32.mrf.mxu0
      %v3568 = vadd.f32 0.0, %v3567
      %v3569 = vpop.f32.mrf.mxu0
      %3570 = vmatprep.mubr.f32.mxu0 %v3379
      %3571 = vmatmul.mubr.f32.gmra.mxu0 %v3377
      %v3572 = vpop.f32.mrf.mxu0
      %v3573 = vadd.f32 0.0, %v3572
      %v3574 = vpop.f32.mrf.mxu0
      %3575 = vmatprep.mubr.f32.mxu0 %v3383
      %3576 = vmatmul.mubr.f32.gmra.mxu0 %v3381
      %v3577 = vpop.f32.mrf.mxu0
      %v3578 = vadd.f32 0.0, %v3577
      %v3579 = vpop.f32.mrf.mxu0
      %3580 = vmatprep.mubr.f32.mxu0 %v3387
      %3581 = vmatmul.mubr.f32.gmra.mxu0 %v3385
      %v3582 = vpop.f32.mrf.mxu0
      %v3583 = vadd.f32 0.0, %v3582
      %v3584 = vpop.f32.mrf.mxu0
      %3585 = vmatprep.mubr.f32.mxu0 %v3391
      %3586 = vmatmul.mubr.f32.gmra.mxu0 %v3389
      %v3587 = vpop.f32.mrf.mxu0
      %v3588 = vadd.f32 0.0, %v3587
      %v3589 = vpop.f32.mrf.mxu0
      %3590 = vmatprep.mubr.f32.mxu0 %v3395
      %3591 = vmatmul.mubr.f32.gmra.mxu0 %v3393
      %v3592 = vpop.f32.mrf.mxu0
      %v3593 = vadd.f32 0.0, %v3592
      %v3594 = vpop.f32.mrf.mxu0
      %3595 = vmatprep.mubr.f32.mxu0 %v3399
      %3596 = vmatmul.mubr.f32.gmra.mxu0 %v3397
      %v3597 = vpop.f32.mrf.mxu0
      %v3598 = vadd.f32 0.0, %v3597
      %v3599 = vpop.f32.mrf.mxu0
      %3600 = vmatprep.mubr.f32.mxu0 %v3403
      %3601 = vmatmul.mubr.f32.gmra.mxu0 %v3401
      %v3602 = vpop.f32.mrf.mxu0
      %v3603 = vadd.f32 0.0, %v3602
      %v3604 = vpop.f32.mrf.mxu0
      %3605 = vmatprep.mubr.f32.mxu0 %v3407
      %3606 = vmatmul.mubr.f32.gmra.mxu0 %v3405
      %v3607 = vpop.f32.mrf.mxu0
      %v3608 = vadd.f32 0.0, %v3607
      %v3609 = vpop.f32.mrf.mxu0
      %3610 = vmatprep.mubr.f32.mxu0 %v3411
      %3611 = vmatmul.mubr.f32.gmra.mxu0 %v3409
      %v3612 = vpop.f32.mrf.mxu0
      %v3613 = vadd.f32 0.0, %v3612
      %v3614 = vpop.f32.mrf.mxu0
      %3615 = vmatprep.mubr.f32.mxu0 %v3415
      %3616 = vmatmul.mubr.f32.gmra.mxu0 %v3413
      %v3617 = vpop.f32.mrf.mxu0
      %v3618 = vadd.f32 0.0, %v3617
      %v3619 = vpop.f32.mrf.mxu0
      %3620 = vmatprep.mubr.f32.mxu0 %v3419
      %3621 = vmatmul.mubr.f32.gmra.mxu0 %v3417
      %v3622 = vpop.f32.mrf.mxu0
      %v3623 = vadd.f32 0.0, %v3622
      %v3624 = vpop.f32.mrf.mxu0
      %3625 = vmatprep.mubr.f32.mxu0 %v3423
      %3626 = vmatmul.mubr.f32.gmra.mxu0 %v3421
      %v3627 = vpop.f32.mrf.mxu0
      %v3628 = vadd.f32 0.0, %v3627
      %v3629 = vpop.f32.mrf.mxu0
      %3630 = vmatprep.mubr.f32.mxu0 %v3427
      %3631 = vmatmul.mubr.f32.gmra.mxu0 %v3425
      %v3632 = vpop.f32.mrf.mxu0
      %v3633 = vadd.f32 0.0, %v3632
      %v3634 = vpop.f32.mrf.mxu0
      %3635 = vmatprep.mubr.f32.mxu0 %v3431
      %3636 = vmatmul.mubr.f32.gmra.mxu0 %v3429
      %v3637 = vpop.f32.mrf.mxu0
      %v3638 = vadd.f32 0.0, %v3637
      %v3639 = vpop.f32.mrf.mxu0
      %3640 = vmatprep.mubr.f32.mxu0 %v3435
      %3641 = vmatmul.mubr.f32.gmra.mxu0 %v3433
      %v3642 = vpop.f32.mrf.mxu0
      %v3643 = vadd.f32 0.0, %v3642
      %v3644 = vpop.f32.mrf.mxu0
      %3645 = vmatprep.mubr.f32.mxu0 %v3439
      %3646 = vmatmul.mubr.f32.gmra.mxu0 %v3437
      %v3647 = vpop.f32.mrf.mxu0
      %v3648 = vadd.f32 0.0, %v3647
      %v3649 = vpop.f32.mrf.mxu0
      %3650 = vmatprep.mubr.f32.mxu0 %v3443
      %3651 = vmatmul.mubr.f32.gmra.mxu0 %v3441
      %v3652 = vpop.f32.mrf.mxu0
      %v3653 = vadd.f32 0.0, %v3652
      %v3654 = vpop.f32.mrf.mxu0
      %3655 = vmatprep.mubr.f32.mxu0 %v3447
      %3656 = vmatmul.mubr.f32.gmra.mxu0 %v3445
      %v3657 = vpop.f32.mrf.mxu0
      %v3658 = vadd.f32 0.0, %v3657
      %v3659 = vpop.f32.mrf.mxu0
      %3660 = vmatprep.mubr.f32.mxu0 %v3451
      %3661 = vmatmul.mubr.f32.gmra.mxu0 %v3449
      %v3662 = vpop.f32.mrf.mxu0
      %v3663 = vadd.f32 0.0, %v3662
      %v3664 = vpop.f32.mrf.mxu0
      %3665 = vmatprep.mubr.f32.mxu0 %v3455
      %3666 = vmatmul.mubr.f32.gmra.mxu0 %v3453
      %v3667 = vpop.f32.mrf.mxu0
      %v3668 = vadd.f32 0.0, %v3667
      %v3669 = vpop.f32.mrf.mxu0
      %3670 = vmatprep.mubr.f32.mxu0 %v3459
      %3671 = vmatmul.mubr.f32.gmra.mxu0 %v3457
      %v3672 = vpop.f32.mrf.mxu0
      %v3673 = vadd.f32 0.0, %v3672
      %v3674 = vpop.f32.mrf.mxu0
      %3675 = vmatprep.mubr.f32.mxu0 %v3463
      %3676 = vmatmul.mubr.f32.gmra.mxu0 %v3461
      %v3677 = vpop.f32.mrf.mxu0
      %v3678 = vadd.f32 0.0, %v3677
      %v3679 = vpop.f32.mrf.mxu0
      %3680 = vmatprep.mubr.f32.mxu0 %v3467
      %3681 = vmatmul.mubr.f32.gmra.mxu0 %v3465
      %v3682 = vpop.f32.mrf.mxu0
      %v3683 = vadd.f32 0.0, %v3682
      %v3684 = vpop.f32.mrf.mxu0
      %3685 = vmatprep.mubr.f32.mxu0 %v3471
      %3686 = vmatmul.mubr.f32.gmra.mxu0 %v3469
      %v3687 = vpop.f32.mrf.mxu0
      %v3688 = vadd.f32 0.0, %v3687
      %v3689 = vpop.f32.mrf.mxu0
      %3690 = vmatprep.mubr.f32.mxu0 %v3475
      %3691 = vmatmul.mubr.f32.gmra.mxu0 %v3473
      %v3692 = vpop.f32.mrf.mxu0
      %v3693 = vadd.f32 0.0, %v3692
      %v3694 = vpop.f32.mrf.mxu0
      %3695 = vmatprep.mubr.f32.mxu0 %v3479
      %3696 = vmatmul.mubr.f32.gmra.mxu0 %v3477
      %v3697 = vpop.f32.mrf.mxu0
      %v3698 = vadd.f32 0.0, %v3697
      %v3699 = vpop.f32.mrf.mxu0
      %3700 = vmatprep.mubr.f32.mxu0 %v3483
      %3701 = vmatmul.mubr.f32.gmra.mxu0 %v3481
      %v3702 = vpop.f32.mrf.mxu0
      %v3703 = vadd.f32 0.0, %v3702
      %v3704 = vpop.f32.mrf.mxu0
      %3705 = vmatprep.mubr.f32.mxu0 %v3487
      %3706 = vmatmul.mubr.f32.gmra.mxu0 %v3485
      %v3707 = vpop.f32.mrf.mxu0
      %v3708 = vadd.f32 0.0, %v3707
      %v3709 = vpop.f32.mrf.mxu0
      %3710 = vmatprep.mubr.f32.mxu0 %v3491
      %3711 = vmatmul.mubr.f32.gmra.mxu0 %v3489
      %v3712 = vpop.f32.mrf.mxu0
      %v3713 = vadd.f32 0.0, %v3712
      %v3714 = vpop.f32.mrf.mxu0
      %3715 = vmatprep.mubr.f32.mxu0 %v3495
      %3716 = vmatmul.mubr.f32.gmra.mxu0 %v3493
      %v3717 = vpop.f32.mrf.mxu0
      %v3718 = vadd.f32 0.0, %v3717
      %v3719 = vpop.f32.mrf.mxu0
      %3720 = vdwg.mxu0
      %v3721 = vsub.f32 0.0, %v3210
      %v3722 = vsub.f32 0.0, %v3213
      %v3723 = vsub.f32 0.0, %v3216
      %v3724 = vsub.f32 0.0, %v3219
      %v3725 = vsub.f32 0.0, %v3222
      %v3726 = vsub.f32 0.0, %v3225
      %v3727 = vsub.f32 0.0, %v3228
      %v3728 = vsub.f32 0.0, %v3231
      %v3729 = vsub.f32 0.0, %v3234
      %v3730 = vsub.f32 0.0, %v3237
      %v3731 = vsub.f32 0.0, %v3240
      %v3732 = vsub.f32 0.0, %v3243
      %v3733 = vsub.f32 0.0, %v3246
      %v3734 = vsub.f32 0.0, %v3249
      %v3735 = vsub.f32 0.0, %v3252
      %v3736 = vsub.f32 0.0, %v3255
      %v3737 = vsub.f32 0.0, %v3258
      %v3738 = vsub.f32 0.0, %v3261
      %v3739 = vsub.f32 0.0, %v3264
      %v3740 = vsub.f32 0.0, %v3267
      %v3741 = vsub.f32 0.0, %v3270
      %v3742 = vsub.f32 0.0, %v3273
      %v3743 = vsub.f32 0.0, %v3276
      %v3744 = vsub.f32 0.0, %v3279
      %v3745 = vsub.f32 0.0, %v3282
      %v3746 = vsub.f32 0.0, %v3285
      %v3747 = vsub.f32 0.0, %v3288
      %v3748 = vsub.f32 0.0, %v3291
      %v3749 = vsub.f32 0.0, %v3294
      %v3750 = vsub.f32 0.0, %v3297
      %v3751 = vsub.f32 0.0, %v3300
      %v3752 = vsub.f32 0.0, %v3303
      %v3753 = vmul.f32 %v3721, 1.442695
      %v3754 = vpow.pop %v3753
      %v3755 = vmul.f32 %v3722, 1.442695
      %v3756 = vpow.pop %v3755
      %v3757 = vmul.f32 %v3723, 1.442695
      %v3758 = vpow.pop %v3757
      %v3759 = vmul.f32 %v3724, 1.442695
      %v3760 = vpow.pop %v3759
      %v3761 = vmul.f32 %v3725, 1.442695
      %v3762 = vpow.pop %v3761
      %v3763 = vmul.f32 %v3726, 1.442695
      %v3764 = vpow.pop %v3763
      %v3765 = vmul.f32 %v3727, 1.442695
      %v3766 = vpow.pop %v3765
      %v3767 = vmul.f32 %v3728, 1.442695
      %v3768 = vpow.pop %v3767
      %v3769 = vmul.f32 %v3729, 1.442695
      %v3770 = vpow.pop %v3769
      %v3771 = vmul.f32 %v3730, 1.442695
      %v3772 = vpow.pop %v3771
      %v3773 = vmul.f32 %v3731, 1.442695
      %v3774 = vpow.pop %v3773
      %v3775 = vmul.f32 %v3732, 1.442695
      %v3776 = vpow.pop %v3775
      %v3777 = vmul.f32 %v3733, 1.442695
      %v3778 = vpow.pop %v3777
      %v3779 = vmul.f32 %v3734, 1.442695
      %v3780 = vpow.pop %v3779
      %v3781 = vmul.f32 %v3735, 1.442695
      %v3782 = vpow.pop %v3781
      %v3783 = vmul.f32 %v3736, 1.442695
      %v3784 = vpow.pop %v3783
      %v3785 = vmul.f32 %v3737, 1.442695
      %v3786 = vpow.pop %v3785
      %v3787 = vmul.f32 %v3738, 1.442695
      %v3788 = vpow.pop %v3787
      %v3789 = vmul.f32 %v3739, 1.442695
      %v3790 = vpow.pop %v3789
      %v3791 = vmul.f32 %v3740, 1.442695
      %v3792 = vpow.pop %v3791
      %v3793 = vmul.f32 %v3741, 1.442695
      %v3794 = vpow.pop %v3793
      %v3795 = vmul.f32 %v3742, 1.442695
      %v3796 = vpow.pop %v3795
      %v3797 = vmul.f32 %v3743, 1.442695
      %v3798 = vpow.pop %v3797
      %v3799 = vmul.f32 %v3744, 1.442695
      %v3800 = vpow.pop %v3799
      %v3801 = vmul.f32 %v3745, 1.442695
      %v3802 = vpow.pop %v3801
      %v3803 = vmul.f32 %v3746, 1.442695
      %v3804 = vpow.pop %v3803
      %v3805 = vmul.f32 %v3747, 1.442695
      %v3806 = vpow.pop %v3805
      %v3807 = vmul.f32 %v3748, 1.442695
      %v3808 = vpow.pop %v3807
      %v3809 = vmul.f32 %v3749, 1.442695
      %v3810 = vpow.pop %v3809
      %v3811 = vmul.f32 %v3750, 1.442695
      %v3812 = vpow.pop %v3811
      %v3813 = vmul.f32 %v3751, 1.442695
      %v3814 = vpow.pop %v3813
      %v3815 = vmul.f32 %v3752, 1.442695
      %v3816 = vpow.pop %v3815
      %v3817 = vmul.f32 %v3754, 56.0
      %v3818 = vmul.f32 %v3756, 56.0
      %v3819 = vmul.f32 %v3758, 56.0
      %v3820 = vmul.f32 %v3760, 56.0
      %v3821 = vmul.f32 %v3762, 56.0
      %v3822 = vmul.f32 %v3764, 56.0
      %v3823 = vmul.f32 %v3766, 56.0
      %v3824 = vmul.f32 %v3768, 56.0
      %v3825 = vmul.f32 %v3770, 56.0
      %v3826 = vmul.f32 %v3772, 56.0
      %v3827 = vmul.f32 %v3774, 56.0
      %v3828 = vmul.f32 %v3776, 56.0
      %v3829 = vmul.f32 %v3778, 56.0
      %v3830 = vmul.f32 %v3780, 56.0
      %v3831 = vmul.f32 %v3782, 56.0
      %v3832 = vmul.f32 %v3784, 56.0
      %v3833 = vmul.f32 %v3786, 56.0
      %v3834 = vmul.f32 %v3788, 56.0
      %v3835 = vmul.f32 %v3790, 56.0
      %v3836 = vmul.f32 %v3792, 56.0
      %v3837 = vmul.f32 %v3794, 56.0
      %v3838 = vmul.f32 %v3796, 56.0
      %v3839 = vmul.f32 %v3798, 56.0
      %v3840 = vmul.f32 %v3800, 56.0
      %v3841 = vmul.f32 %v3802, 56.0
      %v3842 = vmul.f32 %v3804, 56.0
      %v3843 = vmul.f32 %v3806, 56.0
      %v3844 = vmul.f32 %v3808, 56.0
      %v3845 = vmul.f32 %v3810, 56.0
      %v3846 = vmul.f32 %v3812, 56.0
      %v3847 = vmul.f32 %v3814, 56.0
      %v3848 = vmul.f32 %v3816, 56.0
      %v3849 = vsub.f32 %v3563, %v3817
      %v3850 = vsub.f32 %v3568, %v3818
      %v3851 = vsub.f32 %v3573, %v3819
      %v3852 = vsub.f32 %v3578, %v3820
      %v3853 = vsub.f32 %v3583, %v3821
      %v3854 = vsub.f32 %v3588, %v3822
      %v3855 = vsub.f32 %v3593, %v3823
      %v3856 = vsub.f32 %v3598, %v3824
      %v3857 = vsub.f32 %v3603, %v3825
      %v3858 = vsub.f32 %v3608, %v3826
      %v3859 = vsub.f32 %v3613, %v3827
      %v3860 = vsub.f32 %v3618, %v3828
      %v3861 = vsub.f32 %v3623, %v3829
      %v3862 = vsub.f32 %v3628, %v3830
      %v3863 = vsub.f32 %v3633, %v3831
      %v3864 = vsub.f32 %v3638, %v3832
      %v3865 = vsub.f32 %v3643, %v3833
      %v3866 = vsub.f32 %v3648, %v3834
      %v3867 = vsub.f32 %v3653, %v3835
      %v3868 = vsub.f32 %v3658, %v3836
      %v3869 = vsub.f32 %v3663, %v3837
      %v3870 = vsub.f32 %v3668, %v3838
      %v3871 = vsub.f32 %v3673, %v3839
      %v3872 = vsub.f32 %v3678, %v3840
      %v3873 = vsub.f32 %v3683, %v3841
      %v3874 = vsub.f32 %v3688, %v3842
      %v3875 = vsub.f32 %v3693, %v3843
      %v3876 = vsub.f32 %v3698, %v3844
      %v3877 = vsub.f32 %v3703, %v3845
      %v3878 = vsub.f32 %v3708, %v3846
      %v3879 = vsub.f32 %v3713, %v3847
      %v3880 = vsub.f32 %v3718, %v3848
      %v3881 = vmax.f32 %v3849, 1.1754944e-38
      %v3882 = vmax.f32 %v3850, 1.1754944e-38
      %v3883 = vmax.f32 %v3851, 1.1754944e-38
      %v3884 = vmax.f32 %v3852, 1.1754944e-38
      %v3885 = vmax.f32 %v3853, 1.1754944e-38
      %v3886 = vmax.f32 %v3854, 1.1754944e-38
      %v3887 = vmax.f32 %v3855, 1.1754944e-38
      %v3888 = vmax.f32 %v3856, 1.1754944e-38
      %v3889 = vmax.f32 %v3857, 1.1754944e-38
      %v3890 = vmax.f32 %v3858, 1.1754944e-38
      %v3891 = vmax.f32 %v3859, 1.1754944e-38
      %v3892 = vmax.f32 %v3860, 1.1754944e-38
      %v3893 = vmax.f32 %v3861, 1.1754944e-38
      %v3894 = vmax.f32 %v3862, 1.1754944e-38
      %v3895 = vmax.f32 %v3863, 1.1754944e-38
      %v3896 = vmax.f32 %v3864, 1.1754944e-38
      %v3897 = vmax.f32 %v3865, 1.1754944e-38
      %v3898 = vmax.f32 %v3866, 1.1754944e-38
      %v3899 = vmax.f32 %v3867, 1.1754944e-38
      %v3900 = vmax.f32 %v3868, 1.1754944e-38
      %v3901 = vmax.f32 %v3869, 1.1754944e-38
      %v3902 = vmax.f32 %v3870, 1.1754944e-38
      %v3903 = vmax.f32 %v3871, 1.1754944e-38
      %v3904 = vmax.f32 %v3872, 1.1754944e-38
      %v3905 = vmax.f32 %v3873, 1.1754944e-38
      %v3906 = vmax.f32 %v3874, 1.1754944e-38
      %v3907 = vmax.f32 %v3875, 1.1754944e-38
      %v3908 = vmax.f32 %v3876, 1.1754944e-38
      %v3909 = vmax.f32 %v3877, 1.1754944e-38
      %v3910 = vmax.f32 %v3878, 1.1754944e-38
      %v3911 = vmax.f32 %v3879, 1.1754944e-38
      %v3912 = vmax.f32 %v3880, 1.1754944e-38
      %v3913 = vlog2.pop %v3881
      %v3914 = vmul.f32 %v3913, 0.6931472
      %v3915 = vlog2.pop %v3882
      %v3916 = vmul.f32 %v3915, 0.6931472
      %v3917 = vlog2.pop %v3883
      %v3918 = vmul.f32 %v3917, 0.6931472
      %v3919 = vlog2.pop %v3884
      %v3920 = vmul.f32 %v3919, 0.6931472
      %v3921 = vlog2.pop %v3885
      %v3922 = vmul.f32 %v3921, 0.6931472
      %v3923 = vlog2.pop %v3886
      %v3924 = vmul.f32 %v3923, 0.6931472
      %v3925 = vlog2.pop %v3887
      %v3926 = vmul.f32 %v3925, 0.6931472
      %v3927 = vlog2.pop %v3888
      %v3928 = vmul.f32 %v3927, 0.6931472
      %v3929 = vlog2.pop %v3889
      %v3930 = vmul.f32 %v3929, 0.6931472
      %v3931 = vlog2.pop %v3890
      %v3932 = vmul.f32 %v3931, 0.6931472
      %v3933 = vlog2.pop %v3891
      %v3934 = vmul.f32 %v3933, 0.6931472
      %v3935 = vlog2.pop %v3892
      %v3936 = vmul.f32 %v3935, 0.6931472
      %v3937 = vlog2.pop %v3893
      %v3938 = vmul.f32 %v3937, 0.6931472
      %v3939 = vlog2.pop %v3894
      %v3940 = vmul.f32 %v3939, 0.6931472
      %v3941 = vlog2.pop %v3895
      %v3942 = vmul.f32 %v3941, 0.6931472
      %v3943 = vlog2.pop %v3896
      %v3944 = vmul.f32 %v3943, 0.6931472
      %v3945 = vlog2.pop %v3897
      %v3946 = vmul.f32 %v3945, 0.6931472
      %v3947 = vlog2.pop %v3898
      %v3948 = vmul.f32 %v3947, 0.6931472
      %v3949 = vlog2.pop %v3899
      %v3950 = vmul.f32 %v3949, 0.6931472
      %v3951 = vlog2.pop %v3900
      %v3952 = vmul.f32 %v3951, 0.6931472
      %v3953 = vlog2.pop %v3901
      %v3954 = vmul.f32 %v3953, 0.6931472
      %v3955 = vlog2.pop %v3902
      %v3956 = vmul.f32 %v3955, 0.6931472
      %v3957 = vlog2.pop %v3903
      %v3958 = vmul.f32 %v3957, 0.6931472
      %v3959 = vlog2.pop %v3904
      %v3960 = vmul.f32 %v3959, 0.6931472
      %v3961 = vlog2.pop %v3905
      %v3962 = vmul.f32 %v3961, 0.6931472
      %v3963 = vlog2.pop %v3906
      %v3964 = vmul.f32 %v3963, 0.6931472
      %v3965 = vlog2.pop %v3907
      %v3966 = vmul.f32 %v3965, 0.6931472
      %v3967 = vlog2.pop %v3908
      %v3968 = vmul.f32 %v3967, 0.6931472
      %v3969 = vlog2.pop %v3909
      %v3970 = vmul.f32 %v3969, 0.6931472
      %v3971 = vlog2.pop %v3910
      %v3972 = vmul.f32 %v3971, 0.6931472
      %v3973 = vlog2.pop %v3911
      %v3974 = vmul.f32 %v3973, 0.6931472
      %v3975 = vlog2.pop %v3912
      %v3976 = vmul.f32 %v3975, 0.6931472
      %v3977 = vadd.f32 %v3914, %v3210
      %v3978 = vadd.f32 %v3916, %v3213
      %v3979 = vadd.f32 %v3918, %v3216
      %v3980 = vadd.f32 %v3920, %v3219
      %v3981 = vadd.f32 %v3922, %v3222
      %v3982 = vadd.f32 %v3924, %v3225
      %v3983 = vadd.f32 %v3926, %v3228
      %v3984 = vadd.f32 %v3928, %v3231
      %v3985 = vadd.f32 %v3930, %v3234
      %v3986 = vadd.f32 %v3932, %v3237
      %v3987 = vadd.f32 %v3934, %v3240
      %v3988 = vadd.f32 %v3936, %v3243
      %v3989 = vadd.f32 %v3938, %v3246
      %v3990 = vadd.f32 %v3940, %v3249
      %v3991 = vadd.f32 %v3942, %v3252
      %v3992 = vadd.f32 %v3944, %v3255
      %v3993 = vadd.f32 %v3946, %v3258
      %v3994 = vadd.f32 %v3948, %v3261
      %v3995 = vadd.f32 %v3950, %v3264
      %v3996 = vadd.f32 %v3952, %v3267
      %v3997 = vadd.f32 %v3954, %v3270
      %v3998 = vadd.f32 %v3956, %v3273
      %v3999 = vadd.f32 %v3958, %v3276
      %v4000 = vadd.f32 %v3960, %v3279
      %v4001 = vadd.f32 %v3962, %v3282
      %v4002 = vadd.f32 %v3964, %v3285
      %v4003 = vadd.f32 %v3966, %v3288
      %v4004 = vadd.f32 %v3968, %v3291
      %v4005 = vadd.f32 %v3970, %v3294
      %v4006 = vadd.f32 %v3972, %v3297
      %v4007 = vadd.f32 %v3974, %v3300
      %v4008 = vadd.f32 %v3976, %v3303
      %v4009 = vmax.f32 %v3210, %v3222
      %v4010 = vmax.f32 %v3213, %v3225
      %v4011 = vmax.f32 %v3216, %v3228
      %v4012 = vmax.f32 %v3219, %v3231
      %v4013 = vmax.f32 %v4009, %v3234
      %v4014 = vmax.f32 %v4010, %v3237
      %v4015 = vmax.f32 %v4011, %v3240
      %v4016 = vmax.f32 %v4012, %v3243
      %v4017 = vmax.f32 %v4013, %v3246
      %v4018 = vmax.f32 %v4014, %v3249
      %v4019 = vmax.f32 %v4015, %v3252
      %v4020 = vmax.f32 %v4016, %v3255
      %v4021 = vmax.f32 %v4017, %v3258
      %v4022 = vmax.f32 %v4018, %v3261
      %v4023 = vmax.f32 %v4019, %v3264
      %v4024 = vmax.f32 %v4020, %v3267
      %v4025 = vmax.f32 %v4021, %v3270
      %v4026 = vmax.f32 %v4022, %v3273
      %v4027 = vmax.f32 %v4023, %v3276
      %v4028 = vmax.f32 %v4024, %v3279
      %v4029 = vmax.f32 %v4025, %v3282
      %v4030 = vmax.f32 %v4026, %v3285
      %v4031 = vmax.f32 %v4027, %v3288
      %v4032 = vmax.f32 %v4028, %v3291
      %v4033 = vmax.f32 %v4029, %v3294
      %v4034 = vmax.f32 %v4030, %v3297
      %v4035 = vmax.f32 %v4031, %v3300
      %v4036 = vmax.f32 %v4032, %v3303
      %v4037 = vmax.f32 %v4033, %v4034
      %v4038 = vmax.f32 %v4035, %v4036
      %v4039 = vmax.f32 %v4037, %v4038
      %v4040 = vrot.slane %v4039, 4
      %v4041 = vmax.f32 %v4039, %v4040
      %v4042 = vrot.slane %v4041, 2
      %v4043 = vmax.f32 %v4041, %v4042
      %v4044 = vrot.slane %v4043, 1
      %v4045 = vmax.f32 %v4043, %v4044
      %s4046 = vtos %v4045
      %v4047 = vstv %s4046
      %v4048 = vsub.f32 %v3210, %v4047
      %v4049 = vsub.f32 %v3213, %v4047
      %v4050 = vsub.f32 %v3216, %v4047
      %v4051 = vsub.f32 %v3219, %v4047
      %v4052 = vsub.f32 %v3222, %v4047
      %v4053 = vsub.f32 %v3225, %v4047
      %v4054 = vsub.f32 %v3228, %v4047
      %v4055 = vsub.f32 %v3231, %v4047
      %v4056 = vsub.f32 %v3234, %v4047
      %v4057 = vsub.f32 %v3237, %v4047
      %v4058 = vsub.f32 %v3240, %v4047
      %v4059 = vsub.f32 %v3243, %v4047
      %v4060 = vsub.f32 %v3246, %v4047
      %v4061 = vsub.f32 %v3249, %v4047
      %v4062 = vsub.f32 %v3252, %v4047
      %v4063 = vsub.f32 %v3255, %v4047
      %v4064 = vsub.f32 %v3258, %v4047
      %v4065 = vsub.f32 %v3261, %v4047
      %v4066 = vsub.f32 %v3264, %v4047
      %v4067 = vsub.f32 %v3267, %v4047
      %v4068 = vsub.f32 %v3270, %v4047
      %v4069 = vsub.f32 %v3273, %v4047
      %v4070 = vsub.f32 %v3276, %v4047
      %v4071 = vsub.f32 %v3279, %v4047
      %v4072 = vsub.f32 %v3282, %v4047
      %v4073 = vsub.f32 %v3285, %v4047
      %v4074 = vsub.f32 %v3288, %v4047
      %v4075 = vsub.f32 %v3291, %v4047
      %v4076 = vsub.f32 %v3294, %v4047
      %v4077 = vsub.f32 %v3297, %v4047
      %v4078 = vsub.f32 %v3300, %v4047
      %v4079 = vsub.f32 %v3303, %v4047
      %v4080 = vmul.f32 %v4048, 1.442695
      %v4081 = vpow.pop %v4080
      %v4082 = vmul.f32 %v4049, 1.442695
      %v4083 = vpow.pop %v4082
      %v4084 = vmul.f32 %v4050, 1.442695
      %v4085 = vpow.pop %v4084
      %v4086 = vmul.f32 %v4051, 1.442695
      %v4087 = vpow.pop %v4086
      %v4088 = vmul.f32 %v4052, 1.442695
      %v4089 = vpow.pop %v4088
      %v4090 = vmul.f32 %v4053, 1.442695
      %v4091 = vpow.pop %v4090
      %v4092 = vmul.f32 %v4054, 1.442695
      %v4093 = vpow.pop %v4092
      %v4094 = vmul.f32 %v4055, 1.442695
      %v4095 = vpow.pop %v4094
      %v4096 = vmul.f32 %v4056, 1.442695
      %v4097 = vpow.pop %v4096
      %v4098 = vmul.f32 %v4057, 1.442695
      %v4099 = vpow.pop %v4098
      %v4100 = vmul.f32 %v4058, 1.442695
      %v4101 = vpow.pop %v4100
      %v4102 = vmul.f32 %v4059, 1.442695
      %v4103 = vpow.pop %v4102
      %v4104 = vmul.f32 %v4060, 1.442695
      %v4105 = vpow.pop %v4104
      %v4106 = vmul.f32 %v4061, 1.442695
      %v4107 = vpow.pop %v4106
      %v4108 = vmul.f32 %v4062, 1.442695
      %v4109 = vpow.pop %v4108
      %v4110 = vmul.f32 %v4063, 1.442695
      %v4111 = vpow.pop %v4110
      %v4112 = vmul.f32 %v4064, 1.442695
      %v4113 = vpow.pop %v4112
      %v4114 = vmul.f32 %v4065, 1.442695
      %v4115 = vpow.pop %v4114
      %v4116 = vmul.f32 %v4066, 1.442695
      %v4117 = vpow.pop %v4116
      %v4118 = vmul.f32 %v4067, 1.442695
      %v4119 = vpow.pop %v4118
      %v4120 = vmul.f32 %v4068, 1.442695
      %v4121 = vpow.pop %v4120
      %v4122 = vmul.f32 %v4069, 1.442695
      %v4123 = vpow.pop %v4122
      %v4124 = vmul.f32 %v4070, 1.442695
      %v4125 = vpow.pop %v4124
      %v4126 = vmul.f32 %v4071, 1.442695
      %v4127 = vpow.pop %v4126
      %v4128 = vmul.f32 %v4072, 1.442695
      %v4129 = vpow.pop %v4128
      %v4130 = vmul.f32 %v4073, 1.442695
      %v4131 = vpow.pop %v4130
      %v4132 = vmul.f32 %v4074, 1.442695
      %v4133 = vpow.pop %v4132
      %v4134 = vmul.f32 %v4075, 1.442695
      %v4135 = vpow.pop %v4134
      %v4136 = vmul.f32 %v4076, 1.442695
      %v4137 = vpow.pop %v4136
      %v4138 = vmul.f32 %v4077, 1.442695
      %v4139 = vpow.pop %v4138
      %v4140 = vmul.f32 %v4078, 1.442695
      %v4141 = vpow.pop %v4140
      %v4142 = vmul.f32 %v4079, 1.442695
      %v4143 = vpow.pop %v4142
      %v4144 = vmul.f32 %v3369, %v4081
      %v4145 = vmul.f32 %v3371, %v4081
      %v4146 = vmul.f32 %v3373, %v4083
      %v4147 = vmul.f32 %v3375, %v4083
      %v4148 = vmul.f32 %v3377, %v4085
      %v4149 = vmul.f32 %v3379, %v4085
      %v4150 = vmul.f32 %v3381, %v4087
      %v4151 = vmul.f32 %v3383, %v4087
      %v4152 = vmul.f32 %v3385, %v4089
      %v4153 = vmul.f32 %v3387, %v4089
      %v4154 = vmul.f32 %v3389, %v4091
      %v4155 = vmul.f32 %v3391, %v4091
      %v4156 = vmul.f32 %v3393, %v4093
      %v4157 = vmul.f32 %v3395, %v4093
      %v4158 = vmul.f32 %v3397, %v4095
      %v4159 = vmul.f32 %v3399, %v4095
      %v4160 = vmul.f32 %v3401, %v4097
      %v4161 = vmul.f32 %v3403, %v4097
      %v4162 = vmul.f32 %v3405, %v4099
      %v4163 = vmul.f32 %v3407, %v4099
      %v4164 = vmul.f32 %v3409, %v4101
      %v4165 = vmul.f32 %v3411, %v4101
      %v4166 = vmul.f32 %v3413, %v4103
      %v4167 = vmul.f32 %v3415, %v4103
      %v4168 = vmul.f32 %v3417, %v4105
      %v4169 = vmul.f32 %v3419, %v4105
      %v4170 = vmul.f32 %v3421, %v4107
      %v4171 = vmul.f32 %v3423, %v4107
      %v4172 = vmul.f32 %v3425, %v4109
      %v4173 = vmul.f32 %v3427, %v4109
      %v4174 = vmul.f32 %v3429, %v4111
      %v4175 = vmul.f32 %v3431, %v4111
      %v4176 = vmul.f32 %v3433, %v4113
      %v4177 = vmul.f32 %v3435, %v4113
      %v4178 = vmul.f32 %v3437, %v4115
      %v4179 = vmul.f32 %v3439, %v4115
      %v4180 = vmul.f32 %v3441, %v4117
      %v4181 = vmul.f32 %v3443, %v4117
      %v4182 = vmul.f32 %v3445, %v4119
      %v4183 = vmul.f32 %v3447, %v4119
      %v4184 = vmul.f32 %v3449, %v4121
      %v4185 = vmul.f32 %v3451, %v4121
      %v4186 = vmul.f32 %v3453, %v4123
      %v4187 = vmul.f32 %v3455, %v4123
      %v4188 = vmul.f32 %v3457, %v4125
      %v4189 = vmul.f32 %v3459, %v4125
      %v4190 = vmul.f32 %v3461, %v4127
      %v4191 = vmul.f32 %v3463, %v4127
      %v4192 = vmul.f32 %v3465, %v4129
      %v4193 = vmul.f32 %v3467, %v4129
      %v4194 = vmul.f32 %v3469, %v4131
      %v4195 = vmul.f32 %v3471, %v4131
      %v4196 = vmul.f32 %v3473, %v4133
      %v4197 = vmul.f32 %v3475, %v4133
      %v4198 = vmul.f32 %v3477, %v4135
      %v4199 = vmul.f32 %v3479, %v4135
      %v4200 = vmul.f32 %v3481, %v4137
      %v4201 = vmul.f32 %v3483, %v4137
      %v4202 = vmul.f32 %v3485, %v4139
      %v4203 = vmul.f32 %v3487, %v4139
      %v4204 = vmul.f32 %v3489, %v4141
      %v4205 = vmul.f32 %v3491, %v4141
      %v4206 = vmul.f32 %v3493, %v4143
      %v4207 = vmul.f32 %v3495, %v4143
      %4208 = vmatprep.subr.mxu0 %v4175
      %4209 = vmatpush1.msra.mxu0 %v4174
      %4210 = vmatprep.subr.mxu0 %v4173
      %4211 = vmatpush1.msra.mxu0 %v4172
      %4212 = vmatprep.subr.mxu0 %v4171
      %4213 = vmatpush1.msra.mxu0 %v4170
      %4214 = vmatprep.subr.mxu0 %v4169
      %4215 = vmatpush1.msra.mxu0 %v4168
      %4216 = vmatprep.subr.mxu0 %v4167
      %4217 = vmatpush1.msra.mxu0 %v4166
      %4218 = vmatprep.subr.mxu0 %v4165
      %4219 = vmatpush1.msra.mxu0 %v4164
      %4220 = vmatprep.subr.mxu0 %v4163
      %4221 = vmatpush1.msra.mxu0 %v4162
      %4222 = vmatprep.subr.mxu0 %v4161
      %4223 = vmatpush1.msra.mxu0 %v4160
      %4224 = vmatprep.subr.mxu0 %v4159
      %4225 = vmatpush1.msra.mxu0 %v4158
      %4226 = vmatprep.subr.mxu0 %v4157
      %4227 = vmatpush1.msra.mxu0 %v4156
      %4228 = vmatprep.subr.mxu0 %v4155
      %4229 = vmatpush1.msra.mxu0 %v4154
      %4230 = vmatprep.subr.mxu0 %v4153
      %4231 = vmatpush1.msra.mxu0 %v4152
      %4232 = vmatprep.subr.mxu0 %v4151
      %4233 = vmatpush1.msra.mxu0 %v4150
      %4234 = vmatprep.subr.mxu0 %v4149
      %4235 = vmatpush1.msra.mxu0 %v4148
      %4236 = vmatprep.subr.mxu0 %v4147
      %4237 = vmatpush1.msra.mxu0 %v4146
      %4238 = vmatprep.subr.mxu0 %v4145
      %4239 = vmatpush1.msra.mxu0 %v4144
      %4240 = vmatprep.subr.mxu0 %v4207
      %4241 = vmatpush2.msra.mxu0 %v4206
      %4242 = vmatprep.subr.mxu0 %v4205
      %4243 = vmatpush2.msra.mxu0 %v4204
      %4244 = vmatprep.subr.mxu0 %v4203
      %4245 = vmatpush2.msra.mxu0 %v4202
      %4246 = vmatprep.subr.mxu0 %v4201
      %4247 = vmatpush2.msra.mxu0 %v4200
      %4248 = vmatprep.subr.mxu0 %v4199
      %4249 = vmatpush2.msra.mxu0 %v4198
      %4250 = vmatprep.subr.mxu0 %v4197
      %4251 = vmatpush2.msra.mxu0 %v4196
      %4252 = vmatprep.subr.mxu0 %v4195
      %4253 = vmatpush2.msra.mxu0 %v4194
      %4254 = vmatprep.subr.mxu0 %v4193
      %4255 = vmatpush2.msra.mxu0 %v4192
      %4256 = vmatprep.subr.mxu0 %v4191
      %4257 = vmatpush2.msra.mxu0 %v4190
      %4258 = vmatprep.subr.mxu0 %v4189
      %4259 = vmatpush2.msra.mxu0 %v4188
      %4260 = vmatprep.subr.mxu0 %v4187
      %4261 = vmatpush2.msra.mxu0 %v4186
      %4262 = vmatprep.subr.mxu0 %v4185
      %4263 = vmatpush2.msra.mxu0 %v4184
      %4264 = vmatprep.subr.mxu0 %v4183
      %4265 = vmatpush2.msra.mxu0 %v4182
      %4266 = vmatprep.subr.mxu0 %v4181
      %4267 = vmatpush2.msra.mxu0 %v4180
      %4268 = vmatprep.subr.mxu0 %v4179
      %4269 = vmatpush2.msra.mxu0 %v4178
      %4270 = vmatprep.subr.mxu0 %v4177
      %4271 = vmatpush2.msra.mxu0 %v4176
      %4272 = vmatprep.mubr.f32.mxu0 1.0
      %4273 = vmatmul.mubr.f32.gmra.mxu0 1.0
      %v4274 = vpop.f32.mrf.mxu0
      %v4275 = vadd.f32 0.0, %v4274
      %v4276 = vpop.f32.mrf.mxu0
      %v4277 = vadd.f32 0.0, %v4276
      %4278 = vdwg.mxu0
      %v4279 = vadd.f32 %v2906, %v3977
      %v4280 = vadd.f32 %v2907, %v3978
      %v4281 = vadd.f32 %v2908, %v3979
      %v4282 = vadd.f32 %v2909, %v3980
      %v4283 = vadd.f32 %v2910, %v3981
      %v4284 = vadd.f32 %v2911, %v3982
      %v4285 = vadd.f32 %v2912, %v3983
      %v4286 = vadd.f32 %v2913, %v3984
      %v4287 = vadd.f32 %v2914, %v3985
      %v4288 = vadd.f32 %v2915, %v3986
      %v4289 = vadd.f32 %v2916, %v3987
      %v4290 = vadd.f32 %v2917, %v3988
      %v4291 = vadd.f32 %v2918, %v3989
      %v4292 = vadd.f32 %v2919, %v3990
      %v4293 = vadd.f32 %v2920, %v3991
      %v4294 = vadd.f32 %v2921, %v3992
      %v4295 = vadd.f32 %v2922, %v3993
      %v4296 = vadd.f32 %v2923, %v3994
      %v4297 = vadd.f32 %v2924, %v3995
      %v4298 = vadd.f32 %v2925, %v3996
      %v4299 = vadd.f32 %v2926, %v3997
      %v4300 = vadd.f32 %v2927, %v3998
      %v4301 = vadd.f32 %v2928, %v3999
      %v4302 = vadd.f32 %v2929, %v4000
      %v4303 = vadd.f32 %v2930, %v4001
      %v4304 = vadd.f32 %v2931, %v4002
      %v4305 = vadd.f32 %v2932, %v4003
      %v4306 = vadd.f32 %v2933, %v4004
      %v4307 = vadd.f32 %v2934, %v4005
      %v4308 = vadd.f32 %v2935, %v4006
      %v4309 = vadd.f32 %v2936, %v4007
      %v4310 = vadd.f32 %v2937, %v4008
      %v4311 = vmax.f32 %v4279, 0.0
      %v4312 = vmax.f32 %v4280, 0.0
      %v4313 = vmax.f32 %v4281, 0.0
      %v4314 = vmax.f32 %v4282, 0.0
      %v4315 = vmax.f32 %v4283, 0.0
      %v4316 = vmax.f32 %v4284, 0.0
      %v4317 = vmax.f32 %v4285, 0.0
      %v4318 = vmax.f32 %v4286, 0.0
      %v4319 = vmax.f32 %v4287, 0.0
      %v4320 = vmax.f32 %v4288, 0.0
      %v4321 = vmax.f32 %v4289, 0.0
      %v4322 = vmax.f32 %v4290, 0.0
      %v4323 = vmax.f32 %v4291, 0.0
      %v4324 = vmax.f32 %v4292, 0.0
      %v4325 = vmax.f32 %v4293, 0.0
      %v4326 = vmax.f32 %v4294, 0.0
      %v4327 = vmax.f32 %v4295, 0.0
      %v4328 = vmax.f32 %v4296, 0.0
      %v4329 = vmax.f32 %v4297, 0.0
      %v4330 = vmax.f32 %v4298, 0.0
      %v4331 = vmax.f32 %v4299, 0.0
      %v4332 = vmax.f32 %v4300, 0.0
      %v4333 = vmax.f32 %v4301, 0.0
      %v4334 = vmax.f32 %v4302, 0.0
      %v4335 = vmax.f32 %v4303, 0.0
      %v4336 = vmax.f32 %v4304, 0.0
      %v4337 = vmax.f32 %v4305, 0.0
      %v4338 = vmax.f32 %v4306, 0.0
      %v4339 = vmax.f32 %v4307, 0.0
      %v4340 = vmax.f32 %v4308, 0.0
      %v4341 = vmax.f32 %v4309, 0.0
      %v4342 = vmax.f32 %v4310, 0.0
      %v4343 = vand.u32 2147483647, %v4279
      %v4344 = vand.u32 2147483647, %v4280
      %v4345 = vand.u32 2147483647, %v4281
      %v4346 = vand.u32 2147483647, %v4282
      %v4347 = vand.u32 2147483647, %v4283
      %v4348 = vand.u32 2147483647, %v4284
      %v4349 = vand.u32 2147483647, %v4285
      %v4350 = vand.u32 2147483647, %v4286
      %v4351 = vand.u32 2147483647, %v4287
      %v4352 = vand.u32 2147483647, %v4288
      %v4353 = vand.u32 2147483647, %v4289
      %v4354 = vand.u32 2147483647, %v4290
      %v4355 = vand.u32 2147483647, %v4291
      %v4356 = vand.u32 2147483647, %v4292
      %v4357 = vand.u32 2147483647, %v4293
      %v4358 = vand.u32 2147483647, %v4294
      %v4359 = vand.u32 2147483647, %v4295
      %v4360 = vand.u32 2147483647, %v4296
      %v4361 = vand.u32 2147483647, %v4297
      %v4362 = vand.u32 2147483647, %v4298
      %v4363 = vand.u32 2147483647, %v4299
      %v4364 = vand.u32 2147483647, %v4300
      %v4365 = vand.u32 2147483647, %v4301
      %v4366 = vand.u32 2147483647, %v4302
      %v4367 = vand.u32 2147483647, %v4303
      %v4368 = vand.u32 2147483647, %v4304
      %v4369 = vand.u32 2147483647, %v4305
      %v4370 = vand.u32 2147483647, %v4306
      %v4371 = vand.u32 2147483647, %v4307
      %v4372 = vand.u32 2147483647, %v4308
      %v4373 = vand.u32 2147483647, %v4309
      %v4374 = vand.u32 2147483647, %v4310
      %v4375 = vsub.f32 0.0, %v4343
      %v4376 = vsub.f32 0.0, %v4344
      %v4377 = vsub.f32 0.0, %v4345
      %v4378 = vsub.f32 0.0, %v4346
      %v4379 = vsub.f32 0.0, %v4347
      %v4380 = vsub.f32 0.0, %v4348
      %v4381 = vsub.f32 0.0, %v4349
      %v4382 = vsub.f32 0.0, %v4350
      %v4383 = vsub.f32 0.0, %v4351
      %v4384 = vsub.f32 0.0, %v4352
      %v4385 = vsub.f32 0.0, %v4353
      %v4386 = vsub.f32 0.0, %v4354
      %v4387 = vsub.f32 0.0, %v4355
      %v4388 = vsub.f32 0.0, %v4356
      %v4389 = vsub.f32 0.0, %v4357
      %v4390 = vsub.f32 0.0, %v4358
      %v4391 = vsub.f32 0.0, %v4359
      %v4392 = vsub.f32 0.0, %v4360
      %v4393 = vsub.f32 0.0, %v4361
      %v4394 = vsub.f32 0.0, %v4362
      %v4395 = vsub.f32 0.0, %v4363
      %v4396 = vsub.f32 0.0, %v4364
      %v4397 = vsub.f32 0.0, %v4365
      %v4398 = vsub.f32 0.0, %v4366
      %v4399 = vsub.f32 0.0, %v4367
      %v4400 = vsub.f32 0.0, %v4368
      %v4401 = vsub.f32 0.0, %v4369
      %v4402 = vsub.f32 0.0, %v4370
      %v4403 = vsub.f32 0.0, %v4371
      %v4404 = vsub.f32 0.0, %v4372
      %v4405 = vsub.f32 0.0, %v4373
      %v4406 = vsub.f32 0.0, %v4374
      %v4407 = vmul.f32 %v4375, 1.442695
      %v4408 = vpow.pop %v4407
      %v4409 = vmul.f32 %v4376, 1.442695
      %v4410 = vpow.pop %v4409
      %v4411 = vmul.f32 %v4377, 1.442695
      %v4412 = vpow.pop %v4411
      %v4413 = vmul.f32 %v4378, 1.442695
      %v4414 = vpow.pop %v4413
      %v4415 = vmul.f32 %v4379, 1.442695
      %v4416 = vpow.pop %v4415
      %v4417 = vmul.f32 %v4380, 1.442695
      %v4418 = vpow.pop %v4417
      %v4419 = vmul.f32 %v4381, 1.442695
      %v4420 = vpow.pop %v4419
      %v4421 = vmul.f32 %v4382, 1.442695
      %v4422 = vpow.pop %v4421
      %v4423 = vmul.f32 %v4383, 1.442695
      %v4424 = vpow.pop %v4423
      %v4425 = vmul.f32 %v4384, 1.442695
      %v4426 = vpow.pop %v4425
      %v4427 = vmul.f32 %v4385, 1.442695
      %v4428 = vpow.pop %v4427
      %v4429 = vmul.f32 %v4386, 1.442695
      %v4430 = vpow.pop %v4429
      %v4431 = vmul.f32 %v4387, 1.442695
      %v4432 = vpow.pop %v4431
      %v4433 = vmul.f32 %v4388, 1.442695
      %v4434 = vpow.pop %v4433
      %v4435 = vmul.f32 %v4389, 1.442695
      %v4436 = vpow.pop %v4435
      %v4437 = vmul.f32 %v4390, 1.442695
      %v4438 = vpow.pop %v4437
      %v4439 = vmul.f32 %v4391, 1.442695
      %v4440 = vpow.pop %v4439
      %v4441 = vmul.f32 %v4392, 1.442695
      %v4442 = vpow.pop %v4441
      %v4443 = vmul.f32 %v4393, 1.442695
      %v4444 = vpow.pop %v4443
      %v4445 = vmul.f32 %v4394, 1.442695
      %v4446 = vpow.pop %v4445
      %v4447 = vmul.f32 %v4395, 1.442695
      %v4448 = vpow.pop %v4447
      %v4449 = vmul.f32 %v4396, 1.442695
      %v4450 = vpow.pop %v4449
      %v4451 = vmul.f32 %v4397, 1.442695
      %v4452 = vpow.pop %v4451
      %v4453 = vmul.f32 %v4398, 1.442695
      %v4454 = vpow.pop %v4453
      %v4455 = vmul.f32 %v4399, 1.442695
      %v4456 = vpow.pop %v4455
      %v4457 = vmul.f32 %v4400, 1.442695
      %v4458 = vpow.pop %v4457
      %v4459 = vmul.f32 %v4401, 1.442695
      %v4460 = vpow.pop %v4459
      %v4461 = vmul.f32 %v4402, 1.442695
      %v4462 = vpow.pop %v4461
      %v4463 = vmul.f32 %v4403, 1.442695
      %v4464 = vpow.pop %v4463
      %v4465 = vmul.f32 %v4404, 1.442695
      %v4466 = vpow.pop %v4465
      %v4467 = vmul.f32 %v4405, 1.442695
      %v4468 = vpow.pop %v4467
      %v4469 = vmul.f32 %v4406, 1.442695
      %v4470 = vpow.pop %v4469
      %v4471 = vadd.f32 %v4408, 1.0
      %v4472 = vlog2.pop %v4471
      %v4473 = vmul.f32 %v4472, 0.6931472
      %v4474 = vmul.f32 -0.5, %v4408
      %v4475 = vadd.f32 %v4474, 1.0
      %v4476 = vmul.f32 %v4475, %v4408
      %v4477 = vand.u32 2147483647, %v4408
      %vm4478 = vcmp.lt.f32.partialorder %v4477, 0.0004427343
      %v4479 = vsel %vm4478, %v4476, %v4473
      %v4480 = vadd.f32 %v4410, 1.0
      %v4481 = vlog2.pop %v4480
      %v4482 = vmul.f32 %v4481, 0.6931472
      %v4483 = vmul.f32 -0.5, %v4410
      %v4484 = vadd.f32 %v4483, 1.0
      %v4485 = vmul.f32 %v4484, %v4410
      %v4486 = vand.u32 2147483647, %v4410
      %vm4487 = vcmp.lt.f32.partialorder %v4486, 0.0004427343
      %v4488 = vsel %vm4487, %v4485, %v4482
      %v4489 = vadd.f32 %v4412, 1.0
      %v4490 = vlog2.pop %v4489
      %v4491 = vmul.f32 %v4490, 0.6931472
      %v4492 = vmul.f32 -0.5, %v4412
      %v4493 = vadd.f32 %v4492, 1.0
      %v4494 = vmul.f32 %v4493, %v4412
      %v4495 = vand.u32 2147483647, %v4412
      %vm4496 = vcmp.lt.f32.partialorder %v4495, 0.0004427343
      %v4497 = vsel %vm4496, %v4494, %v4491
      %v4498 = vadd.f32 %v4414, 1.0
      %v4499 = vlog2.pop %v4498
      %v4500 = vmul.f32 %v4499, 0.6931472
      %v4501 = vmul.f32 -0.5, %v4414
      %v4502 = vadd.f32 %v4501, 1.0
      %v4503 = vmul.f32 %v4502, %v4414
      %v4504 = vand.u32 2147483647, %v4414
      %vm4505 = vcmp.lt.f32.partialorder %v4504, 0.0004427343
      %v4506 = vsel %vm4505, %v4503, %v4500
      %v4507 = vadd.f32 %v4416, 1.0
      %v4508 = vlog2.pop %v4507
      %v4509 = vmul.f32 %v4508, 0.6931472
      %v4510 = vmul.f32 -0.5, %v4416
      %v4511 = vadd.f32 %v4510, 1.0
      %v4512 = vmul.f32 %v4511, %v4416
      %v4513 = vand.u32 2147483647, %v4416
      %vm4514 = vcmp.lt.f32.partialorder %v4513, 0.0004427343
      %v4515 = vsel %vm4514, %v4512, %v4509
      %v4516 = vadd.f32 %v4418, 1.0
      %v4517 = vlog2.pop %v4516
      %v4518 = vmul.f32 %v4517, 0.6931472
      %v4519 = vmul.f32 -0.5, %v4418
      %v4520 = vadd.f32 %v4519, 1.0
      %v4521 = vmul.f32 %v4520, %v4418
      %v4522 = vand.u32 2147483647, %v4418
      %vm4523 = vcmp.lt.f32.partialorder %v4522, 0.0004427343
      %v4524 = vsel %vm4523, %v4521, %v4518
      %v4525 = vadd.f32 %v4420, 1.0
      %v4526 = vlog2.pop %v4525
      %v4527 = vmul.f32 %v4526, 0.6931472
      %v4528 = vmul.f32 -0.5, %v4420
      %v4529 = vadd.f32 %v4528, 1.0
      %v4530 = vmul.f32 %v4529, %v4420
      %v4531 = vand.u32 2147483647, %v4420
      %vm4532 = vcmp.lt.f32.partialorder %v4531, 0.0004427343
      %v4533 = vsel %vm4532, %v4530, %v4527
      %v4534 = vadd.f32 %v4422, 1.0
      %v4535 = vlog2.pop %v4534
      %v4536 = vmul.f32 %v4535, 0.6931472
      %v4537 = vmul.f32 -0.5, %v4422
      %v4538 = vadd.f32 %v4537, 1.0
      %v4539 = vmul.f32 %v4538, %v4422
      %v4540 = vand.u32 2147483647, %v4422
      %vm4541 = vcmp.lt.f32.partialorder %v4540, 0.0004427343
      %v4542 = vsel %vm4541, %v4539, %v4536
      %v4543 = vadd.f32 %v4424, 1.0
      %v4544 = vlog2.pop %v4543
      %v4545 = vmul.f32 %v4544, 0.6931472
      %v4546 = vmul.f32 -0.5, %v4424
      %v4547 = vadd.f32 %v4546, 1.0
      %v4548 = vmul.f32 %v4547, %v4424
      %v4549 = vand.u32 2147483647, %v4424
      %vm4550 = vcmp.lt.f32.partialorder %v4549, 0.0004427343
      %v4551 = vsel %vm4550, %v4548, %v4545
      %v4552 = vadd.f32 %v4426, 1.0
      %v4553 = vlog2.pop %v4552
      %v4554 = vmul.f32 %v4553, 0.6931472
      %v4555 = vmul.f32 -0.5, %v4426
      %v4556 = vadd.f32 %v4555, 1.0
      %v4557 = vmul.f32 %v4556, %v4426
      %v4558 = vand.u32 2147483647, %v4426
      %vm4559 = vcmp.lt.f32.partialorder %v4558, 0.0004427343
      %v4560 = vsel %vm4559, %v4557, %v4554
      %v4561 = vadd.f32 %v4428, 1.0
      %v4562 = vlog2.pop %v4561
      %v4563 = vmul.f32 %v4562, 0.6931472
      %v4564 = vmul.f32 -0.5, %v4428
      %v4565 = vadd.f32 %v4564, 1.0
      %v4566 = vmul.f32 %v4565, %v4428
      %v4567 = vand.u32 2147483647, %v4428
      %vm4568 = vcmp.lt.f32.partialorder %v4567, 0.0004427343
      %v4569 = vsel %vm4568, %v4566, %v4563
      %v4570 = vadd.f32 %v4430, 1.0
      %v4571 = vlog2.pop %v4570
      %v4572 = vmul.f32 %v4571, 0.6931472
      %v4573 = vmul.f32 -0.5, %v4430
      %v4574 = vadd.f32 %v4573, 1.0
      %v4575 = vmul.f32 %v4574, %v4430
      %v4576 = vand.u32 2147483647, %v4430
      %vm4577 = vcmp.lt.f32.partialorder %v4576, 0.0004427343
      %v4578 = vsel %vm4577, %v4575, %v4572
      %v4579 = vadd.f32 %v4432, 1.0
      %v4580 = vlog2.pop %v4579
      %v4581 = vmul.f32 %v4580, 0.6931472
      %v4582 = vmul.f32 -0.5, %v4432
      %v4583 = vadd.f32 %v4582, 1.0
      %v4584 = vmul.f32 %v4583, %v4432
      %v4585 = vand.u32 2147483647, %v4432
      %vm4586 = vcmp.lt.f32.partialorder %v4585, 0.0004427343
      %v4587 = vsel %vm4586, %v4584, %v4581
      %v4588 = vadd.f32 %v4434, 1.0
      %v4589 = vlog2.pop %v4588
      %v4590 = vmul.f32 %v4589, 0.6931472
      %v4591 = vmul.f32 -0.5, %v4434
      %v4592 = vadd.f32 %v4591, 1.0
      %v4593 = vmul.f32 %v4592, %v4434
      %v4594 = vand.u32 2147483647, %v4434
      %vm4595 = vcmp.lt.f32.partialorder %v4594, 0.0004427343
      %v4596 = vsel %vm4595, %v4593, %v4590
      %v4597 = vadd.f32 %v4436, 1.0
      %v4598 = vlog2.pop %v4597
      %v4599 = vmul.f32 %v4598, 0.6931472
      %v4600 = vmul.f32 -0.5, %v4436
      %v4601 = vadd.f32 %v4600, 1.0
      %v4602 = vmul.f32 %v4601, %v4436
      %v4603 = vand.u32 2147483647, %v4436
      %vm4604 = vcmp.lt.f32.partialorder %v4603, 0.0004427343
      %v4605 = vsel %vm4604, %v4602, %v4599
      %v4606 = vadd.f32 %v4438, 1.0
      %v4607 = vlog2.pop %v4606
      %v4608 = vmul.f32 %v4607, 0.6931472
      %v4609 = vmul.f32 -0.5, %v4438
      %v4610 = vadd.f32 %v4609, 1.0
      %v4611 = vmul.f32 %v4610, %v4438
      %v4612 = vand.u32 2147483647, %v4438
      %vm4613 = vcmp.lt.f32.partialorder %v4612, 0.0004427343
      %v4614 = vsel %vm4613, %v4611, %v4608
      %v4615 = vadd.f32 %v4440, 1.0
      %v4616 = vlog2.pop %v4615
      %v4617 = vmul.f32 %v4616, 0.6931472
      %v4618 = vmul.f32 -0.5, %v4440
      %v4619 = vadd.f32 %v4618, 1.0
      %v4620 = vmul.f32 %v4619, %v4440
      %v4621 = vand.u32 2147483647, %v4440
      %vm4622 = vcmp.lt.f32.partialorder %v4621, 0.0004427343
      %v4623 = vsel %vm4622, %v4620, %v4617
      %v4624 = vadd.f32 %v4442, 1.0
      %v4625 = vlog2.pop %v4624
      %v4626 = vmul.f32 %v4625, 0.6931472
      %v4627 = vmul.f32 -0.5, %v4442
      %v4628 = vadd.f32 %v4627, 1.0
      %v4629 = vmul.f32 %v4628, %v4442
      %v4630 = vand.u32 2147483647, %v4442
      %vm4631 = vcmp.lt.f32.partialorder %v4630, 0.0004427343
      %v4632 = vsel %vm4631, %v4629, %v4626
      %v4633 = vadd.f32 %v4444, 1.0
      %v4634 = vlog2.pop %v4633
      %v4635 = vmul.f32 %v4634, 0.6931472
      %v4636 = vmul.f32 -0.5, %v4444
      %v4637 = vadd.f32 %v4636, 1.0
      %v4638 = vmul.f32 %v4637, %v4444
      %v4639 = vand.u32 2147483647, %v4444
      %vm4640 = vcmp.lt.f32.partialorder %v4639, 0.0004427343
      %v4641 = vsel %vm4640, %v4638, %v4635
      %v4642 = vadd.f32 %v4446, 1.0
      %v4643 = vlog2.pop %v4642
      %v4644 = vmul.f32 %v4643, 0.6931472
      %v4645 = vmul.f32 -0.5, %v4446
      %v4646 = vadd.f32 %v4645, 1.0
      %v4647 = vmul.f32 %v4646, %v4446
      %v4648 = vand.u32 2147483647, %v4446
      %vm4649 = vcmp.lt.f32.partialorder %v4648, 0.0004427343
      %v4650 = vsel %vm4649, %v4647, %v4644
      %v4651 = vadd.f32 %v4448, 1.0
      %v4652 = vlog2.pop %v4651
      %v4653 = vmul.f32 %v4652, 0.6931472
      %v4654 = vmul.f32 -0.5, %v4448
      %v4655 = vadd.f32 %v4654, 1.0
      %v4656 = vmul.f32 %v4655, %v4448
      %v4657 = vand.u32 2147483647, %v4448
      %vm4658 = vcmp.lt.f32.partialorder %v4657, 0.0004427343
      %v4659 = vsel %vm4658, %v4656, %v4653
      %v4660 = vadd.f32 %v4450, 1.0
      %v4661 = vlog2.pop %v4660
      %v4662 = vmul.f32 %v4661, 0.6931472
      %v4663 = vmul.f32 -0.5, %v4450
      %v4664 = vadd.f32 %v4663, 1.0
      %v4665 = vmul.f32 %v4664, %v4450
      %v4666 = vand.u32 2147483647, %v4450
      %vm4667 = vcmp.lt.f32.partialorder %v4666, 0.0004427343
      %v4668 = vsel %vm4667, %v4665, %v4662
      %v4669 = vadd.f32 %v4452, 1.0
      %v4670 = vlog2.pop %v4669
      %v4671 = vmul.f32 %v4670, 0.6931472
      %v4672 = vmul.f32 -0.5, %v4452
      %v4673 = vadd.f32 %v4672, 1.0
      %v4674 = vmul.f32 %v4673, %v4452
      %v4675 = vand.u32 2147483647, %v4452
      %vm4676 = vcmp.lt.f32.partialorder %v4675, 0.0004427343
      %v4677 = vsel %vm4676, %v4674, %v4671
      %v4678 = vadd.f32 %v4454, 1.0
      %v4679 = vlog2.pop %v4678
      %v4680 = vmul.f32 %v4679, 0.6931472
      %v4681 = vmul.f32 -0.5, %v4454
      %v4682 = vadd.f32 %v4681, 1.0
      %v4683 = vmul.f32 %v4682, %v4454
      %v4684 = vand.u32 2147483647, %v4454
      %vm4685 = vcmp.lt.f32.partialorder %v4684, 0.0004427343
      %v4686 = vsel %vm4685, %v4683, %v4680
      %v4687 = vadd.f32 %v4456, 1.0
      %v4688 = vlog2.pop %v4687
      %v4689 = vmul.f32 %v4688, 0.6931472
      %v4690 = vmul.f32 -0.5, %v4456
      %v4691 = vadd.f32 %v4690, 1.0
      %v4692 = vmul.f32 %v4691, %v4456
      %v4693 = vand.u32 2147483647, %v4456
      %vm4694 = vcmp.lt.f32.partialorder %v4693, 0.0004427343
      %v4695 = vsel %vm4694, %v4692, %v4689
      %v4696 = vadd.f32 %v4458, 1.0
      %v4697 = vlog2.pop %v4696
      %v4698 = vmul.f32 %v4697, 0.6931472
      %v4699 = vmul.f32 -0.5, %v4458
      %v4700 = vadd.f32 %v4699, 1.0
      %v4701 = vmul.f32 %v4700, %v4458
      %v4702 = vand.u32 2147483647, %v4458
      %vm4703 = vcmp.lt.f32.partialorder %v4702, 0.0004427343
      %v4704 = vsel %vm4703, %v4701, %v4698
      %v4705 = vadd.f32 %v4460, 1.0
      %v4706 = vlog2.pop %v4705
      %v4707 = vmul.f32 %v4706, 0.6931472
      %v4708 = vmul.f32 -0.5, %v4460
      %v4709 = vadd.f32 %v4708, 1.0
      %v4710 = vmul.f32 %v4709, %v4460
      %v4711 = vand.u32 2147483647, %v4460
      %vm4712 = vcmp.lt.f32.partialorder %v4711, 0.0004427343
      %v4713 = vsel %vm4712, %v4710, %v4707
      %v4714 = vadd.f32 %v4462, 1.0
      %v4715 = vlog2.pop %v4714
      %v4716 = vmul.f32 %v4715, 0.6931472
      %v4717 = vmul.f32 -0.5, %v4462
      %v4718 = vadd.f32 %v4717, 1.0
      %v4719 = vmul.f32 %v4718, %v4462
      %v4720 = vand.u32 2147483647, %v4462
      %vm4721 = vcmp.lt.f32.partialorder %v4720, 0.0004427343
      %v4722 = vsel %vm4721, %v4719, %v4716
      %v4723 = vadd.f32 %v4464, 1.0
      %v4724 = vlog2.pop %v4723
      %v4725 = vmul.f32 %v4724, 0.6931472
      %v4726 = vmul.f32 -0.5, %v4464
      %v4727 = vadd.f32 %v4726, 1.0
      %v4728 = vmul.f32 %v4727, %v4464
      %v4729 = vand.u32 2147483647, %v4464
      %vm4730 = vcmp.lt.f32.partialorder %v4729, 0.0004427343
      %v4731 = vsel %vm4730, %v4728, %v4725
      %v4732 = vadd.f32 %v4466, 1.0
      %v4733 = vlog2.pop %v4732
      %v4734 = vmul.f32 %v4733, 0.6931472
      %v4735 = vmul.f32 -0.5, %v4466
      %v4736 = vadd.f32 %v4735, 1.0
      %v4737 = vmul.f32 %v4736, %v4466
      %v4738 = vand.u32 2147483647, %v4466
      %vm4739 = vcmp.lt.f32.partialorder %v4738, 0.0004427343
      %v4740 = vsel %vm4739, %v4737, %v4734
      %v4741 = vadd.f32 %v4468, 1.0
      %v4742 = vlog2.pop %v4741
      %v4743 = vmul.f32 %v4742, 0.6931472
      %v4744 = vmul.f32 -0.5, %v4468
      %v4745 = vadd.f32 %v4744, 1.0
      %v4746 = vmul.f32 %v4745, %v4468
      %v4747 = vand.u32 2147483647, %v4468
      %vm4748 = vcmp.lt.f32.partialorder %v4747, 0.0004427343
      %v4749 = vsel %vm4748, %v4746, %v4743
      %v4750 = vadd.f32 %v4470, 1.0
      %v4751 = vlog2.pop %v4750
      %v4752 = vmul.f32 %v4751, 0.6931472
      %v4753 = vmul.f32 -0.5, %v4470
      %v4754 = vadd.f32 %v4753, 1.0
      %v4755 = vmul.f32 %v4754, %v4470
      %v4756 = vand.u32 2147483647, %v4470
      %vm4757 = vcmp.lt.f32.partialorder %v4756, 0.0004427343
      %v4758 = vsel %vm4757, %v4755, %v4752
      %v4759 = vadd.f32 %v4311, %v4479
      %v4760 = vadd.f32 %v4312, %v4488
      %v4761 = vadd.f32 %v4313, %v4497
      %v4762 = vadd.f32 %v4314, %v4506
      %v4763 = vadd.f32 %v4315, %v4515
      %v4764 = vadd.f32 %v4316, %v4524
      %v4765 = vadd.f32 %v4317, %v4533
      %v4766 = vadd.f32 %v4318, %v4542
      %v4767 = vadd.f32 %v4319, %v4551
      %v4768 = vadd.f32 %v4320, %v4560
      %v4769 = vadd.f32 %v4321, %v4569
      %v4770 = vadd.f32 %v4322, %v4578
      %v4771 = vadd.f32 %v4323, %v4587
      %v4772 = vadd.f32 %v4324, %v4596
      %v4773 = vadd.f32 %v4325, %v4605
      %v4774 = vadd.f32 %v4326, %v4614
      %v4775 = vadd.f32 %v4327, %v4623
      %v4776 = vadd.f32 %v4328, %v4632
      %v4777 = vadd.f32 %v4329, %v4641
      %v4778 = vadd.f32 %v4330, %v4650
      %v4779 = vadd.f32 %v4331, %v4659
      %v4780 = vadd.f32 %v4332, %v4668
      %v4781 = vadd.f32 %v4333, %v4677
      %v4782 = vadd.f32 %v4334, %v4686
      %v4783 = vadd.f32 %v4335, %v4695
      %v4784 = vadd.f32 %v4336, %v4704
      %v4785 = vadd.f32 %v4337, %v4713
      %v4786 = vadd.f32 %v4338, %v4722
      %v4787 = vadd.f32 %v4339, %v4731
      %v4788 = vadd.f32 %v4340, %v4740
      %v4789 = vadd.f32 %v4341, %v4749
      %v4790 = vadd.f32 %v4342, %v4758
      %v4791 = vmul.f32 %v4759, 0.041666668
      %v4792 = vmul.f32 %v4760, 0.041666668
      %v4793 = vmul.f32 %v4761, 0.041666668
      %v4794 = vmul.f32 %v4762, 0.041666668
      %v4795 = vmul.f32 %v4763, 0.041666668
      %v4796 = vmul.f32 %v4764, 0.041666668
      %v4797 = vmul.f32 %v4765, 0.041666668
      %v4798 = vmul.f32 %v4766, 0.041666668
      %v4799 = vmul.f32 %v4767, 0.041666668
      %v4800 = vmul.f32 %v4768, 0.041666668
      %v4801 = vmul.f32 %v4769, 0.041666668
      %v4802 = vmul.f32 %v4770, 0.041666668
      %v4803 = vmul.f32 %v4771, 0.041666668
      %v4804 = vmul.f32 %v4772, 0.041666668
      %v4805 = vmul.f32 %v4773, 0.041666668
      %v4806 = vmul.f32 %v4774, 0.041666668
      %v4807 = vmul.f32 %v4775, 0.041666668
      %v4808 = vmul.f32 %v4776, 0.041666668
      %v4809 = vmul.f32 %v4777, 0.041666668
      %v4810 = vmul.f32 %v4778, 0.041666668
      %v4811 = vmul.f32 %v4779, 0.041666668
      %v4812 = vmul.f32 %v4780, 0.041666668
      %v4813 = vmul.f32 %v4781, 0.041666668
      %v4814 = vmul.f32 %v4782, 0.041666668
      %v4815 = vmul.f32 %v4783, 0.041666668
      %v4816 = vmul.f32 %v4784, 0.041666668
      %v4817 = vmul.f32 %v4785, 0.041666668
      %v4818 = vmul.f32 %v4786, 0.041666668
      %v4819 = vmul.f32 %v4787, 0.041666668
      %v4820 = vmul.f32 %v4788, 0.041666668
      %v4821 = vmul.f32 %v4789, 0.041666668
      %v4822 = vmul.f32 %v4790, 0.041666668
      %s4823 = sld [smem:[#allocation6]]
      %v4824 = vld [vmem:[%s272] sm:$0xff]
      %v4825 = vld [vmem:[%s272 + $0x8] sm:$0xff]
      %v4826 = vld [vmem:[%s272 + $0x10] sm:$0xff]
      %v4827 = vld [vmem:[%s272 + $0x18] sm:$0xff]
      %v4828 = vld [vmem:[%s272 + $0x20] sm:$0xff]
      %v4829 = vld [vmem:[%s272 + $0x28] sm:$0xff]
      %v4830 = vld [vmem:[%s272 + $0x30] sm:$0xff]
      %v4831 = vld [vmem:[%s272 + $0x38] sm:$0xff]
      %v4832 = vld [vmem:[%s272 + $0x40] sm:$0xff]
      %v4833 = vld [vmem:[%s272 + $0x48] sm:$0xff]
      %v4834 = vld [vmem:[%s272 + $0x50] sm:$0xff]
      %v4835 = vld [vmem:[%s272 + $0x58] sm:$0xff]
      %v4836 = vld [vmem:[%s272 + $0x60] sm:$0xff]
      %v4837 = vld [vmem:[%s272 + $0x68] sm:$0xff]
      %v4838 = vld [vmem:[%s272 + $0x70] sm:$0xff]
      %v4839 = vld [vmem:[%s272 + $0x78] sm:$0xff]
      %v4840 = vld [vmem:[%s272 + $0x80] sm:$0xff]
      %v4841 = vld [vmem:[%s272 + $0x88] sm:$0xff]
      %v4842 = vld [vmem:[%s272 + $0x90] sm:$0xff]
      %v4843 = vld [vmem:[%s272 + $0x98] sm:$0xff]
      %v4844 = vld [vmem:[%s272 + $0xa0] sm:$0xff]
      %v4845 = vld [vmem:[%s272 + $0xa8] sm:$0xff]
      %v4846 = vld [vmem:[%s272 + $0xb0] sm:$0xff]
      %v4847 = vld [vmem:[%s272 + $0xb8] sm:$0xff]
      %v4848 = vld [vmem:[%s272 + $0xc0] sm:$0xff]
      %v4849 = vld [vmem:[%s272 + $0xc8] sm:$0xff]
      %v4850 = vld [vmem:[%s272 + $0xd0] sm:$0xff]
      %v4851 = vld [vmem:[%s272 + $0xd8] sm:$0xff]
      %v4852 = vld [vmem:[%s272 + $0xe0] sm:$0xff]
      %v4853 = vld [vmem:[%s272 + $0xe8] sm:$0xff]
      %v4854 = vld [vmem:[%s272 + $0xf0] sm:$0xff]
      %v4855 = vld [vmem:[%s272 + $0xf8] sm:$0xff]
      %v4856 = vmul.f32 %v4791, %v4824
      %v4857 = vmul.f32 %v4792, %v4825
      %v4858 = vmul.f32 %v4793, %v4826
      %v4859 = vmul.f32 %v4794, %v4827
      %v4860 = vmul.f32 %v4795, %v4828
      %v4861 = vmul.f32 %v4796, %v4829
      %v4862 = vmul.f32 %v4797, %v4830
      %v4863 = vmul.f32 %v4798, %v4831
      %v4864 = vmul.f32 %v4799, %v4832
      %v4865 = vmul.f32 %v4800, %v4833
      %v4866 = vmul.f32 %v4801, %v4834
      %v4867 = vmul.f32 %v4802, %v4835
      %v4868 = vmul.f32 %v4803, %v4836
      %v4869 = vmul.f32 %v4804, %v4837
      %v4870 = vmul.f32 %v4805, %v4838
      %v4871 = vmul.f32 %v4806, %v4839
      %v4872 = vmul.f32 %v4807, %v4840
      %v4873 = vmul.f32 %v4808, %v4841
      %v4874 = vmul.f32 %v4809, %v4842
      %v4875 = vmul.f32 %v4810, %v4843
      %v4876 = vmul.f32 %v4811, %v4844
      %v4877 = vmul.f32 %v4812, %v4845
      %v4878 = vmul.f32 %v4813, %v4846
      %v4879 = vmul.f32 %v4814, %v4847
      %v4880 = vmul.f32 %v4815, %v4848
      %v4881 = vmul.f32 %v4816, %v4849
      %v4882 = vmul.f32 %v4817, %v4850
      %v4883 = vmul.f32 %v4818, %v4851
      %v4884 = vmul.f32 %v4819, %v4852
      %v4885 = vmul.f32 %v4820, %v4853
      %v4886 = vmul.f32 %v4821, %v4854
      %v4887 = vmul.f32 %v4822, %v4855
      %vm4888 = vcmask 7168
      %v4889 = vsel %vm4888, %v4856, 0.0
      %v4890 = vsel %vm4888, %v4857, 0.0
      %v4891 = vadd.f32 %v4889, %v4890
      %v4892 = vsel %vm4888, %v4858, 0.0
      %v4893 = vadd.f32 %v4891, %v4892
      %v4894 = vsel %vm4888, %v4859, 0.0
      %v4895 = vadd.f32 %v4893, %v4894
      %v4896 = vsel %vm4888, %v4860, 0.0
      %v4897 = vadd.f32 %v4895, %v4896
      %v4898 = vsel %vm4888, %v4861, 0.0
      %v4899 = vadd.f32 %v4897, %v4898
      %v4900 = vsel %vm4888, %v4862, 0.0
      %v4901 = vadd.f32 %v4899, %v4900
      %v4902 = vsel %vm4888, %v4863, 0.0
      %v4903 = vadd.f32 %v4901, %v4902
      %v4904 = vsel %vm4888, %v4864, 0.0
      %v4905 = vadd.f32 %v4903, %v4904
      %v4906 = vsel %vm4888, %v4865, 0.0
      %v4907 = vadd.f32 %v4905, %v4906
      %v4908 = vsel %vm4888, %v4866, 0.0
      %v4909 = vadd.f32 %v4907, %v4908
      %v4910 = vsel %vm4888, %v4867, 0.0
      %v4911 = vadd.f32 %v4909, %v4910
      %v4912 = vsel %vm4888, %v4868, 0.0
      %v4913 = vadd.f32 %v4911, %v4912
      %v4914 = vsel %vm4888, %v4869, 0.0
      %v4915 = vadd.f32 %v4913, %v4914
      %v4916 = vsel %vm4888, %v4870, 0.0
      %v4917 = vadd.f32 %v4915, %v4916
      %v4918 = vsel %vm4888, %v4871, 0.0
      %v4919 = vadd.f32 %v4917, %v4918
      %v4920 = vsel %vm4888, %v4872, 0.0
      %v4921 = vadd.f32 %v4919, %v4920
      %v4922 = vsel %vm4888, %v4873, 0.0
      %v4923 = vadd.f32 %v4921, %v4922
      %v4924 = vsel %vm4888, %v4874, 0.0
      %v4925 = vadd.f32 %v4923, %v4924
      %v4926 = vsel %vm4888, %v4875, 0.0
      %v4927 = vadd.f32 %v4925, %v4926
      %v4928 = vsel %vm4888, %v4876, 0.0
      %v4929 = vadd.f32 %v4927, %v4928
      %v4930 = vsel %vm4888, %v4877, 0.0
      %v4931 = vadd.f32 %v4929, %v4930
      %v4932 = vsel %vm4888, %v4878, 0.0
      %v4933 = vadd.f32 %v4931, %v4932
      %v4934 = vsel %vm4888, %v4879, 0.0
      %v4935 = vadd.f32 %v4933, %v4934
      %v4936 = vsel %vm4888, %v4880, 0.0
      %v4937 = vadd.f32 %v4935, %v4936
      %v4938 = vsel %vm4888, %v4881, 0.0
      %v4939 = vadd.f32 %v4937, %v4938
      %v4940 = vsel %vm4888, %v4882, 0.0
      %v4941 = vadd.f32 %v4939, %v4940
      %v4942 = vsel %vm4888, %v4883, 0.0
      %v4943 = vadd.f32 %v4941, %v4942
      %v4944 = vsel %vm4888, %v4884, 0.0
      %v4945 = vadd.f32 %v4943, %v4944
      %v4946 = vsel %vm4888, %v4885, 0.0
      %v4947 = vadd.f32 %v4945, %v4946
      %v4948 = vsel %vm4888, %v4886, 0.0
      %v4949 = vadd.f32 %v4947, %v4948
      %v4950 = vsel %vm4888, %v4887, 0.0
      %v4951 = vadd.f32 %v4949, %v4950
      %4952 = vadd.xlane.f32.xlu0 %v4951
      %v4953 = vpop.xlane.xlu0 %4952
      %v4954 = vrot.slane %v4953, 4
      %v4955 = vadd.f32 %v4953, %v4954
      %v4956 = vrot.slane %v4955, 2
      %v4957 = vadd.f32 %v4955, %v4956
      %v4958 = vrot.slane %v4957, 1
      %v4959 = vadd.f32 %v4957, %v4958
      %s4960 = vtos %v4959
      %s4961 = sadd.f32 %s4823, %s4960
      %s4962 = scalar_lea.smem [#allocation6], 0
      %4963 = sst [smem:[%s4962]] %s4961
      %v4964 = vld [vmem:[#allocation2] sm:$0x3]
      %v4965 = vmax.f32 %v4964, %v2976
      %v4966 = vld [vmem:[#allocation3] sm:$0x3]
      %v4967 = vsub.f32 %v4964, %v4965
      %v4968 = vmul.f32 %v4967, 1.442695
      %v4969 = vpow.pop %v4968
      %v4970 = vmul.f32 %v4966, %v4969
      %v4971 = vsub.f32 %v2976, %v4965
      %v4972 = vmul.f32 %v4971, 1.442695
      %v4973 = vpow.pop %v4972
      %v4975 = vlaneseq
      %v4976 = vshrl.u32 %v4975, 7
      %v4977 = vsub.s32 0, %v4976
      %v4978 = vrot.slane %v4973, %v4977
      %v4979 = vlaneseq
      %v4980 = vshrl.u32 %v4979, 7
      %v4981 = vsub.s32 1, %v4980
      %v4982 = vrot.slane %v4973, %v4981
      %v4985 = vmul.f32 %v3204, %v4978
      %v4986 = vmul.f32 %v3206, %v4982
      %v4989 = vcombine.low %v4985, %v4986
      %v4991 = vunpack.c.l.s4 1966171168
      %v4992 = vunpack.c.0.s8 %v4991
      %v4993 = vlaneseq
      %v4994 = vshrl.u32 %v4993, 7
      %v4995 = vsub.s32 %v4992, %v4994
      %v4996 = vrot.slane %v4989, %v4995
      %v4998 = vunpack.c.l.s4 1966171168
      %v4999 = vunpack.c.0.s8 %v4998
      %v5000 = vlaneseq
      %v5001 = vshrl.u32 %v5000, 7
      %v5002 = vsub.s32 %v4999, %v5001
      %v5003 = vrot.slane %v4996, %v5002
      %v5005 = vadd.f32 %v4970, %v5003
      %v5006 = vlaneseq
      %vm5007 = vcmp.ge.s32.totalorder %v5006, 0
      %vm5008 = vcmp.lt.s32.totalorder %v5006, 256
      %vm5009 = vmand %vm5007, %vm5008
      %5010 = vst.msk [vmem:[#allocation3] sm:$0x3] %vm5009, %v5005
      %5011 = vst.msk [vmem:[#allocation2] sm:$0x3] %vm5009, %v4965
      %v5012 = vld [vmem:[#allocation4] sm:$0x3]
      %v5013 = vmax.f32 %v5012, %v4047
      %v5014 = vld [vmem:[#allocation5] sm:$0x3]
      %v5015 = vsub.f32 %v5012, %v5013
      %v5016 = vmul.f32 %v5015, 1.442695
      %v5017 = vpow.pop %v5016
      %v5018 = vmul.f32 %v5014, %v5017
      %v5019 = vsub.f32 %v4047, %v5013
      %v5020 = vmul.f32 %v5019, 1.442695
      %v5021 = vpow.pop %v5020
      %v5023 = vlaneseq
      %v5024 = vshrl.u32 %v5023, 7
      %v5025 = vsub.s32 0, %v5024
      %v5026 = vrot.slane %v5021, %v5025
      %v5027 = vlaneseq
      %v5028 = vshrl.u32 %v5027, 7
      %v5029 = vsub.s32 1, %v5028
      %v5030 = vrot.slane %v5021, %v5029
      %v5033 = vmul.f32 %v4275, %v5026
      %v5034 = vmul.f32 %v4277, %v5030
      %v5037 = vcombine.low %v5033, %v5034
      %v5039 = vunpack.c.l.s4 1966171168
      %v5040 = vunpack.c.0.s8 %v5039
      %v5041 = vlaneseq
      %v5042 = vshrl.u32 %v5041, 7
      %v5043 = vsub.s32 %v5040, %v5042
      %v5044 = vrot.slane %v5037, %v5043
      %v5046 = vunpack.c.l.s4 1966171168
      %v5047 = vunpack.c.0.s8 %v5046
      %v5048 = vlaneseq
      %v5049 = vshrl.u32 %v5048, 7
      %v5050 = vsub.s32 %v5047, %v5049
      %v5051 = vrot.slane %v5044, %v5050
      %v5053 = vadd.f32 %v5018, %v5051
      %5054 = vst.msk [vmem:[#allocation5] sm:$0x3] %vm5009, %v5053
      %5055 = vst.msk [vmem:[#allocation4] sm:$0x3] %vm5009, %v5013
      // Predicated region
      $region41: #{coarse_matching_loss.1} parent=35 // pred_check
        %p5056 = pneg %p281
      $region42: #{coarse_matching_loss.1} parent=35 // pred_check_branch
        %5058 = sbr.rel (%p5056) target = $region44
      $region43: #{coarse_matching_loss.1} parent=35 // pred_region
        %v5059 = vlaneseq
        %v5060 = vand.u32 %v5059, 127
        %v5061 = vadd.s32 %v5060, 128
        %v5062 = vld [vmem:[#allocation2] sm:$0x3]
        %5063 = vst.msk [vmem:[%s279] ss:$8 sm:$0x3] %vm5009, %v5062
        %5064 = vst.msk [vmem:[%s279] ss:$8 sm:$0x0] %vm5009, %v5062
        %v5065 = vld [vmem:[#allocation3] sm:$0x3]
        %s5066 = scalar_lea.vmem %s279, 1
        %5067 = vst.msk [vmem:[%s5066] ss:$8 sm:$0x3] %vm5009, %v5065
        %5068 = vst.msk [vmem:[%s5066] ss:$8 sm:$0x0] %vm5009, %v5065
        %v5069 = vld [vmem:[#allocation4] sm:$0x3]
        %s5070 = scalar_lea.vmem %s279, 2
        %5071 = vst.msk [vmem:[%s5070] ss:$8 sm:$0x3] %vm5009, %v5069
        %5072 = vst.msk [vmem:[%s5070] ss:$8 sm:$0x0] %vm5009, %v5069
        %v5073 = vld [vmem:[#allocation5] sm:$0x3]
        %s5074 = scalar_lea.vmem %s279, 3
        %5075 = vst.msk [vmem:[%s5074] ss:$8 sm:$0x3] %vm5009, %v5073
        %5076 = vst.msk [vmem:[%s5074] ss:$8 sm:$0x0] %vm5009, %v5073
        %vm5077 = vcmp.eq.s32.totalorder %v5060, 0
        %vm5078 = vcmp.eq.s32.totalorder %v5061, 0
        %s5079 = sld [smem:[#allocation6]]
        %v5080 = vstv %s5079
        %v5081 = vsel %vm5077, %v5080, 0.0
        %v5082 = vsel %vm5078, %v5080, 0.0
        %v5085 = vcombine.low %v5081, %v5082
        %v5087 = vunpack.c.l.s4 1966171168
        %v5088 = vunpack.c.0.s8 %v5087
        %v5089 = vlaneseq
        %v5090 = vshrl.u32 %v5089, 7
        %v5091 = vsub.s32 %v5088, %v5090
        %v5092 = vrot.slane %v5085, %v5091
        %v5094 = vunpack.c.l.s4 1966171168
        %v5095 = vunpack.c.0.s8 %v5094
        %v5096 = vlaneseq
        %v5097 = vshrl.u32 %v5096, 7
        %v5098 = vsub.s32 %v5095, %v5097
        %v5099 = vrot.slane %v5092, %v5098
        %s5101 = scalar_lea.vmem %s279, 4
        %5102 = vst.msk [vmem:[%s5101] ss:$8 sm:$0x3] %vm5009, %v5099
        %5103 = vst.msk [vmem:[%s5101] ss:$8 sm:$0x0] %vm5009, %v5099
        %5104 = vst [vmem:[%s279] sm:$0xe0] 0.0
        %5105 = vst [vmem:[%s279 + $0x8] sm:$0xe0] 0.0
      $region44: #{coarse_matching_loss.1} parent=35 // pred_fallthru
        _
      %p5106 = scmp.lt.s32.totalorder %s19, 1
      %s5107 = scalar_select %p5106, %s19, 1
      %s5108 = smul.addr %s5107, 2
      %s5109 = smul.addr %s5108, 8
      %s5110 = scalar_lea.vmem %s4, %s5109
      // Predicated region
      $region45: #{coarse_matching_loss.1} parent=35 // pred_check
        %p5111 = pneg %p150
      $region46: #{coarse_matching_loss.1} parent=35 // pred_check_branch
        %5113 = sbr.rel (%p5111) target = $region48
      $region47: #{coarse_matching_loss.1} parent=35 // pred_region
        _
      $region48: #{coarse_matching_loss.1} parent=35 // pred_fallthru
        _
    $region36: #{coarse_matching_loss.1} parent=5 // pred_fallthru
      _
    %p5114 = scmp.le.s32.totalorder 2, %s10
    // Predicated region
    $region49: #{coarse_matching_loss.1} parent=5 // pred_check
      %p5115 = pneg %p5114
    $region50: #{coarse_matching_loss.1} parent=5 // pred_check_branch
      %5117 = sbr.rel (%p5115) target = $region52
    $region51: #{coarse_matching_loss.1} parent=5 // pred_region
      %s5118 = ssub.s32 %s10, 2
      // Predicated region
      $region53: #{coarse_matching_loss.1} parent=51 // pred_check
        %p5119 = pneg %p156
      $region54: #{coarse_matching_loss.1} parent=51 // pred_check_branch
        %5121 = sbr.rel (%p5119) target = $region56
      $region55: #{coarse_matching_loss.1} parent=51 // pred_region
        %p5122 = scmp.lt.s32.totalorder %s21, 1
        %s5123 = scalar_select %p5122, %s21, 1
        %s5124 = smul.addr %s5123, 2
        %s5125 = smul.addr %s5124, 8
        %s5126 = scalar_lea.vmem %s4, %s5125
      $region56: #{coarse_matching_loss.1} parent=51 // pred_fallthru
        _
    $region52: #{coarse_matching_loss.1} parent=5 // pred_fallthru
      _
  $region6: #{coarse_matching_loss.1} parent=0 // loop_footer
    %s14 = sadd.s32 1, %s10
  $region7: #{coarse_matching_loss.1} parent=0 // loop_footer_branch
    %9 = sbr.rel target = $region3
  $region8: #{coarse_matching_loss.1} parent=0 // loop_exit
    _

</llo_original>
